<compile_context>
chip_gen: v7x
topology: tpu7x:2x2x1
jax: 0.10.0
libtpu: 0.0.40
codegen_flags: <defaults>
</compile_context>

<pallas_src>
import jax
import jax.numpy as jnp
from jax.experimental import pallas as pl
from jax.experimental.pallas import tpu as pltpu


def _round_up(x, m):
    return (x + m - 1) // m * m


# ----------------------------------------------------------------------------
# Fused whole-decoder Pallas kernel: 5 matmuls, VMEM-resident activations.
# ----------------------------------------------------------------------------
def _decoder_kernel(x_ref, w1_ref, b1_ref, w2_ref, b2_ref,
                    m1_ref, c1_ref, m2_ref, c2_ref, m3_ref, c3_ref, o_ref):
    bf16 = jnp.bfloat16
    f32 = jnp.float32

    def layer(h, w_ref, b_ref, act):
        z = jnp.dot(h.astype(bf16), w_ref[...], preferred_element_type=f32)
        z = z + b_ref[...]
        if act == "relu":
            return jnp.maximum(z, 0.0)
        return jax.nn.sigmoid(z)

    h = layer(x_ref[...], w1_ref, b1_ref, "relu")     # Linear(E,128)+ReLU
    h = layer(h, w2_ref, b2_ref, "relu")              # Linear(128,256)+ReLU (cols permuted to h,w,c)
    h = layer(h, m1_ref, c1_ref, "relu")              # ConvT1 + bias + ReLU   (BN1 folded into layer 4)
    h = layer(h, m2_ref, c2_ref, "relu")              # BN1∘ConvT2 + bias + ReLU (BN2 folded into layer 5)
    o_ref[...] = layer(h, m3_ref, c3_ref, "sigmoid").astype(o_ref.dtype)  # BN2∘ConvT3 + sigmoid


def decoder_forward(x, kp):
    """x: (B, encoded_dim) f32; kp: kernel-ready params from prepare_params."""
    B = x.shape[0]
    n_out_pad = kp["c3"].shape[1]
    vmem = pl.BlockSpec(memory_space=pltpu.MemorySpace.VMEM)
    out = pl.pallas_call(
        _decoder_kernel,
        out_shape=jax.ShapeDtypeStruct((B, n_out_pad), jnp.float32),
        in_specs=[vmem] * 11,
        out_specs=vmem,
    )(x, kp["w1"], kp["b1"], kp["w2"], kp["b2"],
      kp["m1"], kp["c1"], kp["m2"], kp["c2"], kp["m3"], kp["c3"])
    # Final output layout was chosen as (c, h, w) -> direct reshape to NCHW.
    return out[:, :3 * 10 * 10].reshape(B, 3, 10, 10)


# ----------------------------------------------------------------------------
# One-time parameter preparation (hoisted out of the forward pass).
# ----------------------------------------------------------------------------
def _convt_matrix(wt, H, W, stride, padding, out_layout="hwc"):
    """ConvTranspose2d as a dense (H*W*Cin, Ho*Wo*Cout) matrix.

    wt: PyTorch layout (Cin, Cout, K, K).
    Input rows are flattened (h, w, c); output cols are (h, w, c) or (c, h, w).
    out[oh,ow,co] = sum_{ih,iw,ci} in[ih,iw,ci] * wt[ci,co, oh-ih*s+p, ow-iw*s+p]
    """
    Cin, Cout, K, _ = wt.shape
    Ho = (H - 1) * stride - 2 * padding + K
    Wo = (W - 1) * stride - 2 * padding + K
    kh = jnp.arange(Ho)[None, :] - jnp.arange(H)[:, None] * stride + padding   # (H, Ho)
    kw = jnp.arange(Wo)[None, :] - jnp.arange(W)[:, None] * stride + padding   # (W, Wo)
    vh = (kh >= 0) & (kh < K)
    vw = (kw >= 0) & (kw < K)
    khc = jnp.clip(kh, 0, K - 1)
    kwc = jnp.clip(kw, 0, K - 1)
    wk = jnp.transpose(wt, (2, 3, 0, 1))                           # (K, K, Cin, Cout)
    g = wk[khc[:, :, None, None], kwc[None, None, :, :]]           # (H, Ho, W, Wo, Cin, Cout)
    mask = (vh[:, :, None, None] & vw[None, None, :, :]).astype(wk.dtype)
    g = g * mask[..., None, None]
    g = jnp.transpose(g, (0, 2, 4, 1, 3, 5))                       # (H, W, Cin, Ho, Wo, Cout)
    if out_layout == "chw":
        g = jnp.transpose(g, (0, 1, 2, 5, 3, 4))                   # (H, W, Cin, Cout, Ho, Wo)
        return g.reshape(H * W * Cin, Cout * Ho * Wo), (Ho, Wo)
    return g.reshape(H * W * Cin, Ho * Wo * Cout), (Ho, Wo)


def prepare_params(p):
    """PyTorch-layout params -> kernel-ready weights (bf16) and biases (f32)."""
    f32, bf16 = jnp.float32, jnp.bfloat16

    w1 = p["lin1_w"].astype(f32)                               # (E, 128)
    b1 = p["lin1_b"].astype(f32)

    # Permute lin2 output columns from PyTorch unflatten order (c, h, w) to (h, w, c).
    w2 = p["lin2_w"].astype(f32).reshape(-1, 64, 2, 2).transpose(0, 2, 3, 1).reshape(-1, 256)
    b2 = p["lin2_b"].astype(f32).reshape(64, 2, 2).transpose(1, 2, 0).reshape(256)

    co1 = p["ct1_w"].shape[1]
    co2 = p["ct2_w"].shape[1]
    co3 = p["ct3_w"].shape[1]

    m1, (ho1, wo1) = _convt_matrix(p["ct1_w"].astype(f32), 2, 2, 3, 2)           # (256, 512)
    c1 = jnp.broadcast_to(p["ct1_b"].astype(f32), (ho1, wo1, co1)).reshape(-1)
    s1 = jnp.broadcast_to(p["bn1_scale"].astype(f32), (ho1, wo1, co1)).reshape(-1)
    t1 = jnp.broadcast_to(p["bn1_shift"].astype(f32), (ho1, wo1, co1)).reshape(-1)

    m2, (ho2, wo2) = _convt_matrix(p["ct2_w"].astype(f32), ho1, wo1, 3, 3)       # (512, 1024)
    c2 = jnp.broadcast_to(p["ct2_b"].astype(f32), (ho2, wo2, co2)).reshape(-1)
    s2 = jnp.broadcast_to(p["bn2_scale"].astype(f32), (ho2, wo2, co2)).reshape(-1)
    t2 = jnp.broadcast_to(p["bn2_shift"].astype(f32), (ho2, wo2, co2)).reshape(-1)

    # Fold BN1 (post-ReLU affine of layer ct1) into ct2's matrix/bias (exact).
    c2 = c2 + t1 @ m2
    m2 = m2 * s1[:, None]

    m3, (ho3, wo3) = _convt_matrix(p["ct3_w"].astype(f32), ho2, wo2, 1, 0,
                                   out_layout="chw")                              # (1024, 300)
    c3 = jnp.broadcast_to(p["ct3_b"].astype(f32)[:, None, None], (co3, ho3, wo3)).reshape(-1)
    # Fold BN2 into ct3.
    c3 = c3 + t2 @ m3
    m3 = m3 * s2[:, None]

    # One-time lane padding of the final (non-128-multiple) output dim.
    n3 = m3.shape[1]
    n3p = _round_up(n3, 128)
    m3 = jnp.pad(m3, ((0, 0), (0, n3p - n3)))
    c3 = jnp.pad(c3, (0, n3p - n3))

    return {
        "w1": w1.astype(bf16), "b1": b1.reshape(1, -1),
        "w2": w2.astype(bf16), "b2": b2.reshape(1, -1),
        "m1": m1.astype(bf16), "c1": c1.reshape(1, -1),
        "m2": m2.astype(bf16), "c2": c2.reshape(1, -1),
        "m3": m3.astype(bf16), "c3": c3.reshape(1, -1),
    }


# ----------------------------------------------------------------------------
# Pure-JAX reference (dilate + pad + flipped-kernel conv), f32 throughout.
# ----------------------------------------------------------------------------
def _ref_convt(x_nhwc, wt, b, stride, padding):
    B, H, W, Cin = x_nhwc.shape
    _, Cout, K, _ = wt.shape
    if stride > 1:
        Hd, Wd = (H - 1) * stride + 1, (W - 1) * stride + 1
        xd = jnp.zeros((B, Hd, Wd, Cin), x_nhwc.dtype).at[:, ::stride, ::stride, :].set(x_nhwc)
    else:
        xd = x_nhwc
    pe = K - 1 - padding
    xp = jnp.pad(xd, ((0, 0), (pe, pe), (pe, pe), (0, 0)))
    Ho, Wo = xp.shape[1] - K + 1, xp.shape[2] - K + 1
    wmat = jnp.flip(wt, (2, 3)).transpose(2, 3, 0, 1).reshape(K * K * Cin, Cout)
    cols = [xp[:, kh:kh + Ho, kw:kw + Wo, :] for kh in range(K) for kw in range(K)]
    patches = jnp.concatenate(cols, axis=-1).reshape(B * Ho * Wo, K * K * Cin)
    return (patches @ wmat + b).reshape(B, Ho, Wo, Cout)


def decoder_reference(x, p):
    h = jnp.maximum(x @ p["lin1_w"] + p["lin1_b"], 0.0)
    h = jnp.maximum(h @ p["lin2_w"] + p["lin2_b"], 0.0)
    B = x.shape[0]
    h = h.reshape(B, 64, 2, 2).transpose(0, 2, 3, 1)                 # NCHW -> NHWC
    h = _ref_convt(h, p["ct1_w"], p["ct1_b"], 3, 2)
    h = jnp.maximum(h, 0.0) * p["bn1_scale"] + p["bn1_shift"]
    h = _ref_convt(h, p["ct2_w"], p["ct2_b"], 3, 3)
    h = jnp.maximum(h, 0.0) * p["bn2_scale"] + p["bn2_shift"]
    h = _ref_convt(h, p["ct3_w"], p["ct3_b"], 1, 0)
    return jax.nn.sigmoid(h).transpose(0, 3, 1, 2)                   # NHWC -> NCHW


# ----------------------------------------------------------------------------
# Deterministic synthetic parameters (PyTorch __init__ shapes)
# ----------------------------------------------------------------------------
def init_params(key, encoded_dim):
    ks = jax.random.split(key, 12)

    def u(k, shape, fan_in):
        bound = (1.0 / fan_in) ** 0.5
        return jax.random.uniform(k, shape, jnp.float32, -bound, bound)

    params = {}
    # Linear weights stored as (in, out) = transposed PyTorch (out, in) layout.
    params["lin1_w"] = u(ks[0], (encoded_dim, 128), encoded_dim)
    params["lin1_b"] = u(ks[1], (128,), encoded_dim)
    params["lin2_w"] = u(ks[2], (128, 2 * 2 * 64), 128)
    params["lin2_b"] = u(ks[3], (2 * 2 * 64,), 128)
    # ConvTranspose2d weights in PyTorch layout (Cin, Cout, K, K).
    params["ct1_w"] = u(ks[4], (64, 32, 5, 5), 64 * 25)
    params["ct1_b"] = u(ks[5], (32,), 64 * 25)
    params["ct2_w"] = u(ks[6], (32, 16, 5, 5), 32 * 25)
    params["ct2_b"] = u(ks[7], (16,), 32 * 25)
    params["ct3_w"] = u(ks[8], (16, 3, 3, 3), 16 * 9)
    params["ct3_b"] = u(ks[9], (3,), 16 * 9)

    # BatchNorm2d (eval): scale = gamma/sqrt(var+eps), shift = beta - mean*scale
    def bn(kk, c):
        k1, k2, k3, k4 = jax.random.split(kk, 4)
        gamma = 1.0 + 0.1 * jax.random.normal(k1, (c,), jnp.float32)
        beta = 0.1 * jax.random.normal(k2, (c,), jnp.float32)
        mean = 0.1 * jax.random.normal(k3, (c,), jnp.float32)
        var = jnp.abs(1.0 + 0.1 * jax.random.normal(k4, (c,), jnp.float32))
        eps = 1e-5
        scale = gamma / jnp.sqrt(var + eps)
        shift = beta - mean * scale
        return scale, shift

    params["bn1_scale"], params["bn1_shift"] = bn(ks[10], 32)
    params["bn2_scale"], params["bn2_shift"] = bn(ks[11], 16)
    return params


if __name__ == "__main__":
    key = jax.random.PRNGKey(0)
    kx, kp = jax.random.split(key)

    encoded_space_dim = 32
    batch = 2
    x = jax.random.normal(kx, (batch, encoded_space_dim), jnp.float32)
    params = init_params(kp, encoded_space_dim)

    # One-time weight transform (conv-transpose matrices, BN folding, bf16 cast).
    kparams = prepare_params(params)

    fwd = jax.jit(decoder_forward)
    out = jax.block_until_ready(fwd(x, kparams))

    assert out.shape == (batch, 3, 10, 10), out.shape
    assert out.dtype == jnp.float32
    assert bool(jnp.all(jnp.isfinite(out)))
    assert bool(jnp.all((out >= 0.0) & (out <= 1.0)))   # sigmoid range

    # Correctness vs pure-JAX f32 reference (bf16 weights -> loose tolerance).
    ref = jax.block_until_ready(jax.jit(decoder_reference)(x, params))
    err = float(jnp.max(jnp.abs(out - ref)))
    assert err < 3e-2, f"max abs err vs reference: {err}"

    print("KERNEL_OK")
</pallas_src>

<mosaic_0001>
module attributes {stable_mosaic.version = 11 : i64} {
  func.func @_decoder_kernel(%arg0: memref<2x32xf32, #tpu.memory_space<vmem>>, %arg1: memref<32x128xbf16, #tpu.memory_space<vmem>>, %arg2: memref<1x128xf32, #tpu.memory_space<vmem>>, %arg3: memref<128x256xbf16, #tpu.memory_space<vmem>>, %arg4: memref<1x256xf32, #tpu.memory_space<vmem>>, %arg5: memref<256x512xbf16, #tpu.memory_space<vmem>>, %arg6: memref<1x512xf32, #tpu.memory_space<vmem>>, %arg7: memref<512x1024xbf16, #tpu.memory_space<vmem>>, %arg8: memref<1x1024xf32, #tpu.memory_space<vmem>>, %arg9: memref<1024x384xbf16, #tpu.memory_space<vmem>>, %arg10: memref<1x384xf32, #tpu.memory_space<vmem>>, %arg11: memref<2x384xf32, #tpu.memory_space<vmem>>) attributes {dimension_semantics = [], scalar_prefetch = 0 : i64, scratch_operands = 0 : i64, tpu.core_type = #tpu.core_type<tc>} {
    %c0 = arith.constant 0 : index
    %c0_0 = arith.constant 0 : index
    %0 = vector.load %arg0[%c0, %c0_0] : memref<2x32xf32, #tpu.memory_space<vmem>>, vector<2x32xf32>
    %1 = arith.truncf %0 : vector<2x32xf32> to vector<2x32xbf16>
    %c0_1 = arith.constant 0 : index
    %c0_2 = arith.constant 0 : index
    %2 = vector.load %arg1[%c0_1, %c0_2] : memref<32x128xbf16, #tpu.memory_space<vmem>>, vector<32x128xbf16>
    %cst = arith.constant dense<0.000000e+00> : vector<2x128xf32>
    %3 = tpu.matmul %1, %2, %cst {dimension_numbers = #tpu.dot_dimension_numbers<[1], [0], [0], [1], [0, 0, 1, 1], [], []>} : vector<2x32xbf16>, vector<32x128xbf16>, vector<2x128xf32> -> vector<2x128xf32>
    %c0_3 = arith.constant 0 : index
    %c0_4 = arith.constant 0 : index
    %4 = vector.load %arg2[%c0_3, %c0_4] : memref<1x128xf32, #tpu.memory_space<vmem>>, vector<1x128xf32>
    %5 = vector.broadcast %4 : vector<1x128xf32> to vector<2x128xf32>
    %6 = arith.addf %3, %5 : vector<2x128xf32>
    %cst_5 = arith.constant 0.000000e+00 : f32
    %7 = vector.broadcast %cst_5 : f32 to vector<2x128xf32>
    %8 = arith.maximumf %6, %7 : vector<2x128xf32>
    %9 = arith.truncf %8 : vector<2x128xf32> to vector<2x128xbf16>
    %c0_6 = arith.constant 0 : index
    %c0_7 = arith.constant 0 : index
    %10 = vector.load %arg3[%c0_6, %c0_7] : memref<128x256xbf16, #tpu.memory_space<vmem>>, vector<128x256xbf16>
    %cst_8 = arith.constant dense<0.000000e+00> : vector<2x256xf32>
    %11 = tpu.matmul %9, %10, %cst_8 {dimension_numbers = #tpu.dot_dimension_numbers<[1], [0], [0], [1], [0, 0, 1, 1], [], []>} : vector<2x128xbf16>, vector<128x256xbf16>, vector<2x256xf32> -> vector<2x256xf32>
    %c0_9 = arith.constant 0 : index
    %c0_10 = arith.constant 0 : index
    %12 = vector.load %arg4[%c0_9, %c0_10] : memref<1x256xf32, #tpu.memory_space<vmem>>, vector<1x256xf32>
    %13 = vector.broadcast %12 : vector<1x256xf32> to vector<2x256xf32>
    %14 = arith.addf %11, %13 : vector<2x256xf32>
    %cst_11 = arith.constant 0.000000e+00 : f32
    %15 = vector.broadcast %cst_11 : f32 to vector<2x256xf32>
    %16 = arith.maximumf %14, %15 : vector<2x256xf32>
    %17 = arith.truncf %16 : vector<2x256xf32> to vector<2x256xbf16>
    %c0_12 = arith.constant 0 : index
    %c0_13 = arith.constant 0 : index
    %18 = vector.load %arg5[%c0_12, %c0_13] : memref<256x512xbf16, #tpu.memory_space<vmem>>, vector<256x512xbf16>
    %cst_14 = arith.constant dense<0.000000e+00> : vector<2x512xf32>
    %19 = tpu.matmul %17, %18, %cst_14 {dimension_numbers = #tpu.dot_dimension_numbers<[1], [0], [0], [1], [0, 0, 1, 1], [], []>} : vector<2x256xbf16>, vector<256x512xbf16>, vector<2x512xf32> -> vector<2x512xf32>
    %c0_15 = arith.constant 0 : index
    %c0_16 = arith.constant 0 : index
    %20 = vector.load %arg6[%c0_15, %c0_16] : memref<1x512xf32, #tpu.memory_space<vmem>>, vector<1x512xf32>
    %21 = vector.broadcast %20 : vector<1x512xf32> to vector<2x512xf32>
    %22 = arith.addf %19, %21 : vector<2x512xf32>
    %cst_17 = arith.constant 0.000000e+00 : f32
    %23 = vector.broadcast %cst_17 : f32 to vector<2x512xf32>
    %24 = arith.maximumf %22, %23 : vector<2x512xf32>
    %25 = arith.truncf %24 : vector<2x512xf32> to vector<2x512xbf16>
    %c0_18 = arith.constant 0 : index
    %c0_19 = arith.constant 0 : index
    %26 = vector.load %arg7[%c0_18, %c0_19] : memref<512x1024xbf16, #tpu.memory_space<vmem>>, vector<512x1024xbf16>
    %cst_20 = arith.constant dense<0.000000e+00> : vector<2x1024xf32>
    %27 = tpu.matmul %25, %26, %cst_20 {dimension_numbers = #tpu.dot_dimension_numbers<[1], [0], [0], [1], [0, 0, 1, 1], [], []>} : vector<2x512xbf16>, vector<512x1024xbf16>, vector<2x1024xf32> -> vector<2x1024xf32>
    %c0_21 = arith.constant 0 : index
    %c0_22 = arith.constant 0 : index
    %28 = vector.load %arg8[%c0_21, %c0_22] : memref<1x1024xf32, #tpu.memory_space<vmem>>, vector<1x1024xf32>
    %29 = vector.broadcast %28 : vector<1x1024xf32> to vector<2x1024xf32>
    %30 = arith.addf %27, %29 : vector<2x1024xf32>
    %cst_23 = arith.constant 0.000000e+00 : f32
    %31 = vector.broadcast %cst_23 : f32 to vector<2x1024xf32>
    %32 = arith.maximumf %30, %31 : vector<2x1024xf32>
    %33 = arith.truncf %32 : vector<2x1024xf32> to vector<2x1024xbf16>
    %c0_24 = arith.constant 0 : index
    %c0_25 = arith.constant 0 : index
    %34 = vector.load %arg9[%c0_24, %c0_25] : memref<1024x384xbf16, #tpu.memory_space<vmem>>, vector<1024x384xbf16>
    %cst_26 = arith.constant dense<0.000000e+00> : vector<2x384xf32>
    %35 = tpu.matmul %33, %34, %cst_26 {dimension_numbers = #tpu.dot_dimension_numbers<[1], [0], [0], [1], [0, 0, 1, 1], [], []>} : vector<2x1024xbf16>, vector<1024x384xbf16>, vector<2x384xf32> -> vector<2x384xf32>
    %c0_27 = arith.constant 0 : index
    %c0_28 = arith.constant 0 : index
    %36 = vector.load %arg10[%c0_27, %c0_28] : memref<1x384xf32, #tpu.memory_space<vmem>>, vector<1x384xf32>
    %37 = vector.broadcast %36 : vector<1x384xf32> to vector<2x384xf32>
    %38 = arith.addf %35, %37 : vector<2x384xf32>
    %39 = arith.negf %38 : vector<2x384xf32>
    %40 = math.exp %39 : vector<2x384xf32>
    %cst_29 = arith.constant 1.000000e+00 : f32
    %41 = vector.broadcast %cst_29 : f32 to vector<2x384xf32>
    %42 = arith.addf %41, %40 : vector<2x384xf32>
    %43 = arith.divf %41, %42 : vector<2x384xf32>
    %c0_30 = arith.constant 0 : index
    %c0_31 = arith.constant 0 : index
    %44 = vector.load %arg11[%c0_30, %c0_31] : memref<2x384xf32, #tpu.memory_space<vmem>>, vector<2x384xf32>
    tpu.vector_store %arg11[%c0_30, %c0_31], %43 {strides = array<i32>} : memref<2x384xf32, #tpu.memory_space<vmem>>, vector<2x384xf32>,
    return
  }
}

</mosaic_0001>

<llo_original>
// kernel: decoder_forward.1
$region0: #{decoder_forward.1}
  #allocation0 [shape = 'u32[]', space=smem, size = 0x4, offset = 0x4, fixed_abs, tag = 'smem constant byte address 0x4 - core index']
  #allocation1 [shape = 'u32[144,128]{1,0:T(1,128)}', space=vmem, size = 0x12000, scoped, tag = 'internal scratch']
  %s0 = inlined_call_operand.hbm [shape: f32[2,32], index: 0, kind: input, shape index: {}]
  %s1 = inlined_call_operand.vmem [shape: bf16[32,128], index: 1, kind: input, shape index: {}]
  %s2 = inlined_call_operand.hbm [shape: f32[1,128], index: 2, kind: input, shape index: {}]
  %s3 = inlined_call_operand.hbm [shape: bf16[128,256], index: 3, kind: input, shape index: {}]
  %s4 = inlined_call_operand.vmem [shape: f32[1,256], index: 4, kind: input, shape index: {}]
  %s5 = inlined_call_operand.hbm [shape: bf16[256,512], index: 5, kind: input, shape index: {}]
  %s6 = inlined_call_operand.vmem [shape: f32[1,512], index: 6, kind: input, shape index: {}]
  %s7 = inlined_call_operand.hbm [shape: bf16[512,1024], index: 7, kind: input, shape index: {}]
  %s8 = inlined_call_operand.vmem [shape: f32[1,1024], index: 8, kind: input, shape index: {}]
  %s9 = inlined_call_operand.hbm [shape: bf16[1024,384], index: 9, kind: input, shape index: {}]
  %s10 = inlined_call_operand.hbm [shape: f32[1,384], index: 10, kind: input, shape index: {}]
  %s11 = inlined_call_operand.vmem [shape: f32[2,384], index: 11, kind: output, shape index: {}]
  %s12 = sld [smem:[#allocation0]]
  $region82: #{decoder_forward.1} parent=0
    _
  %s14 = ssub.s32 1, %s12
  %s15 = scalar_select 0, %s14, %s12
  $region1: #{decoder_forward.1} parent=0
    #allocation2 [shape = 'u8[1024]{0}', space=vmem, size = 0x400, scoped, tag = 'input window, operand 0, single buffered']
    #allocation3 [shape = 's32[1]{0}', space=sflag, size = 0x4, scoped, tag = 'scoped memory for decoder_forward.1']
    #allocation4 [shape = 'u8[512]{0}', space=vmem, size = 0x400, scoped, tag = 'input window, operand 2, single buffered']
    #allocation5 [shape = 's32[1]{0}', space=sflag, size = 0x4, scoped, tag = 'scoped memory for decoder_forward.1']
    #allocation6 [shape = 'u8[65536]{0}', space=vmem, size = 0x10000, scoped, tag = 'input window, operand 3, single buffered']
    #allocation7 [shape = 'u8[262144]{0}', space=vmem, size = 0x40000, scoped, tag = 'input window, operand 5, single buffered']
    #allocation8 [shape = 's32[1]{0}', space=sflag, size = 0x4, scoped, tag = 'scoped memory for decoder_forward.1']
    #allocation9 [shape = 'u8[1048576]{0}', space=vmem, size = 0x100000, scoped, tag = 'input window, operand 7, single buffered']
    #allocation10 [shape = 'u8[786432]{0}', space=vmem, size = 0xc0000, scoped, tag = 'input window, operand 9, single buffered']
    #allocation11 [shape = 's32[1]{0}', space=sflag, size = 0x4, scoped, tag = 'scoped memory for decoder_forward.1']
    #allocation12 [shape = 'u8[1536]{0}', space=vmem, size = 0x800, scoped, tag = 'input window, operand 10, single buffered']
    %16 = vsyncpa [#allocation3], 0
    %17 = vsyncpa [#allocation5], 0
    %18 = vsyncpa [#allocation8], 0
    %19 = vsyncpa [#allocation11], 0
    // Predicated region
    $region2: #{decoder_forward.1} parent=1 // pred_check
      _
    $region3: #{decoder_forward.1} parent=1 // pred_check_branch
      %21 = sbr.rel (0) target = $region5
    $region4: #{decoder_forward.1} parent=1 // pred_region
      %s23 = ssub.s32 32, 32
      %24 = vsyncadd [#allocation3], %s23
      %s26 = sshll.u32 [#allocation2], 4
      %s27 = int_to_ptr.vmem [resolvable:$true] %s26
      %29 = dma.hbm_to_vmem [thread:$0]  %s0, 32, %s27, [#allocation3]
    $region5: #{decoder_forward.1} parent=1 // pred_fallthru
      _
    // Predicated region
    $region6: #{decoder_forward.1} parent=1 // pred_check
      _
    $region7: #{decoder_forward.1} parent=1 // pred_check_branch
      %31 = sbr.rel (0) target = $region9
    $region8: #{decoder_forward.1} parent=1 // pred_region
      _
    $region9: #{decoder_forward.1} parent=1 // pred_fallthru
      _
    // Predicated region
    $region10: #{decoder_forward.1} parent=1 // pred_check
      _
    $region11: #{decoder_forward.1} parent=1 // pred_check_branch
      %33 = sbr.rel (0) target = $region13
    $region12: #{decoder_forward.1} parent=1 // pred_region
      %s35 = ssub.s32 16, 16
      %36 = vsyncadd [#allocation5], %s35
      %s38 = sshll.u32 [#allocation4], 4
      %s39 = int_to_ptr.vmem [resolvable:$true] %s38
      %41 = dma.hbm_to_vmem [thread:$0]  %s2, 16, %s39, [#allocation5]
    $region13: #{decoder_forward.1} parent=1 // pred_fallthru
      _
    // Predicated region
    $region14: #{decoder_forward.1} parent=1 // pred_check
      _
    $region15: #{decoder_forward.1} parent=1 // pred_check_branch
      %43 = sbr.rel (0) target = $region17
    $region16: #{decoder_forward.1} parent=1 // pred_region
      %s45 = ssub.s32 2048, 2048
      %46 = vsyncadd [#allocation5], %s45
      %s47 = sshll.u32 [#allocation6], 4
      %s48 = int_to_ptr.vmem [resolvable:$true] %s47
      %53 = dma.hbm_to_vmem [thread:$0]  %s3, 2048, %s48, [#allocation5], 128, 128, 8
    $region17: #{decoder_forward.1} parent=1 // pred_fallthru
      _
    // Predicated region
    $region18: #{decoder_forward.1} parent=1 // pred_check
      _
    $region19: #{decoder_forward.1} parent=1 // pred_check_branch
      %55 = sbr.rel (0) target = $region21
    $region20: #{decoder_forward.1} parent=1 // pred_region
      _
    $region21: #{decoder_forward.1} parent=1 // pred_fallthru
      _
    // Predicated region
    $region22: #{decoder_forward.1} parent=1 // pred_check
      _
    $region23: #{decoder_forward.1} parent=1 // pred_check_branch
      %57 = sbr.rel (0) target = $region25
    $region24: #{decoder_forward.1} parent=1 // pred_region
      %s59 = ssub.s32 8192, 8192
      %60 = vsyncadd [#allocation8], %s59
      %s61 = sshll.u32 [#allocation7], 4
      %s62 = int_to_ptr.vmem [resolvable:$true] %s61
      %67 = dma.hbm_to_vmem [thread:$0]  %s5, 8192, %s62, [#allocation8], 256, 256, 16
    $region25: #{decoder_forward.1} parent=1 // pred_fallthru
      _
    // Predicated region
    $region26: #{decoder_forward.1} parent=1 // pred_check
      _
    $region27: #{decoder_forward.1} parent=1 // pred_check_branch
      %69 = sbr.rel (0) target = $region29
    $region28: #{decoder_forward.1} parent=1 // pred_region
      _
    $region29: #{decoder_forward.1} parent=1 // pred_fallthru
      _
    // Predicated region
    $region30: #{decoder_forward.1} parent=1 // pred_check
      _
    $region31: #{decoder_forward.1} parent=1 // pred_check_branch
      %71 = sbr.rel (0) target = $region33
    $region32: #{decoder_forward.1} parent=1 // pred_region
      %s73 = ssub.s32 32768, 32768
      %74 = vsyncadd [#allocation8], %s73
      %s75 = sshll.u32 [#allocation9], 4
      %s76 = int_to_ptr.vmem [resolvable:$true] %s75
      %81 = dma.hbm_to_vmem [thread:$0]  %s7, 32768, %s76, [#allocation8], 512, 512, 32
    $region33: #{decoder_forward.1} parent=1 // pred_fallthru
      _
    // Predicated region
    $region34: #{decoder_forward.1} parent=1 // pred_check
      _
    $region35: #{decoder_forward.1} parent=1 // pred_check_branch
      %83 = sbr.rel (0) target = $region37
    $region36: #{decoder_forward.1} parent=1 // pred_region
      _
    $region37: #{decoder_forward.1} parent=1 // pred_fallthru
      _
    // Predicated region
    $region38: #{decoder_forward.1} parent=1 // pred_check
      _
    $region39: #{decoder_forward.1} parent=1 // pred_check_branch
      %85 = sbr.rel (0) target = $region41
    $region40: #{decoder_forward.1} parent=1 // pred_region
      %s87 = ssub.s32 24576, 24576
      %88 = vsyncadd [#allocation11], %s87
      %s89 = sshll.u32 [#allocation10], 4
      %s90 = int_to_ptr.vmem [resolvable:$true] %s89
      %95 = dma.hbm_to_vmem [thread:$0]  %s9, 24576, %s90, [#allocation11], 192, 192, 12
    $region41: #{decoder_forward.1} parent=1 // pred_fallthru
      _
    // Predicated region
    $region42: #{decoder_forward.1} parent=1 // pred_check
      _
    $region43: #{decoder_forward.1} parent=1 // pred_check_branch
      %97 = sbr.rel (0) target = $region45
    $region44: #{decoder_forward.1} parent=1 // pred_region
      %s99 = ssub.s32 48, 48
      %100 = vsyncadd [#allocation11], %s99
      %s102 = sshll.u32 [#allocation12], 4
      %s103 = int_to_ptr.vmem [resolvable:$true] %s102
      %105 = dma.hbm_to_vmem [thread:$0]  %s10, 48, %s103, [#allocation11]
    $region45: #{decoder_forward.1} parent=1 // pred_fallthru
      _
    // Predicated region
    $region46: #{decoder_forward.1} parent=1 // pred_check
      _
    $region47: #{decoder_forward.1} parent=1 // pred_check_branch
      %107 = sbr.rel (0) target = $region49
    $region48: #{decoder_forward.1} parent=1 // pred_region
      %108 = dma.done [#allocation3], 32
    $region49: #{decoder_forward.1} parent=1 // pred_fallthru
      _
    // Predicated region
    $region50: #{decoder_forward.1} parent=1 // pred_check
      _
    $region51: #{decoder_forward.1} parent=1 // pred_check_branch
      %110 = sbr.rel (0) target = $region53
    $region52: #{decoder_forward.1} parent=1 // pred_region
      %111 = dma.done [#allocation5], 16
    $region53: #{decoder_forward.1} parent=1 // pred_fallthru
      _
    // Predicated region
    $region54: #{decoder_forward.1} parent=1 // pred_check
      _
    $region55: #{decoder_forward.1} parent=1 // pred_check_branch
      %113 = sbr.rel (0) target = $region57
    $region56: #{decoder_forward.1} parent=1 // pred_region
      %114 = dma.done [#allocation5], 2048
    $region57: #{decoder_forward.1} parent=1 // pred_fallthru
      _
    // Predicated region
    $region58: #{decoder_forward.1} parent=1 // pred_check
      _
    $region59: #{decoder_forward.1} parent=1 // pred_check_branch
      %116 = sbr.rel (0) target = $region61
    $region60: #{decoder_forward.1} parent=1 // pred_region
      %117 = dma.done [#allocation8], 8192
    $region61: #{decoder_forward.1} parent=1 // pred_fallthru
      _
    // Predicated region
    $region62: #{decoder_forward.1} parent=1 // pred_check
      _
    $region63: #{decoder_forward.1} parent=1 // pred_check_branch
      %119 = sbr.rel (0) target = $region65
    $region64: #{decoder_forward.1} parent=1 // pred_region
      %120 = dma.done [#allocation8], 32768
    $region65: #{decoder_forward.1} parent=1 // pred_fallthru
      _
    // Predicated region
    $region66: #{decoder_forward.1} parent=1 // pred_check
      _
    $region67: #{decoder_forward.1} parent=1 // pred_check_branch
      %122 = sbr.rel (0) target = $region69
    $region68: #{decoder_forward.1} parent=1 // pred_region
      %123 = dma.done [#allocation11], 24576
    $region69: #{decoder_forward.1} parent=1 // pred_fallthru
      _
    // Predicated region
    $region70: #{decoder_forward.1} parent=1 // pred_check
      _
    $region71: #{decoder_forward.1} parent=1 // pred_check_branch
      %125 = sbr.rel (0) target = $region73
    $region72: #{decoder_forward.1} parent=1 // pred_region
      %126 = dma.done [#allocation11], 48
    $region73: #{decoder_forward.1} parent=1 // pred_fallthru
      _
    %v128 = vld [vmem:[#allocation2] sm:$0x3]
    %v129 = vpack.c.bf16 %v128, %v128
    %v130 = vld [vmem:[%s1] sm:$0xf]
    %v131 = vld [vmem:[%s1 + $0x4] sm:$0xf]
    %v132 = vld [vmem:[%s1 + $0x8] sm:$0xf]
    %v133 = vld [vmem:[%s1 + $0xc] sm:$0xf]
    %v134 = vld [vmem:[#allocation4] sm:$0x1]
    %v136 = vlaneseq
    %v137 = vshrl.u32 %v136, 7
    %v138 = vsub.s32 0, %v137
    %v139 = vrot.slane %v134, %v138
    %v145 = vunpack.c.l.b16 %v130
    %v146 = vunpack.c.l.b16 %v131
    %v147 = vunpack.c.l.b16 %v132
    %v148 = vunpack.c.l.b16 %v133
    %v149 = vpack.c.b16 %v146, %v145
    %v150 = vpack.c.b16 %v148, %v147
    %vm153 = vcmask 261120
    %v155 = vsel %vm153, %v129, 0
    %157 = vmatprep.subr.bf16.mxu0 0
    %158 = vmatpush1.bf16.msra.mxu0 %v149
    %159 = vmatprep.subr.bf16.mxu0 0
    %160 = vmatpush1.bf16.msra.mxu0 %v150
    %161 = vmatprep.subr.bf16.mxu0 0
    %162 = vmatpush1.bf16.msra.mxu0 0
    %163 = vmatprep.subr.bf16.mxu0 0
    %164 = vmatpush1.bf16.msra.mxu0 0
    %165 = vmatprep.subr.bf16.mxu0 0
    %166 = vmatpush1.bf16.msra.mxu0 0
    %167 = vmatprep.subr.bf16.mxu0 0
    %168 = vmatpush1.bf16.msra.mxu0 0
    %169 = vmatprep.subr.bf16.mxu0 0
    %170 = vmatpush1.bf16.msra.mxu0 0
    %171 = vmatprep.subr.bf16.mxu0 0
    %172 = vmatpush1.bf16.msra.mxu0 0
    %173 = vmatprep.subr.bf16.mxu0 0
    %174 = vmatpush1.bf16.msra.mxu0 0
    %175 = vmatprep.subr.bf16.mxu0 0
    %176 = vmatpush1.bf16.msra.mxu0 0
    %177 = vmatprep.subr.bf16.mxu0 0
    %178 = vmatpush1.bf16.msra.mxu0 0
    %179 = vmatprep.subr.bf16.mxu0 0
    %180 = vmatpush1.bf16.msra.mxu0 0
    %181 = vmatprep.subr.bf16.mxu0 0
    %182 = vmatpush1.bf16.msra.mxu0 0
    %183 = vmatprep.subr.bf16.mxu0 0
    %184 = vmatpush1.bf16.msra.mxu0 0
    %185 = vmatprep.subr.bf16.mxu0 0
    %186 = vmatpush1.bf16.msra.mxu0 0
    %187 = vmatprep.subr.bf16.mxu0 0
    %188 = vmatpush1.bf16.msra.mxu0 0
    %189 = vmatprep.mubr.bf16.mxu0 0
    %190 = vmatmul.mubr.bf16.gmra.mrb[0].mxu0 %v155
    %v191 = vpop.f32.mrb[0].mxu0
    %v192 = vadd.f32 %v139, %v191
    %v193 = vpop.f32.mrb[0].mxu0
    %v194 = vpop.f32.mrb[0].mxu0
    %v195 = vpop.f32.mrb[0].mxu0
    %196 = vdwg.mxu0
    %v197 = vmax.f32 %v192, 0.0
    %v198 = vpack.c.bf16 %v197, %v197
    %v199 = vld [vmem:[#allocation6] sm:$0xff]
    %v200 = vld [vmem:[#allocation6 + $0x8] sm:$0xff]
    %v201 = vld [vmem:[#allocation6 + $0x10] sm:$0xff]
    %v202 = vld [vmem:[#allocation6 + $0x18] sm:$0xff]
    %v203 = vld [vmem:[#allocation6 + $0x20] sm:$0xff]
    %v204 = vld [vmem:[#allocation6 + $0x28] sm:$0xff]
    %v205 = vld [vmem:[#allocation6 + $0x30] sm:$0xff]
    %v206 = vld [vmem:[#allocation6 + $0x38] sm:$0xff]
    %v207 = vld [vmem:[#allocation6 + $0x40] sm:$0xff]
    %v208 = vld [vmem:[#allocation6 + $0x48] sm:$0xff]
    %v209 = vld [vmem:[#allocation6 + $0x50] sm:$0xff]
    %v210 = vld [vmem:[#allocation6 + $0x58] sm:$0xff]
    %v211 = vld [vmem:[#allocation6 + $0x60] sm:$0xff]
    %v212 = vld [vmem:[#allocation6 + $0x68] sm:$0xff]
    %v213 = vld [vmem:[#allocation6 + $0x70] sm:$0xff]
    %v214 = vld [vmem:[#allocation6 + $0x78] sm:$0xff]
    %v215 = vld [vmem:[%s4] sm:$0x3]
    %v217 = vlaneseq
    %v218 = vshrl.u32 %v217, 7
    %v219 = vsub.s32 0, %v218
    %v220 = vrot.slane %v215, %v219
    %v221 = vlaneseq
    %v222 = vshrl.u32 %v221, 7
    %v223 = vsub.s32 1, %v222
    %v224 = vrot.slane %v215, %v223
    %v243 = vunpack.c.l.b16 %v199
    %v244 = vunpack.c.h.b16 %v199
    %v245 = vunpack.c.l.b16 %v200
    %v246 = vunpack.c.h.b16 %v200
    %v247 = vunpack.c.l.b16 %v201
    %v248 = vunpack.c.h.b16 %v201
    %v249 = vunpack.c.l.b16 %v202
    %v250 = vunpack.c.h.b16 %v202
    %v251 = vunpack.c.l.b16 %v203
    %v252 = vunpack.c.h.b16 %v203
    %v253 = vunpack.c.l.b16 %v204
    %v254 = vunpack.c.h.b16 %v204
    %v255 = vunpack.c.l.b16 %v205
    %v256 = vunpack.c.h.b16 %v205
    %v257 = vunpack.c.l.b16 %v206
    %v258 = vunpack.c.h.b16 %v206
    %v259 = vunpack.c.l.b16 %v207
    %v260 = vunpack.c.h.b16 %v207
    %v261 = vunpack.c.l.b16 %v208
    %v262 = vunpack.c.h.b16 %v208
    %v263 = vunpack.c.l.b16 %v209
    %v264 = vunpack.c.h.b16 %v209
    %v265 = vunpack.c.l.b16 %v210
    %v266 = vunpack.c.h.b16 %v210
    %v267 = vunpack.c.l.b16 %v211
    %v268 = vunpack.c.h.b16 %v211
    %v269 = vunpack.c.l.b16 %v212
    %v270 = vunpack.c.h.b16 %v212
    %v271 = vunpack.c.l.b16 %v213
    %v272 = vunpack.c.h.b16 %v213
    %v273 = vunpack.c.l.b16 %v214
    %v274 = vunpack.c.h.b16 %v214
    %v275 = vpack.c.b16 %v245, %v243
    %v276 = vpack.c.b16 %v246, %v244
    %v277 = vpack.c.b16 %v249, %v247
    %v278 = vpack.c.b16 %v250, %v248
    %v279 = vpack.c.b16 %v253, %v251
    %v280 = vpack.c.b16 %v254, %v252
    %v281 = vpack.c.b16 %v257, %v255
    %v282 = vpack.c.b16 %v258, %v256
    %v283 = vpack.c.b16 %v261, %v259
    %v284 = vpack.c.b16 %v262, %v260
    %v285 = vpack.c.b16 %v265, %v263
    %v286 = vpack.c.b16 %v266, %v264
    %v287 = vpack.c.b16 %v269, %v267
    %v288 = vpack.c.b16 %v270, %v268
    %v289 = vpack.c.b16 %v273, %v271
    %v290 = vpack.c.b16 %v274, %v272
    %307 = vmatprep.subr.bf16.mxu0 %v276
    %308 = vmatpush1.bf16.msra.mxu0 %v275
    %309 = vmatprep.subr.bf16.mxu0 %v278
    %310 = vmatpush1.bf16.msra.mxu0 %v277
    %311 = vmatprep.subr.bf16.mxu0 %v280
    %312 = vmatpush1.bf16.msra.mxu0 %v279
    %313 = vmatprep.subr.bf16.mxu0 %v282
    %314 = vmatpush1.bf16.msra.mxu0 %v281
    %315 = vmatprep.subr.bf16.mxu0 %v284
    %316 = vmatpush1.bf16.msra.mxu0 %v283
    %317 = vmatprep.subr.bf16.mxu0 %v286
    %318 = vmatpush1.bf16.msra.mxu0 %v285
    %319 = vmatprep.subr.bf16.mxu0 %v288
    %320 = vmatpush1.bf16.msra.mxu0 %v287
    %321 = vmatprep.subr.bf16.mxu0 %v290
    %322 = vmatpush1.bf16.msra.mxu0 %v289
    %323 = vmatprep.subr.bf16.mxu0 0
    %324 = vmatpush1.bf16.msra.mxu0 0
    %325 = vmatprep.subr.bf16.mxu0 0
    %326 = vmatpush1.bf16.msra.mxu0 0
    %327 = vmatprep.subr.bf16.mxu0 0
    %328 = vmatpush1.bf16.msra.mxu0 0
    %329 = vmatprep.subr.bf16.mxu0 0
    %330 = vmatpush1.bf16.msra.mxu0 0
    %331 = vmatprep.subr.bf16.mxu0 0
    %332 = vmatpush1.bf16.msra.mxu0 0
    %333 = vmatprep.subr.bf16.mxu0 0
    %334 = vmatpush1.bf16.msra.mxu0 0
    %335 = vmatprep.subr.bf16.mxu0 0
    %336 = vmatpush1.bf16.msra.mxu0 0
    %337 = vmatprep.subr.bf16.mxu0 0
    %338 = vmatpush1.bf16.msra.mxu0 0
    %339 = vmatprep.mubr.bf16.mxu0 0
    %340 = vmatmul.mubr.bf16.gmra.mrb[0].mxu0 %v198
    %v341 = vpop.f32.mrb[0].mxu0
    %v342 = vadd.f32 %v220, %v341
    %v343 = vpop.f32.mrb[0].mxu0
    %v344 = vadd.f32 %v224, %v343
    %v345 = vpop.f32.mrb[0].mxu0
    %v346 = vpop.f32.mrb[0].mxu0
    %347 = vdwg.mxu0
    %v348 = vmax.f32 %v342, 0.0
    %v349 = vmax.f32 %v344, 0.0
    %v350 = vpack.c.bf16 %v348, %v348
    %v351 = vpack.c.bf16 %v349, %v349
    %v352 = vld [vmem:[#allocation7] sm:$0xff]
    %v353 = vld [vmem:[#allocation7 + $0x8] sm:$0xff]
    %v354 = vld [vmem:[#allocation7 + $0x10] sm:$0xff]
    %v355 = vld [vmem:[#allocation7 + $0x18] sm:$0xff]
    %v356 = vld [vmem:[#allocation7 + $0x20] sm:$0xff]
    %v357 = vld [vmem:[#allocation7 + $0x28] sm:$0xff]
    %v358 = vld [vmem:[#allocation7 + $0x30] sm:$0xff]
    %v359 = vld [vmem:[#allocation7 + $0x38] sm:$0xff]
    %v360 = vld [vmem:[#allocation7 + $0x40] sm:$0xff]
    %v361 = vld [vmem:[#allocation7 + $0x48] sm:$0xff]
    %v362 = vld [vmem:[#allocation7 + $0x50] sm:$0xff]
    %v363 = vld [vmem:[#allocation7 + $0x58] sm:$0xff]
    %v364 = vld [vmem:[#allocation7 + $0x60] sm:$0xff]
    %v365 = vld [vmem:[#allocation7 + $0x68] sm:$0xff]
    %v366 = vld [vmem:[#allocation7 + $0x70] sm:$0xff]
    %v367 = vld [vmem:[#allocation7 + $0x78] sm:$0xff]
    %v368 = vld [vmem:[#allocation7 + $0x80] sm:$0xff]
    %v369 = vld [vmem:[#allocation7 + $0x88] sm:$0xff]
    %v370 = vld [vmem:[#allocation7 + $0x90] sm:$0xff]
    %v371 = vld [vmem:[#allocation7 + $0x98] sm:$0xff]
    %v372 = vld [vmem:[#allocation7 + $0xa0] sm:$0xff]
    %v373 = vld [vmem:[#allocation7 + $0xa8] sm:$0xff]
    %v374 = vld [vmem:[#allocation7 + $0xb0] sm:$0xff]
    %v375 = vld [vmem:[#allocation7 + $0xb8] sm:$0xff]
    %v376 = vld [vmem:[#allocation7 + $0xc0] sm:$0xff]
    %v377 = vld [vmem:[#allocation7 + $0xc8] sm:$0xff]
    %v378 = vld [vmem:[#allocation7 + $0xd0] sm:$0xff]
    %v379 = vld [vmem:[#allocation7 + $0xd8] sm:$0xff]
    %v380 = vld [vmem:[#allocation7 + $0xe0] sm:$0xff]
    %v381 = vld [vmem:[#allocation7 + $0xe8] sm:$0xff]
    %v382 = vld [vmem:[#allocation7 + $0xf0] sm:$0xff]
    %v383 = vld [vmem:[#allocation7 + $0xf8] sm:$0xff]
    %v384 = vld [vmem:[#allocation7 + $0x100] sm:$0xff]
    %v385 = vld [vmem:[#allocation7 + $0x108] sm:$0xff]
    %v386 = vld [vmem:[#allocation7 + $0x110] sm:$0xff]
    %v387 = vld [vmem:[#allocation7 + $0x118] sm:$0xff]
    %v388 = vld [vmem:[#allocation7 + $0x120] sm:$0xff]
    %v389 = vld [vmem:[#allocation7 + $0x128] sm:$0xff]
    %v390 = vld [vmem:[#allocation7 + $0x130] sm:$0xff]
    %v391 = vld [vmem:[#allocation7 + $0x138] sm:$0xff]
    %v392 = vld [vmem:[#allocation7 + $0x140] sm:$0xff]
    %v393 = vld [vmem:[#allocation7 + $0x148] sm:$0xff]
    %v394 = vld [vmem:[#allocation7 + $0x150] sm:$0xff]
    %v395 = vld [vmem:[#allocation7 + $0x158] sm:$0xff]
    %v396 = vld [vmem:[#allocation7 + $0x160] sm:$0xff]
    %v397 = vld [vmem:[#allocation7 + $0x168] sm:$0xff]
    %v398 = vld [vmem:[#allocation7 + $0x170] sm:$0xff]
    %v399 = vld [vmem:[#allocation7 + $0x178] sm:$0xff]
    %v400 = vld [vmem:[#allocation7 + $0x180] sm:$0xff]
    %v401 = vld [vmem:[#allocation7 + $0x188] sm:$0xff]
    %v402 = vld [vmem:[#allocation7 + $0x190] sm:$0xff]
    %v403 = vld [vmem:[#allocation7 + $0x198] sm:$0xff]
    %v404 = vld [vmem:[#allocation7 + $0x1a0] sm:$0xff]
    %v405 = vld [vmem:[#allocation7 + $0x1a8] sm:$0xff]
    %v406 = vld [vmem:[#allocation7 + $0x1b0] sm:$0xff]
    %v407 = vld [vmem:[#allocation7 + $0x1b8] sm:$0xff]
    %v408 = vld [vmem:[#allocation7 + $0x1c0] sm:$0xff]
    %v409 = vld [vmem:[#allocation7 + $0x1c8] sm:$0xff]
    %v410 = vld [vmem:[#allocation7 + $0x1d0] sm:$0xff]
    %v411 = vld [vmem:[#allocation7 + $0x1d8] sm:$0xff]
    %v412 = vld [vmem:[#allocation7 + $0x1e0] sm:$0xff]
    %v413 = vld [vmem:[#allocation7 + $0x1e8] sm:$0xff]
    %v414 = vld [vmem:[#allocation7 + $0x1f0] sm:$0xff]
    %v415 = vld [vmem:[#allocation7 + $0x1f8] sm:$0xff]
    %v416 = vld [vmem:[%s6] sm:$0xf]
    %v418 = vlaneseq
    %v419 = vshrl.u32 %v418, 7
    %v420 = vsub.s32 0, %v419
    %v421 = vrot.slane %v416, %v420
    %v422 = vlaneseq
    %v423 = vshrl.u32 %v422, 7
    %v424 = vsub.s32 1, %v423
    %v425 = vrot.slane %v416, %v424
    %v426 = vlaneseq
    %v427 = vshrl.u32 %v426, 7
    %v428 = vsub.s32 2, %v427
    %v429 = vrot.slane %v416, %v428
    %v430 = vlaneseq
    %v431 = vshrl.u32 %v430, 7
    %v432 = vsub.s32 3, %v431
    %v433 = vrot.slane %v416, %v432
    %v502 = vunpack.c.l.b16 %v352
    %v503 = vunpack.c.h.b16 %v352
    %v504 = vunpack.c.l.b16 %v353
    %v505 = vunpack.c.h.b16 %v353
    %v506 = vunpack.c.l.b16 %v354
    %v507 = vunpack.c.h.b16 %v354
    %v508 = vunpack.c.l.b16 %v355
    %v509 = vunpack.c.h.b16 %v355
    %v510 = vunpack.c.l.b16 %v356
    %v511 = vunpack.c.h.b16 %v356
    %v512 = vunpack.c.l.b16 %v357
    %v513 = vunpack.c.h.b16 %v357
    %v514 = vunpack.c.l.b16 %v358
    %v515 = vunpack.c.h.b16 %v358
    %v516 = vunpack.c.l.b16 %v359
    %v517 = vunpack.c.h.b16 %v359
    %v518 = vunpack.c.l.b16 %v360
    %v519 = vunpack.c.h.b16 %v360
    %v520 = vunpack.c.l.b16 %v361
    %v521 = vunpack.c.h.b16 %v361
    %v522 = vunpack.c.l.b16 %v362
    %v523 = vunpack.c.h.b16 %v362
    %v524 = vunpack.c.l.b16 %v363
    %v525 = vunpack.c.h.b16 %v363
    %v526 = vunpack.c.l.b16 %v364
    %v527 = vunpack.c.h.b16 %v364
    %v528 = vunpack.c.l.b16 %v365
    %v529 = vunpack.c.h.b16 %v365
    %v530 = vunpack.c.l.b16 %v366
    %v531 = vunpack.c.h.b16 %v366
    %v532 = vunpack.c.l.b16 %v367
    %v533 = vunpack.c.h.b16 %v367
    %v534 = vunpack.c.l.b16 %v368
    %v535 = vunpack.c.h.b16 %v368
    %v536 = vunpack.c.l.b16 %v369
    %v537 = vunpack.c.h.b16 %v369
    %v538 = vunpack.c.l.b16 %v370
    %v539 = vunpack.c.h.b16 %v370
    %v540 = vunpack.c.l.b16 %v371
    %v541 = vunpack.c.h.b16 %v371
    %v542 = vunpack.c.l.b16 %v372
    %v543 = vunpack.c.h.b16 %v372
    %v544 = vunpack.c.l.b16 %v373
    %v545 = vunpack.c.h.b16 %v373
    %v546 = vunpack.c.l.b16 %v374
    %v547 = vunpack.c.h.b16 %v374
    %v548 = vunpack.c.l.b16 %v375
    %v549 = vunpack.c.h.b16 %v375
    %v550 = vunpack.c.l.b16 %v376
    %v551 = vunpack.c.h.b16 %v376
    %v552 = vunpack.c.l.b16 %v377
    %v553 = vunpack.c.h.b16 %v377
    %v554 = vunpack.c.l.b16 %v378
    %v555 = vunpack.c.h.b16 %v378
    %v556 = vunpack.c.l.b16 %v379
    %v557 = vunpack.c.h.b16 %v379
    %v558 = vunpack.c.l.b16 %v380
    %v559 = vunpack.c.h.b16 %v380
    %v560 = vunpack.c.l.b16 %v381
    %v561 = vunpack.c.h.b16 %v381
    %v562 = vunpack.c.l.b16 %v382
    %v563 = vunpack.c.h.b16 %v382
    %v564 = vunpack.c.l.b16 %v383
    %v565 = vunpack.c.h.b16 %v383
    %v566 = vunpack.c.l.b16 %v384
    %v567 = vunpack.c.h.b16 %v384
    %v568 = vunpack.c.l.b16 %v385
    %v569 = vunpack.c.h.b16 %v385
    %v570 = vunpack.c.l.b16 %v386
    %v571 = vunpack.c.h.b16 %v386
    %v572 = vunpack.c.l.b16 %v387
    %v573 = vunpack.c.h.b16 %v387
    %v574 = vunpack.c.l.b16 %v388
    %v575 = vunpack.c.h.b16 %v388
    %v576 = vunpack.c.l.b16 %v389
    %v577 = vunpack.c.h.b16 %v389
    %v578 = vunpack.c.l.b16 %v390
    %v579 = vunpack.c.h.b16 %v390
    %v580 = vunpack.c.l.b16 %v391
    %v581 = vunpack.c.h.b16 %v391
    %v582 = vunpack.c.l.b16 %v392
    %v583 = vunpack.c.h.b16 %v392
    %v584 = vunpack.c.l.b16 %v393
    %v585 = vunpack.c.h.b16 %v393
    %v586 = vunpack.c.l.b16 %v394
    %v587 = vunpack.c.h.b16 %v394
    %v588 = vunpack.c.l.b16 %v395
    %v589 = vunpack.c.h.b16 %v395
    %v590 = vunpack.c.l.b16 %v396
    %v591 = vunpack.c.h.b16 %v396
    %v592 = vunpack.c.l.b16 %v397
    %v593 = vunpack.c.h.b16 %v397
    %v594 = vunpack.c.l.b16 %v398
    %v595 = vunpack.c.h.b16 %v398
    %v596 = vunpack.c.l.b16 %v399
    %v597 = vunpack.c.h.b16 %v399
    %v598 = vunpack.c.l.b16 %v400
    %v599 = vunpack.c.h.b16 %v400
    %v600 = vunpack.c.l.b16 %v401
    %v601 = vunpack.c.h.b16 %v401
    %v602 = vunpack.c.l.b16 %v402
    %v603 = vunpack.c.h.b16 %v402
    %v604 = vunpack.c.l.b16 %v403
    %v605 = vunpack.c.h.b16 %v403
    %v606 = vunpack.c.l.b16 %v404
    %v607 = vunpack.c.h.b16 %v404
    %v608 = vunpack.c.l.b16 %v405
    %v609 = vunpack.c.h.b16 %v405
    %v610 = vunpack.c.l.b16 %v406
    %v611 = vunpack.c.h.b16 %v406
    %v612 = vunpack.c.l.b16 %v407
    %v613 = vunpack.c.h.b16 %v407
    %v614 = vunpack.c.l.b16 %v408
    %v615 = vunpack.c.h.b16 %v408
    %v616 = vunpack.c.l.b16 %v409
    %v617 = vunpack.c.h.b16 %v409
    %v618 = vunpack.c.l.b16 %v410
    %v619 = vunpack.c.h.b16 %v410
    %v620 = vunpack.c.l.b16 %v411
    %v621 = vunpack.c.h.b16 %v411
    %v622 = vunpack.c.l.b16 %v412
    %v623 = vunpack.c.h.b16 %v412
    %v624 = vunpack.c.l.b16 %v413
    %v625 = vunpack.c.h.b16 %v413
    %v626 = vunpack.c.l.b16 %v414
    %v627 = vunpack.c.h.b16 %v414
    %v628 = vunpack.c.l.b16 %v415
    %v629 = vunpack.c.h.b16 %v415
    %v630 = vpack.c.b16 %v506, %v502
    %v631 = vpack.c.b16 %v507, %v503
    %v632 = vpack.c.b16 %v508, %v504
    %v633 = vpack.c.b16 %v509, %v505
    %v634 = vpack.c.b16 %v514, %v510
    %v635 = vpack.c.b16 %v515, %v511
    %v636 = vpack.c.b16 %v516, %v512
    %v637 = vpack.c.b16 %v517, %v513
    %v638 = vpack.c.b16 %v522, %v518
    %v639 = vpack.c.b16 %v523, %v519
    %v640 = vpack.c.b16 %v524, %v520
    %v641 = vpack.c.b16 %v525, %v521
    %v642 = vpack.c.b16 %v530, %v526
    %v643 = vpack.c.b16 %v531, %v527
    %v644 = vpack.c.b16 %v532, %v528
    %v645 = vpack.c.b16 %v533, %v529
    %v646 = vpack.c.b16 %v538, %v534
    %v647 = vpack.c.b16 %v539, %v535
    %v648 = vpack.c.b16 %v540, %v536
    %v649 = vpack.c.b16 %v541, %v537
    %v650 = vpack.c.b16 %v546, %v542
    %v651 = vpack.c.b16 %v547, %v543
    %v652 = vpack.c.b16 %v548, %v544
    %v653 = vpack.c.b16 %v549, %v545
    %v654 = vpack.c.b16 %v554, %v550
    %v655 = vpack.c.b16 %v555, %v551
    %v656 = vpack.c.b16 %v556, %v552
    %v657 = vpack.c.b16 %v557, %v553
    %v658 = vpack.c.b16 %v562, %v558
    %v659 = vpack.c.b16 %v563, %v559
    %v660 = vpack.c.b16 %v564, %v560
    %v661 = vpack.c.b16 %v565, %v561
    %v662 = vpack.c.b16 %v570, %v566
    %v663 = vpack.c.b16 %v571, %v567
    %v664 = vpack.c.b16 %v572, %v568
    %v665 = vpack.c.b16 %v573, %v569
    %v666 = vpack.c.b16 %v578, %v574
    %v667 = vpack.c.b16 %v579, %v575
    %v668 = vpack.c.b16 %v580, %v576
    %v669 = vpack.c.b16 %v581, %v577
    %v670 = vpack.c.b16 %v586, %v582
    %v671 = vpack.c.b16 %v587, %v583
    %v672 = vpack.c.b16 %v588, %v584
    %v673 = vpack.c.b16 %v589, %v585
    %v674 = vpack.c.b16 %v594, %v590
    %v675 = vpack.c.b16 %v595, %v591
    %v676 = vpack.c.b16 %v596, %v592
    %v677 = vpack.c.b16 %v597, %v593
    %v678 = vpack.c.b16 %v602, %v598
    %v679 = vpack.c.b16 %v603, %v599
    %v680 = vpack.c.b16 %v604, %v600
    %v681 = vpack.c.b16 %v605, %v601
    %v682 = vpack.c.b16 %v610, %v606
    %v683 = vpack.c.b16 %v611, %v607
    %v684 = vpack.c.b16 %v612, %v608
    %v685 = vpack.c.b16 %v613, %v609
    %v686 = vpack.c.b16 %v618, %v614
    %v687 = vpack.c.b16 %v619, %v615
    %v688 = vpack.c.b16 %v620, %v616
    %v689 = vpack.c.b16 %v621, %v617
    %v690 = vpack.c.b16 %v626, %v622
    %v691 = vpack.c.b16 %v627, %v623
    %v692 = vpack.c.b16 %v628, %v624
    %v693 = vpack.c.b16 %v629, %v625
    %758 = vmatprep.subr.bf16.mxu0 %v631
    %759 = vmatpush1.bf16.msra.mxu0 %v630
    %760 = vmatprep.subr.bf16.mxu0 %v635
    %761 = vmatpush1.bf16.msra.mxu0 %v634
    %762 = vmatprep.subr.bf16.mxu0 %v639
    %763 = vmatpush1.bf16.msra.mxu0 %v638
    %764 = vmatprep.subr.bf16.mxu0 %v643
    %765 = vmatpush1.bf16.msra.mxu0 %v642
    %766 = vmatprep.subr.bf16.mxu0 %v647
    %767 = vmatpush1.bf16.msra.mxu0 %v646
    %768 = vmatprep.subr.bf16.mxu0 %v651
    %769 = vmatpush1.bf16.msra.mxu0 %v650
    %770 = vmatprep.subr.bf16.mxu0 %v655
    %771 = vmatpush1.bf16.msra.mxu0 %v654
    %772 = vmatprep.subr.bf16.mxu0 %v659
    %773 = vmatpush1.bf16.msra.mxu0 %v658
    %774 = vmatprep.subr.bf16.mxu0 %v663
    %775 = vmatpush1.bf16.msra.mxu0 %v662
    %776 = vmatprep.subr.bf16.mxu0 %v667
    %777 = vmatpush1.bf16.msra.mxu0 %v666
    %778 = vmatprep.subr.bf16.mxu0 %v671
    %779 = vmatpush1.bf16.msra.mxu0 %v670
    %780 = vmatprep.subr.bf16.mxu0 %v675
    %781 = vmatpush1.bf16.msra.mxu0 %v674
    %782 = vmatprep.subr.bf16.mxu0 %v679
    %783 = vmatpush1.bf16.msra.mxu0 %v678
    %784 = vmatprep.subr.bf16.mxu0 %v683
    %785 = vmatpush1.bf16.msra.mxu0 %v682
    %786 = vmatprep.subr.bf16.mxu0 %v687
    %787 = vmatpush1.bf16.msra.mxu0 %v686
    %788 = vmatprep.subr.bf16.mxu0 %v691
    %789 = vmatpush1.bf16.msra.mxu0 %v690
    %790 = vmatprep.mubr.bf16.mxu0 %v351
    %791 = vmatmul.mubr.bf16.gmra.mrb[0].mxu0 %v350
    %v792 = vpop.f32.mrb[0].mxu0
    %v793 = vadd.f32 %v421, %v792
    %v794 = vpop.f32.mrb[0].mxu0
    %v795 = vadd.f32 %v425, %v794
    %v796 = vpop.f32.mrb[0].mxu0
    %v797 = vpop.f32.mrb[0].mxu0
    %798 = vdwg.mxu0
    %799 = vmatprep.subr.bf16.mxu0 %v633
    %800 = vmatpush1.bf16.msra.mxu0 %v632
    %801 = vmatprep.subr.bf16.mxu0 %v637
    %802 = vmatpush1.bf16.msra.mxu0 %v636
    %803 = vmatprep.subr.bf16.mxu0 %v641
    %804 = vmatpush1.bf16.msra.mxu0 %v640
    %805 = vmatprep.subr.bf16.mxu0 %v645
    %806 = vmatpush1.bf16.msra.mxu0 %v644
    %807 = vmatprep.subr.bf16.mxu0 %v649
    %808 = vmatpush1.bf16.msra.mxu0 %v648
    %809 = vmatprep.subr.bf16.mxu0 %v653
    %810 = vmatpush1.bf16.msra.mxu0 %v652
    %811 = vmatprep.subr.bf16.mxu0 %v657
    %812 = vmatpush1.bf16.msra.mxu0 %v656
    %813 = vmatprep.subr.bf16.mxu0 %v661
    %814 = vmatpush1.bf16.msra.mxu0 %v660
    %815 = vmatprep.subr.bf16.mxu0 %v665
    %816 = vmatpush1.bf16.msra.mxu0 %v664
    %817 = vmatprep.subr.bf16.mxu0 %v669
    %818 = vmatpush1.bf16.msra.mxu0 %v668
    %819 = vmatprep.subr.bf16.mxu0 %v673
    %820 = vmatpush1.bf16.msra.mxu0 %v672
    %821 = vmatprep.subr.bf16.mxu0 %v677
    %822 = vmatpush1.bf16.msra.mxu0 %v676
    %823 = vmatprep.subr.bf16.mxu0 %v681
    %824 = vmatpush1.bf16.msra.mxu0 %v680
    %825 = vmatprep.subr.bf16.mxu0 %v685
    %826 = vmatpush1.bf16.msra.mxu0 %v684
    %827 = vmatprep.subr.bf16.mxu0 %v689
    %828 = vmatpush1.bf16.msra.mxu0 %v688
    %829 = vmatprep.subr.bf16.mxu0 %v693
    %830 = vmatpush1.bf16.msra.mxu0 %v692
    %831 = vmatprep.mubr.bf16.mxu0 %v351
    %832 = vmatmul.mubr.bf16.gmra.mrb[0].mxu0 %v350
    %v833 = vpop.f32.mrb[0].mxu0
    %v834 = vadd.f32 %v429, %v833
    %v835 = vpop.f32.mrb[0].mxu0
    %v836 = vadd.f32 %v433, %v835
    %v837 = vpop.f32.mrb[0].mxu0
    %v838 = vpop.f32.mrb[0].mxu0
    %839 = vdwg.mxu0
    %v840 = vmax.f32 %v793, 0.0
    %v841 = vmax.f32 %v795, 0.0
    %v842 = vmax.f32 %v834, 0.0
    %v843 = vmax.f32 %v836, 0.0
    %v844 = vpack.c.bf16 %v840, %v840
    %v845 = vpack.c.bf16 %v841, %v841
    %v846 = vpack.c.bf16 %v842, %v842
    %v847 = vpack.c.bf16 %v843, %v843
    %v848 = vld [vmem:[#allocation9] sm:$0xff]
    %v849 = vld [vmem:[#allocation9 + $0x8] sm:$0xff]
    %v850 = vld [vmem:[#allocation9 + $0x10] sm:$0xff]
    %v851 = vld [vmem:[#allocation9 + $0x18] sm:$0xff]
    %v852 = vld [vmem:[#allocation9 + $0x20] sm:$0xff]
    %v853 = vld [vmem:[#allocation9 + $0x28] sm:$0xff]
    %v854 = vld [vmem:[#allocation9 + $0x30] sm:$0xff]
    %v855 = vld [vmem:[#allocation9 + $0x38] sm:$0xff]
    %v856 = vld [vmem:[#allocation9 + $0x40] sm:$0xff]
    %v857 = vld [vmem:[#allocation9 + $0x48] sm:$0xff]
    %v858 = vld [vmem:[#allocation9 + $0x50] sm:$0xff]
    %v859 = vld [vmem:[#allocation9 + $0x58] sm:$0xff]
    %v860 = vld [vmem:[#allocation9 + $0x60] sm:$0xff]
    %v861 = vld [vmem:[#allocation9 + $0x68] sm:$0xff]
    %v862 = vld [vmem:[#allocation9 + $0x70] sm:$0xff]
    %v863 = vld [vmem:[#allocation9 + $0x78] sm:$0xff]
    %v864 = vld [vmem:[#allocation9 + $0x80] sm:$0xff]
    %v865 = vld [vmem:[#allocation9 + $0x88] sm:$0xff]
    %v866 = vld [vmem:[#allocation9 + $0x90] sm:$0xff]
    %v867 = vld [vmem:[#allocation9 + $0x98] sm:$0xff]
    %v868 = vld [vmem:[#allocation9 + $0xa0] sm:$0xff]
    %v869 = vld [vmem:[#allocation9 + $0xa8] sm:$0xff]
    %v870 = vld [vmem:[#allocation9 + $0xb0] sm:$0xff]
    %v871 = vld [vmem:[#allocation9 + $0xb8] sm:$0xff]
    %v872 = vld [vmem:[#allocation9 + $0xc0] sm:$0xff]
    %v873 = vld [vmem:[#allocation9 + $0xc8] sm:$0xff]
    %v874 = vld [vmem:[#allocation9 + $0xd0] sm:$0xff]
    %v875 = vld [vmem:[#allocation9 + $0xd8] sm:$0xff]
    %v876 = vld [vmem:[#allocation9 + $0xe0] sm:$0xff]
    %v877 = vld [vmem:[#allocation9 + $0xe8] sm:$0xff]
    %v878 = vld [vmem:[#allocation9 + $0xf0] sm:$0xff]
    %v879 = vld [vmem:[#allocation9 + $0xf8] sm:$0xff]
    %v880 = vld [vmem:[#allocation9 + $0x100] sm:$0xff]
    %v881 = vld [vmem:[#allocation9 + $0x108] sm:$0xff]
    %v882 = vld [vmem:[#allocation9 + $0x110] sm:$0xff]
    %v883 = vld [vmem:[#allocation9 + $0x118] sm:$0xff]
    %v884 = vld [vmem:[#allocation9 + $0x120] sm:$0xff]
    %v885 = vld [vmem:[#allocation9 + $0x128] sm:$0xff]
    %v886 = vld [vmem:[#allocation9 + $0x130] sm:$0xff]
    %v887 = vld [vmem:[#allocation9 + $0x138] sm:$0xff]
    %v888 = vld [vmem:[#allocation9 + $0x140] sm:$0xff]
    %v889 = vld [vmem:[#allocation9 + $0x148] sm:$0xff]
    %v890 = vld [vmem:[#allocation9 + $0x150] sm:$0xff]
    %v891 = vld [vmem:[#allocation9 + $0x158] sm:$0xff]
    %v892 = vld [vmem:[#allocation9 + $0x160] sm:$0xff]
    %v893 = vld [vmem:[#allocation9 + $0x168] sm:$0xff]
    %v894 = vld [vmem:[#allocation9 + $0x170] sm:$0xff]
    %v895 = vld [vmem:[#allocation9 + $0x178] sm:$0xff]
    %v896 = vld [vmem:[#allocation9 + $0x180] sm:$0xff]
    %v897 = vld [vmem:[#allocation9 + $0x188] sm:$0xff]
    %v898 = vld [vmem:[#allocation9 + $0x190] sm:$0xff]
    %v899 = vld [vmem:[#allocation9 + $0x198] sm:$0xff]
    %v900 = vld [vmem:[#allocation9 + $0x1a0] sm:$0xff]
    %v901 = vld [vmem:[#allocation9 + $0x1a8] sm:$0xff]
    %v902 = vld [vmem:[#allocation9 + $0x1b0] sm:$0xff]
    %v903 = vld [vmem:[#allocation9 + $0x1b8] sm:$0xff]
    %v904 = vld [vmem:[#allocation9 + $0x1c0] sm:$0xff]
    %v905 = vld [vmem:[#allocation9 + $0x1c8] sm:$0xff]
    %v906 = vld [vmem:[#allocation9 + $0x1d0] sm:$0xff]
    %v907 = vld [vmem:[#allocation9 + $0x1d8] sm:$0xff]
    %v908 = vld [vmem:[#allocation9 + $0x1e0] sm:$0xff]
    %v909 = vld [vmem:[#allocation9 + $0x1e8] sm:$0xff]
    %v910 = vld [vmem:[#allocation9 + $0x1f0] sm:$0xff]
    %v911 = vld [vmem:[#allocation9 + $0x1f8] sm:$0xff]
    %v912 = vld [vmem:[#allocation9 + $0x200] sm:$0xff]
    %v913 = vld [vmem:[#allocation9 + $0x208] sm:$0xff]
    %v914 = vld [vmem:[#allocation9 + $0x210] sm:$0xff]
    %v915 = vld [vmem:[#allocation9 + $0x218] sm:$0xff]
    %v916 = vld [vmem:[#allocation9 + $0x220] sm:$0xff]
    %v917 = vld [vmem:[#allocation9 + $0x228] sm:$0xff]
    %v918 = vld [vmem:[#allocation9 + $0x230] sm:$0xff]
    %v919 = vld [vmem:[#allocation9 + $0x238] sm:$0xff]
    %v920 = vld [vmem:[#allocation9 + $0x240] sm:$0xff]
    %v921 = vld [vmem:[#allocation9 + $0x248] sm:$0xff]
    %v922 = vld [vmem:[#allocation9 + $0x250] sm:$0xff]
    %v923 = vld [vmem:[#allocation9 + $0x258] sm:$0xff]
    %v924 = vld [vmem:[#allocation9 + $0x260] sm:$0xff]
    %v925 = vld [vmem:[#allocation9 + $0x268] sm:$0xff]
    %v926 = vld [vmem:[#allocation9 + $0x270] sm:$0xff]
    %v927 = vld [vmem:[#allocation9 + $0x278] sm:$0xff]
    %v928 = vld [vmem:[#allocation9 + $0x280] sm:$0xff]
    %v929 = vld [vmem:[#allocation9 + $0x288] sm:$0xff]
    %v930 = vld [vmem:[#allocation9 + $0x290] sm:$0xff]
    %v931 = vld [vmem:[#allocation9 + $0x298] sm:$0xff]
    %v932 = vld [vmem:[#allocation9 + $0x2a0] sm:$0xff]
    %v933 = vld [vmem:[#allocation9 + $0x2a8] sm:$0xff]
    %v934 = vld [vmem:[#allocation9 + $0x2b0] sm:$0xff]
    %v935 = vld [vmem:[#allocation9 + $0x2b8] sm:$0xff]
    %v936 = vld [vmem:[#allocation9 + $0x2c0] sm:$0xff]
    %v937 = vld [vmem:[#allocation9 + $0x2c8] sm:$0xff]
    %v938 = vld [vmem:[#allocation9 + $0x2d0] sm:$0xff]
    %v939 = vld [vmem:[#allocation9 + $0x2d8] sm:$0xff]
    %v940 = vld [vmem:[#allocation9 + $0x2e0] sm:$0xff]
    %v941 = vld [vmem:[#allocation9 + $0x2e8] sm:$0xff]
    %v942 = vld [vmem:[#allocation9 + $0x2f0] sm:$0xff]
    %v943 = vld [vmem:[#allocation9 + $0x2f8] sm:$0xff]
    %v944 = vld [vmem:[#allocation9 + $0x300] sm:$0xff]
    %v945 = vld [vmem:[#allocation9 + $0x308] sm:$0xff]
    %v946 = vld [vmem:[#allocation9 + $0x310] sm:$0xff]
    %v947 = vld [vmem:[#allocation9 + $0x318] sm:$0xff]
    %v948 = vld [vmem:[#allocation9 + $0x320] sm:$0xff]
    %v949 = vld [vmem:[#allocation9 + $0x328] sm:$0xff]
    %v950 = vld [vmem:[#allocation9 + $0x330] sm:$0xff]
    %v951 = vld [vmem:[#allocation9 + $0x338] sm:$0xff]
    %v952 = vld [vmem:[#allocation9 + $0x340] sm:$0xff]
    %v953 = vld [vmem:[#allocation9 + $0x348] sm:$0xff]
    %v954 = vld [vmem:[#allocation9 + $0x350] sm:$0xff]
    %v955 = vld [vmem:[#allocation9 + $0x358] sm:$0xff]
    %v956 = vld [vmem:[#allocation9 + $0x360] sm:$0xff]
    %v957 = vld [vmem:[#allocation9 + $0x368] sm:$0xff]
    %v958 = vld [vmem:[#allocation9 + $0x370] sm:$0xff]
    %v959 = vld [vmem:[#allocation9 + $0x378] sm:$0xff]
    %v960 = vld [vmem:[#allocation9 + $0x380] sm:$0xff]
    %v961 = vld [vmem:[#allocation9 + $0x388] sm:$0xff]
    %v962 = vld [vmem:[#allocation9 + $0x390] sm:$0xff]
    %v963 = vld [vmem:[#allocation9 + $0x398] sm:$0xff]
    %v964 = vld [vmem:[#allocation9 + $0x3a0] sm:$0xff]
    %v965 = vld [vmem:[#allocation9 + $0x3a8] sm:$0xff]
    %v966 = vld [vmem:[#allocation9 + $0x3b0] sm:$0xff]
    %v967 = vld [vmem:[#allocation9 + $0x3b8] sm:$0xff]
    %v968 = vld [vmem:[#allocation9 + $0x3c0] sm:$0xff]
    %v969 = vld [vmem:[#allocation9 + $0x3c8] sm:$0xff]
    %v970 = vld [vmem:[#allocation9 + $0x3d0] sm:$0xff]
    %v971 = vld [vmem:[#allocation9 + $0x3d8] sm:$0xff]
    %v972 = vld [vmem:[#allocation9 + $0x3e0] sm:$0xff]
    %v973 = vld [vmem:[#allocation9 + $0x3e8] sm:$0xff]
    %v974 = vld [vmem:[#allocation9 + $0x3f0] sm:$0xff]
    %v975 = vld [vmem:[#allocation9 + $0x3f8] sm:$0xff]
    %v976 = vld [vmem:[#allocation9 + $0x400] sm:$0xff]
    %v977 = vld [vmem:[#allocation9 + $0x408] sm:$0xff]
    %v978 = vld [vmem:[#allocation9 + $0x410] sm:$0xff]
    %v979 = vld [vmem:[#allocation9 + $0x418] sm:$0xff]
    %v980 = vld [vmem:[#allocation9 + $0x420] sm:$0xff]
    %v981 = vld [vmem:[#allocation9 + $0x428] sm:$0xff]
    %v982 = vld [vmem:[#allocation9 + $0x430] sm:$0xff]
    %v983 = vld [vmem:[#allocation9 + $0x438] sm:$0xff]
    %v984 = vld [vmem:[#allocation9 + $0x440] sm:$0xff]
    %v985 = vld [vmem:[#allocation9 + $0x448] sm:$0xff]
    %v986 = vld [vmem:[#allocation9 + $0x450] sm:$0xff]
    %v987 = vld [vmem:[#allocation9 + $0x458] sm:$0xff]
    %v988 = vld [vmem:[#allocation9 + $0x460] sm:$0xff]
    %v989 = vld [vmem:[#allocation9 + $0x468] sm:$0xff]
    %v990 = vld [vmem:[#allocation9 + $0x470] sm:$0xff]
    %v991 = vld [vmem:[#allocation9 + $0x478] sm:$0xff]
    %v992 = vld [vmem:[#allocation9 + $0x480] sm:$0xff]
    %v993 = vld [vmem:[#allocation9 + $0x488] sm:$0xff]
    %v994 = vld [vmem:[#allocation9 + $0x490] sm:$0xff]
    %v995 = vld [vmem:[#allocation9 + $0x498] sm:$0xff]
    %v996 = vld [vmem:[#allocation9 + $0x4a0] sm:$0xff]
    %v997 = vld [vmem:[#allocation9 + $0x4a8] sm:$0xff]
    %v998 = vld [vmem:[#allocation9 + $0x4b0] sm:$0xff]
    %v999 = vld [vmem:[#allocation9 + $0x4b8] sm:$0xff]
    %v1000 = vld [vmem:[#allocation9 + $0x4c0] sm:$0xff]
    %v1001 = vld [vmem:[#allocation9 + $0x4c8] sm:$0xff]
    %v1002 = vld [vmem:[#allocation9 + $0x4d0] sm:$0xff]
    %v1003 = vld [vmem:[#allocation9 + $0x4d8] sm:$0xff]
    %v1004 = vld [vmem:[#allocation9 + $0x4e0] sm:$0xff]
    %v1005 = vld [vmem:[#allocation9 + $0x4e8] sm:$0xff]
    %v1006 = vld [vmem:[#allocation9 + $0x4f0] sm:$0xff]
    %v1007 = vld [vmem:[#allocation9 + $0x4f8] sm:$0xff]
    %v1008 = vld [vmem:[#allocation9 + $0x500] sm:$0xff]
    %v1009 = vld [vmem:[#allocation9 + $0x508] sm:$0xff]
    %v1010 = vld [vmem:[#allocation9 + $0x510] sm:$0xff]
    %v1011 = vld [vmem:[#allocation9 + $0x518] sm:$0xff]
    %v1012 = vld [vmem:[#allocation9 + $0x520] sm:$0xff]
    %v1013 = vld [vmem:[#allocation9 + $0x528] sm:$0xff]
    %v1014 = vld [vmem:[#allocation9 + $0x530] sm:$0xff]
    %v1015 = vld [vmem:[#allocation9 + $0x538] sm:$0xff]
    %v1016 = vld [vmem:[#allocation9 + $0x540] sm:$0xff]
    %v1017 = vld [vmem:[#allocation9 + $0x548] sm:$0xff]
    %v1018 = vld [vmem:[#allocation9 + $0x550] sm:$0xff]
    %v1019 = vld [vmem:[#allocation9 + $0x558] sm:$0xff]
    %v1020 = vld [vmem:[#allocation9 + $0x560] sm:$0xff]
    %v1021 = vld [vmem:[#allocation9 + $0x568] sm:$0xff]
    %v1022 = vld [vmem:[#allocation9 + $0x570] sm:$0xff]
    %v1023 = vld [vmem:[#allocation9 + $0x578] sm:$0xff]
    %v1024 = vld [vmem:[#allocation9 + $0x580] sm:$0xff]
    %v1025 = vld [vmem:[#allocation9 + $0x588] sm:$0xff]
    %v1026 = vld [vmem:[#allocation9 + $0x590] sm:$0xff]
    %v1027 = vld [vmem:[#allocation9 + $0x598] sm:$0xff]
    %v1028 = vld [vmem:[#allocation9 + $0x5a0] sm:$0xff]
    %v1029 = vld [vmem:[#allocation9 + $0x5a8] sm:$0xff]
    %v1030 = vld [vmem:[#allocation9 + $0x5b0] sm:$0xff]
    %v1031 = vld [vmem:[#allocation9 + $0x5b8] sm:$0xff]
    %v1032 = vld [vmem:[#allocation9 + $0x5c0] sm:$0xff]
    %v1033 = vld [vmem:[#allocation9 + $0x5c8] sm:$0xff]
    %v1034 = vld [vmem:[#allocation9 + $0x5d0] sm:$0xff]
    %v1035 = vld [vmem:[#allocation9 + $0x5d8] sm:$0xff]
    %v1036 = vld [vmem:[#allocation9 + $0x5e0] sm:$0xff]
    %v1037 = vld [vmem:[#allocation9 + $0x5e8] sm:$0xff]
    %v1038 = vld [vmem:[#allocation9 + $0x5f0] sm:$0xff]
    %v1039 = vld [vmem:[#allocation9 + $0x5f8] sm:$0xff]
    %v1040 = vld [vmem:[#allocation9 + $0x600] sm:$0xff]
    %v1041 = vld [vmem:[#allocation9 + $0x608] sm:$0xff]
    %v1042 = vld [vmem:[#allocation9 + $0x610] sm:$0xff]
    %v1043 = vld [vmem:[#allocation9 + $0x618] sm:$0xff]
    %v1044 = vld [vmem:[#allocation9 + $0x620] sm:$0xff]
    %v1045 = vld [vmem:[#allocation9 + $0x628] sm:$0xff]
    %v1046 = vld [vmem:[#allocation9 + $0x630] sm:$0xff]
    %v1047 = vld [vmem:[#allocation9 + $0x638] sm:$0xff]
    %v1048 = vld [vmem:[#allocation9 + $0x640] sm:$0xff]
    %v1049 = vld [vmem:[#allocation9 + $0x648] sm:$0xff]
    %v1050 = vld [vmem:[#allocation9 + $0x650] sm:$0xff]
    %v1051 = vld [vmem:[#allocation9 + $0x658] sm:$0xff]
    %v1052 = vld [vmem:[#allocation9 + $0x660] sm:$0xff]
    %v1053 = vld [vmem:[#allocation9 + $0x668] sm:$0xff]
    %v1054 = vld [vmem:[#allocation9 + $0x670] sm:$0xff]
    %v1055 = vld [vmem:[#allocation9 + $0x678] sm:$0xff]
    %v1056 = vld [vmem:[#allocation9 + $0x680] sm:$0xff]
    %v1057 = vld [vmem:[#allocation9 + $0x688] sm:$0xff]
    %v1058 = vld [vmem:[#allocation9 + $0x690] sm:$0xff]
    %v1059 = vld [vmem:[#allocation9 + $0x698] sm:$0xff]
    %v1060 = vld [vmem:[#allocation9 + $0x6a0] sm:$0xff]
    %v1061 = vld [vmem:[#allocation9 + $0x6a8] sm:$0xff]
    %v1062 = vld [vmem:[#allocation9 + $0x6b0] sm:$0xff]
    %v1063 = vld [vmem:[#allocation9 + $0x6b8] sm:$0xff]
    %v1064 = vld [vmem:[#allocation9 + $0x6c0] sm:$0xff]
    %v1065 = vld [vmem:[#allocation9 + $0x6c8] sm:$0xff]
    %v1066 = vld [vmem:[#allocation9 + $0x6d0] sm:$0xff]
    %v1067 = vld [vmem:[#allocation9 + $0x6d8] sm:$0xff]
    %v1068 = vld [vmem:[#allocation9 + $0x6e0] sm:$0xff]
    %v1069 = vld [vmem:[#allocation9 + $0x6e8] sm:$0xff]
    %v1070 = vld [vmem:[#allocation9 + $0x6f0] sm:$0xff]
    %v1071 = vld [vmem:[#allocation9 + $0x6f8] sm:$0xff]
    %v1072 = vld [vmem:[#allocation9 + $0x700] sm:$0xff]
    %v1073 = vld [vmem:[#allocation9 + $0x708] sm:$0xff]
    %v1074 = vld [vmem:[#allocation9 + $0x710] sm:$0xff]
    %v1075 = vld [vmem:[#allocation9 + $0x718] sm:$0xff]
    %v1076 = vld [vmem:[#allocation9 + $0x720] sm:$0xff]
    %v1077 = vld [vmem:[#allocation9 + $0x728] sm:$0xff]
    %v1078 = vld [vmem:[#allocation9 + $0x730] sm:$0xff]
    %v1079 = vld [vmem:[#allocation9 + $0x738] sm:$0xff]
    %v1080 = vld [vmem:[#allocation9 + $0x740] sm:$0xff]
    %v1081 = vld [vmem:[#allocation9 + $0x748] sm:$0xff]
    %v1082 = vld [vmem:[#allocation9 + $0x750] sm:$0xff]
    %v1083 = vld [vmem:[#allocation9 + $0x758] sm:$0xff]
    %v1084 = vld [vmem:[#allocation9 + $0x760] sm:$0xff]
    %v1085 = vld [vmem:[#allocation9 + $0x768] sm:$0xff]
    %v1086 = vld [vmem:[#allocation9 + $0x770] sm:$0xff]
    %v1087 = vld [vmem:[#allocation9 + $0x778] sm:$0xff]
    %v1088 = vld [vmem:[#allocation9 + $0x780] sm:$0xff]
    %v1089 = vld [vmem:[#allocation9 + $0x788] sm:$0xff]
    %v1090 = vld [vmem:[#allocation9 + $0x790] sm:$0xff]
    %v1091 = vld [vmem:[#allocation9 + $0x798] sm:$0xff]
    %v1092 = vld [vmem:[#allocation9 + $0x7a0] sm:$0xff]
    %v1093 = vld [vmem:[#allocation9 + $0x7a8] sm:$0xff]
    %v1094 = vld [vmem:[#allocation9 + $0x7b0] sm:$0xff]
    %v1095 = vld [vmem:[#allocation9 + $0x7b8] sm:$0xff]
    %v1096 = vld [vmem:[#allocation9 + $0x7c0] sm:$0xff]
    %v1097 = vld [vmem:[#allocation9 + $0x7c8] sm:$0xff]
    %v1098 = vld [vmem:[#allocation9 + $0x7d0] sm:$0xff]
    %v1099 = vld [vmem:[#allocation9 + $0x7d8] sm:$0xff]
    %v1100 = vld [vmem:[#allocation9 + $0x7e0] sm:$0xff]
    %v1101 = vld [vmem:[#allocation9 + $0x7e8] sm:$0xff]
    %v1102 = vld [vmem:[#allocation9 + $0x7f0] sm:$0xff]
    %v1103 = vld [vmem:[#allocation9 + $0x7f8] sm:$0xff]
    %v1104 = vld [vmem:[%s8] sm:$0xff]
    %v1106 = vlaneseq
    %v1107 = vshrl.u32 %v1106, 7
    %v1108 = vsub.s32 0, %v1107
    %v1109 = vrot.slane %v1104, %v1108
    %v1110 = vlaneseq
    %v1111 = vshrl.u32 %v1110, 7
    %v1112 = vsub.s32 1, %v1111
    %v1113 = vrot.slane %v1104, %v1112
    %v1114 = vlaneseq
    %v1115 = vshrl.u32 %v1114, 7
    %v1116 = vsub.s32 2, %v1115
    %v1117 = vrot.slane %v1104, %v1116
    %v1118 = vlaneseq
    %v1119 = vshrl.u32 %v1118, 7
    %v1120 = vsub.s32 3, %v1119
    %v1121 = vrot.slane %v1104, %v1120
    %v1122 = vlaneseq
    %v1123 = vshrl.u32 %v1122, 7
    %v1124 = vsub.s32 4, %v1123
    %v1125 = vrot.slane %v1104, %v1124
    %v1126 = vlaneseq
    %v1127 = vshrl.u32 %v1126, 7
    %v1128 = vsub.s32 5, %v1127
    %v1129 = vrot.slane %v1104, %v1128
    %v1130 = vlaneseq
    %v1131 = vshrl.u32 %v1130, 7
    %v1132 = vsub.s32 6, %v1131
    %v1133 = vrot.slane %v1104, %v1132
    %v1134 = vlaneseq
    %v1135 = vshrl.u32 %v1134, 7
    %v1136 = vsub.s32 7, %v1135
    %v1137 = vrot.slane %v1104, %v1136
    %v1402 = vunpack.c.l.b16 %v848
    %v1403 = vunpack.c.h.b16 %v848
    %v1404 = vunpack.c.l.b16 %v849
    %v1405 = vunpack.c.h.b16 %v849
    %v1406 = vunpack.c.l.b16 %v850
    %v1407 = vunpack.c.h.b16 %v850
    %v1408 = vunpack.c.l.b16 %v851
    %v1409 = vunpack.c.h.b16 %v851
    %v1410 = vunpack.c.l.b16 %v852
    %v1411 = vunpack.c.h.b16 %v852
    %v1412 = vunpack.c.l.b16 %v853
    %v1413 = vunpack.c.h.b16 %v853
    %v1414 = vunpack.c.l.b16 %v854
    %v1415 = vunpack.c.h.b16 %v854
    %v1416 = vunpack.c.l.b16 %v855
    %v1417 = vunpack.c.h.b16 %v855
    %v1418 = vunpack.c.l.b16 %v856
    %v1419 = vunpack.c.h.b16 %v856
    %v1420 = vunpack.c.l.b16 %v857
    %v1421 = vunpack.c.h.b16 %v857
    %v1422 = vunpack.c.l.b16 %v858
    %v1423 = vunpack.c.h.b16 %v858
    %v1424 = vunpack.c.l.b16 %v859
    %v1425 = vunpack.c.h.b16 %v859
    %v1426 = vunpack.c.l.b16 %v860
    %v1427 = vunpack.c.h.b16 %v860
    %v1428 = vunpack.c.l.b16 %v861
    %v1429 = vunpack.c.h.b16 %v861
    %v1430 = vunpack.c.l.b16 %v862
    %v1431 = vunpack.c.h.b16 %v862
    %v1432 = vunpack.c.l.b16 %v863
    %v1433 = vunpack.c.h.b16 %v863
    %v1434 = vunpack.c.l.b16 %v864
    %v1435 = vunpack.c.h.b16 %v864
    %v1436 = vunpack.c.l.b16 %v865
    %v1437 = vunpack.c.h.b16 %v865
    %v1438 = vunpack.c.l.b16 %v866
    %v1439 = vunpack.c.h.b16 %v866
    %v1440 = vunpack.c.l.b16 %v867
    %v1441 = vunpack.c.h.b16 %v867
    %v1442 = vunpack.c.l.b16 %v868
    %v1443 = vunpack.c.h.b16 %v868
    %v1444 = vunpack.c.l.b16 %v869
    %v1445 = vunpack.c.h.b16 %v869
    %v1446 = vunpack.c.l.b16 %v870
    %v1447 = vunpack.c.h.b16 %v870
    %v1448 = vunpack.c.l.b16 %v871
    %v1449 = vunpack.c.h.b16 %v871
    %v1450 = vunpack.c.l.b16 %v872
    %v1451 = vunpack.c.h.b16 %v872
    %v1452 = vunpack.c.l.b16 %v873
    %v1453 = vunpack.c.h.b16 %v873
    %v1454 = vunpack.c.l.b16 %v874
    %v1455 = vunpack.c.h.b16 %v874
    %v1456 = vunpack.c.l.b16 %v875
    %v1457 = vunpack.c.h.b16 %v875
    %v1458 = vunpack.c.l.b16 %v876
    %v1459 = vunpack.c.h.b16 %v876
    %v1460 = vunpack.c.l.b16 %v877
    %v1461 = vunpack.c.h.b16 %v877
    %v1462 = vunpack.c.l.b16 %v878
    %v1463 = vunpack.c.h.b16 %v878
    %v1464 = vunpack.c.l.b16 %v879
    %v1465 = vunpack.c.h.b16 %v879
    %v1466 = vunpack.c.l.b16 %v880
    %v1467 = vunpack.c.h.b16 %v880
    %v1468 = vunpack.c.l.b16 %v881
    %v1469 = vunpack.c.h.b16 %v881
    %v1470 = vunpack.c.l.b16 %v882
    %v1471 = vunpack.c.h.b16 %v882
    %v1472 = vunpack.c.l.b16 %v883
    %v1473 = vunpack.c.h.b16 %v883
    %v1474 = vunpack.c.l.b16 %v884
    %v1475 = vunpack.c.h.b16 %v884
    %v1476 = vunpack.c.l.b16 %v885
    %v1477 = vunpack.c.h.b16 %v885
    %v1478 = vunpack.c.l.b16 %v886
    %v1479 = vunpack.c.h.b16 %v886
    %v1480 = vunpack.c.l.b16 %v887
    %v1481 = vunpack.c.h.b16 %v887
    %v1482 = vunpack.c.l.b16 %v888
    %v1483 = vunpack.c.h.b16 %v888
    %v1484 = vunpack.c.l.b16 %v889
    %v1485 = vunpack.c.h.b16 %v889
    %v1486 = vunpack.c.l.b16 %v890
    %v1487 = vunpack.c.h.b16 %v890
    %v1488 = vunpack.c.l.b16 %v891
    %v1489 = vunpack.c.h.b16 %v891
    %v1490 = vunpack.c.l.b16 %v892
    %v1491 = vunpack.c.h.b16 %v892
    %v1492 = vunpack.c.l.b16 %v893
    %v1493 = vunpack.c.h.b16 %v893
    %v1494 = vunpack.c.l.b16 %v894
    %v1495 = vunpack.c.h.b16 %v894
    %v1496 = vunpack.c.l.b16 %v895
    %v1497 = vunpack.c.h.b16 %v895
    %v1498 = vunpack.c.l.b16 %v896
    %v1499 = vunpack.c.h.b16 %v896
    %v1500 = vunpack.c.l.b16 %v897
    %v1501 = vunpack.c.h.b16 %v897
    %v1502 = vunpack.c.l.b16 %v898
    %v1503 = vunpack.c.h.b16 %v898
    %v1504 = vunpack.c.l.b16 %v899
    %v1505 = vunpack.c.h.b16 %v899
    %v1506 = vunpack.c.l.b16 %v900
    %v1507 = vunpack.c.h.b16 %v900
    %v1508 = vunpack.c.l.b16 %v901
    %v1509 = vunpack.c.h.b16 %v901
    %v1510 = vunpack.c.l.b16 %v902
    %v1511 = vunpack.c.h.b16 %v902
    %v1512 = vunpack.c.l.b16 %v903
    %v1513 = vunpack.c.h.b16 %v903
    %v1514 = vunpack.c.l.b16 %v904
    %v1515 = vunpack.c.h.b16 %v904
    %v1516 = vunpack.c.l.b16 %v905
    %v1517 = vunpack.c.h.b16 %v905
    %v1518 = vunpack.c.l.b16 %v906
    %v1519 = vunpack.c.h.b16 %v906
    %v1520 = vunpack.c.l.b16 %v907
    %v1521 = vunpack.c.h.b16 %v907
    %v1522 = vunpack.c.l.b16 %v908
    %v1523 = vunpack.c.h.b16 %v908
    %v1524 = vunpack.c.l.b16 %v909
    %v1525 = vunpack.c.h.b16 %v909
    %v1526 = vunpack.c.l.b16 %v910
    %v1527 = vunpack.c.h.b16 %v910
    %v1528 = vunpack.c.l.b16 %v911
    %v1529 = vunpack.c.h.b16 %v911
    %v1530 = vunpack.c.l.b16 %v912
    %v1531 = vunpack.c.h.b16 %v912
    %v1532 = vunpack.c.l.b16 %v913
    %v1533 = vunpack.c.h.b16 %v913
    %v1534 = vunpack.c.l.b16 %v914
    %v1535 = vunpack.c.h.b16 %v914
    %v1536 = vunpack.c.l.b16 %v915
    %v1537 = vunpack.c.h.b16 %v915
    %v1538 = vunpack.c.l.b16 %v916
    %v1539 = vunpack.c.h.b16 %v916
    %v1540 = vunpack.c.l.b16 %v917
    %v1541 = vunpack.c.h.b16 %v917
    %v1542 = vunpack.c.l.b16 %v918
    %v1543 = vunpack.c.h.b16 %v918
    %v1544 = vunpack.c.l.b16 %v919
    %v1545 = vunpack.c.h.b16 %v919
    %v1546 = vunpack.c.l.b16 %v920
    %v1547 = vunpack.c.h.b16 %v920
    %v1548 = vunpack.c.l.b16 %v921
    %v1549 = vunpack.c.h.b16 %v921
    %v1550 = vunpack.c.l.b16 %v922
    %v1551 = vunpack.c.h.b16 %v922
    %v1552 = vunpack.c.l.b16 %v923
    %v1553 = vunpack.c.h.b16 %v923
    %v1554 = vunpack.c.l.b16 %v924
    %v1555 = vunpack.c.h.b16 %v924
    %v1556 = vunpack.c.l.b16 %v925
    %v1557 = vunpack.c.h.b16 %v925
    %v1558 = vunpack.c.l.b16 %v926
    %v1559 = vunpack.c.h.b16 %v926
    %v1560 = vunpack.c.l.b16 %v927
    %v1561 = vunpack.c.h.b16 %v927
    %v1562 = vunpack.c.l.b16 %v928
    %v1563 = vunpack.c.h.b16 %v928
    %v1564 = vunpack.c.l.b16 %v929
    %v1565 = vunpack.c.h.b16 %v929
    %v1566 = vunpack.c.l.b16 %v930
    %v1567 = vunpack.c.h.b16 %v930
    %v1568 = vunpack.c.l.b16 %v931
    %v1569 = vunpack.c.h.b16 %v931
    %v1570 = vunpack.c.l.b16 %v932
    %v1571 = vunpack.c.h.b16 %v932
    %v1572 = vunpack.c.l.b16 %v933
    %v1573 = vunpack.c.h.b16 %v933
    %v1574 = vunpack.c.l.b16 %v934
    %v1575 = vunpack.c.h.b16 %v934
    %v1576 = vunpack.c.l.b16 %v935
    %v1577 = vunpack.c.h.b16 %v935
    %v1578 = vunpack.c.l.b16 %v936
    %v1579 = vunpack.c.h.b16 %v936
    %v1580 = vunpack.c.l.b16 %v937
    %v1581 = vunpack.c.h.b16 %v937
    %v1582 = vunpack.c.l.b16 %v938
    %v1583 = vunpack.c.h.b16 %v938
    %v1584 = vunpack.c.l.b16 %v939
    %v1585 = vunpack.c.h.b16 %v939
    %v1586 = vunpack.c.l.b16 %v940
    %v1587 = vunpack.c.h.b16 %v940
    %v1588 = vunpack.c.l.b16 %v941
    %v1589 = vunpack.c.h.b16 %v941
    %v1590 = vunpack.c.l.b16 %v942
    %v1591 = vunpack.c.h.b16 %v942
    %v1592 = vunpack.c.l.b16 %v943
    %v1593 = vunpack.c.h.b16 %v943
    %v1594 = vunpack.c.l.b16 %v944
    %v1595 = vunpack.c.h.b16 %v944
    %v1596 = vunpack.c.l.b16 %v945
    %v1597 = vunpack.c.h.b16 %v945
    %v1598 = vunpack.c.l.b16 %v946
    %v1599 = vunpack.c.h.b16 %v946
    %v1600 = vunpack.c.l.b16 %v947
    %v1601 = vunpack.c.h.b16 %v947
    %v1602 = vunpack.c.l.b16 %v948
    %v1603 = vunpack.c.h.b16 %v948
    %v1604 = vunpack.c.l.b16 %v949
    %v1605 = vunpack.c.h.b16 %v949
    %v1606 = vunpack.c.l.b16 %v950
    %v1607 = vunpack.c.h.b16 %v950
    %v1608 = vunpack.c.l.b16 %v951
    %v1609 = vunpack.c.h.b16 %v951
    %v1610 = vunpack.c.l.b16 %v952
    %v1611 = vunpack.c.h.b16 %v952
    %v1612 = vunpack.c.l.b16 %v953
    %v1613 = vunpack.c.h.b16 %v953
    %v1614 = vunpack.c.l.b16 %v954
    %v1615 = vunpack.c.h.b16 %v954
    %v1616 = vunpack.c.l.b16 %v955
    %v1617 = vunpack.c.h.b16 %v955
    %v1618 = vunpack.c.l.b16 %v956
    %v1619 = vunpack.c.h.b16 %v956
    %v1620 = vunpack.c.l.b16 %v957
    %v1621 = vunpack.c.h.b16 %v957
    %v1622 = vunpack.c.l.b16 %v958
    %v1623 = vunpack.c.h.b16 %v958
    %v1624 = vunpack.c.l.b16 %v959
    %v1625 = vunpack.c.h.b16 %v959
    %v1626 = vunpack.c.l.b16 %v960
    %v1627 = vunpack.c.h.b16 %v960
    %v1628 = vunpack.c.l.b16 %v961
    %v1629 = vunpack.c.h.b16 %v961
    %v1630 = vunpack.c.l.b16 %v962
    %v1631 = vunpack.c.h.b16 %v962
    %v1632 = vunpack.c.l.b16 %v963
    %v1633 = vunpack.c.h.b16 %v963
    %v1634 = vunpack.c.l.b16 %v964
    %v1635 = vunpack.c.h.b16 %v964
    %v1636 = vunpack.c.l.b16 %v965
    %v1637 = vunpack.c.h.b16 %v965
    %v1638 = vunpack.c.l.b16 %v966
    %v1639 = vunpack.c.h.b16 %v966
    %v1640 = vunpack.c.l.b16 %v967
    %v1641 = vunpack.c.h.b16 %v967
    %v1642 = vunpack.c.l.b16 %v968
    %v1643 = vunpack.c.h.b16 %v968
    %v1644 = vunpack.c.l.b16 %v969
    %v1645 = vunpack.c.h.b16 %v969
    %v1646 = vunpack.c.l.b16 %v970
    %v1647 = vunpack.c.h.b16 %v970
    %v1648 = vunpack.c.l.b16 %v971
    %v1649 = vunpack.c.h.b16 %v971
    %v1650 = vunpack.c.l.b16 %v972
    %v1651 = vunpack.c.h.b16 %v972
    %v1652 = vunpack.c.l.b16 %v973
    %v1653 = vunpack.c.h.b16 %v973
    %v1654 = vunpack.c.l.b16 %v974
    %v1655 = vunpack.c.h.b16 %v974
    %v1656 = vunpack.c.l.b16 %v975
    %v1657 = vunpack.c.h.b16 %v975
    %v1658 = vunpack.c.l.b16 %v976
    %v1659 = vunpack.c.h.b16 %v976
    %v1660 = vunpack.c.l.b16 %v977
    %v1661 = vunpack.c.h.b16 %v977
    %v1662 = vunpack.c.l.b16 %v978
    %v1663 = vunpack.c.h.b16 %v978
    %v1664 = vunpack.c.l.b16 %v979
    %v1665 = vunpack.c.h.b16 %v979
    %v1666 = vunpack.c.l.b16 %v980
    %v1667 = vunpack.c.h.b16 %v980
    %v1668 = vunpack.c.l.b16 %v981
    %v1669 = vunpack.c.h.b16 %v981
    %v1670 = vunpack.c.l.b16 %v982
    %v1671 = vunpack.c.h.b16 %v982
    %v1672 = vunpack.c.l.b16 %v983
    %v1673 = vunpack.c.h.b16 %v983
    %v1674 = vunpack.c.l.b16 %v984
    %v1675 = vunpack.c.h.b16 %v984
    %v1676 = vunpack.c.l.b16 %v985
    %v1677 = vunpack.c.h.b16 %v985
    %v1678 = vunpack.c.l.b16 %v986
    %v1679 = vunpack.c.h.b16 %v986
    %v1680 = vunpack.c.l.b16 %v987
    %v1681 = vunpack.c.h.b16 %v987
    %v1682 = vunpack.c.l.b16 %v988
    %v1683 = vunpack.c.h.b16 %v988
    %v1684 = vunpack.c.l.b16 %v989
    %v1685 = vunpack.c.h.b16 %v989
    %v1686 = vunpack.c.l.b16 %v990
    %v1687 = vunpack.c.h.b16 %v990
    %v1688 = vunpack.c.l.b16 %v991
    %v1689 = vunpack.c.h.b16 %v991
    %v1690 = vunpack.c.l.b16 %v992
    %v1691 = vunpack.c.h.b16 %v992
    %v1692 = vunpack.c.l.b16 %v993
    %v1693 = vunpack.c.h.b16 %v993
    %v1694 = vunpack.c.l.b16 %v994
    %v1695 = vunpack.c.h.b16 %v994
    %v1696 = vunpack.c.l.b16 %v995
    %v1697 = vunpack.c.h.b16 %v995
    %v1698 = vunpack.c.l.b16 %v996
    %v1699 = vunpack.c.h.b16 %v996
    %v1700 = vunpack.c.l.b16 %v997
    %v1701 = vunpack.c.h.b16 %v997
    %v1702 = vunpack.c.l.b16 %v998
    %v1703 = vunpack.c.h.b16 %v998
    %v1704 = vunpack.c.l.b16 %v999
    %v1705 = vunpack.c.h.b16 %v999
    %v1706 = vunpack.c.l.b16 %v1000
    %v1707 = vunpack.c.h.b16 %v1000
    %v1708 = vunpack.c.l.b16 %v1001
    %v1709 = vunpack.c.h.b16 %v1001
    %v1710 = vunpack.c.l.b16 %v1002
    %v1711 = vunpack.c.h.b16 %v1002
    %v1712 = vunpack.c.l.b16 %v1003
    %v1713 = vunpack.c.h.b16 %v1003
    %v1714 = vunpack.c.l.b16 %v1004
    %v1715 = vunpack.c.h.b16 %v1004
    %v1716 = vunpack.c.l.b16 %v1005
    %v1717 = vunpack.c.h.b16 %v1005
    %v1718 = vunpack.c.l.b16 %v1006
    %v1719 = vunpack.c.h.b16 %v1006
    %v1720 = vunpack.c.l.b16 %v1007
    %v1721 = vunpack.c.h.b16 %v1007
    %v1722 = vunpack.c.l.b16 %v1008
    %v1723 = vunpack.c.h.b16 %v1008
    %v1724 = vunpack.c.l.b16 %v1009
    %v1725 = vunpack.c.h.b16 %v1009
    %v1726 = vunpack.c.l.b16 %v1010
    %v1727 = vunpack.c.h.b16 %v1010
    %v1728 = vunpack.c.l.b16 %v1011
    %v1729 = vunpack.c.h.b16 %v1011
    %v1730 = vunpack.c.l.b16 %v1012
    %v1731 = vunpack.c.h.b16 %v1012
    %v1732 = vunpack.c.l.b16 %v1013
    %v1733 = vunpack.c.h.b16 %v1013
    %v1734 = vunpack.c.l.b16 %v1014
    %v1735 = vunpack.c.h.b16 %v1014
    %v1736 = vunpack.c.l.b16 %v1015
    %v1737 = vunpack.c.h.b16 %v1015
    %v1738 = vunpack.c.l.b16 %v1016
    %v1739 = vunpack.c.h.b16 %v1016
    %v1740 = vunpack.c.l.b16 %v1017
    %v1741 = vunpack.c.h.b16 %v1017
    %v1742 = vunpack.c.l.b16 %v1018
    %v1743 = vunpack.c.h.b16 %v1018
    %v1744 = vunpack.c.l.b16 %v1019
    %v1745 = vunpack.c.h.b16 %v1019
    %v1746 = vunpack.c.l.b16 %v1020
    %v1747 = vunpack.c.h.b16 %v1020
    %v1748 = vunpack.c.l.b16 %v1021
    %v1749 = vunpack.c.h.b16 %v1021
    %v1750 = vunpack.c.l.b16 %v1022
    %v1751 = vunpack.c.h.b16 %v1022
    %v1752 = vunpack.c.l.b16 %v1023
    %v1753 = vunpack.c.h.b16 %v1023
    %v1754 = vunpack.c.l.b16 %v1024
    %v1755 = vunpack.c.h.b16 %v1024
    %v1756 = vunpack.c.l.b16 %v1025
    %v1757 = vunpack.c.h.b16 %v1025
    %v1758 = vunpack.c.l.b16 %v1026
    %v1759 = vunpack.c.h.b16 %v1026
    %v1760 = vunpack.c.l.b16 %v1027
    %v1761 = vunpack.c.h.b16 %v1027
    %v1762 = vunpack.c.l.b16 %v1028
    %v1763 = vunpack.c.h.b16 %v1028
    %v1764 = vunpack.c.l.b16 %v1029
    %v1765 = vunpack.c.h.b16 %v1029
    %v1766 = vunpack.c.l.b16 %v1030
    %v1767 = vunpack.c.h.b16 %v1030
    %v1768 = vunpack.c.l.b16 %v1031
    %v1769 = vunpack.c.h.b16 %v1031
    %v1770 = vunpack.c.l.b16 %v1032
    %v1771 = vunpack.c.h.b16 %v1032
    %v1772 = vunpack.c.l.b16 %v1033
    %v1773 = vunpack.c.h.b16 %v1033
    %v1774 = vunpack.c.l.b16 %v1034
    %v1775 = vunpack.c.h.b16 %v1034
    %v1776 = vunpack.c.l.b16 %v1035
    %v1777 = vunpack.c.h.b16 %v1035
    %v1778 = vunpack.c.l.b16 %v1036
    %v1779 = vunpack.c.h.b16 %v1036
    %v1780 = vunpack.c.l.b16 %v1037
    %v1781 = vunpack.c.h.b16 %v1037
    %v1782 = vunpack.c.l.b16 %v1038
    %v1783 = vunpack.c.h.b16 %v1038
    %v1784 = vunpack.c.l.b16 %v1039
    %v1785 = vunpack.c.h.b16 %v1039
    %v1786 = vunpack.c.l.b16 %v1040
    %v1787 = vunpack.c.h.b16 %v1040
    %v1788 = vunpack.c.l.b16 %v1041
    %v1789 = vunpack.c.h.b16 %v1041
    %v1790 = vunpack.c.l.b16 %v1042
    %v1791 = vunpack.c.h.b16 %v1042
    %v1792 = vunpack.c.l.b16 %v1043
    %v1793 = vunpack.c.h.b16 %v1043
    %v1794 = vunpack.c.l.b16 %v1044
    %v1795 = vunpack.c.h.b16 %v1044
    %v1796 = vunpack.c.l.b16 %v1045
    %v1797 = vunpack.c.h.b16 %v1045
    %v1798 = vunpack.c.l.b16 %v1046
    %v1799 = vunpack.c.h.b16 %v1046
    %v1800 = vunpack.c.l.b16 %v1047
    %v1801 = vunpack.c.h.b16 %v1047
    %v1802 = vunpack.c.l.b16 %v1048
    %v1803 = vunpack.c.h.b16 %v1048
    %v1804 = vunpack.c.l.b16 %v1049
    %v1805 = vunpack.c.h.b16 %v1049
    %v1806 = vunpack.c.l.b16 %v1050
    %v1807 = vunpack.c.h.b16 %v1050
    %v1808 = vunpack.c.l.b16 %v1051
    %v1809 = vunpack.c.h.b16 %v1051
    %v1810 = vunpack.c.l.b16 %v1052
    %v1811 = vunpack.c.h.b16 %v1052
    %v1812 = vunpack.c.l.b16 %v1053
    %v1813 = vunpack.c.h.b16 %v1053
    %v1814 = vunpack.c.l.b16 %v1054
    %v1815 = vunpack.c.h.b16 %v1054
    %v1816 = vunpack.c.l.b16 %v1055
    %v1817 = vunpack.c.h.b16 %v1055
    %v1818 = vunpack.c.l.b16 %v1056
    %v1819 = vunpack.c.h.b16 %v1056
    %v1820 = vunpack.c.l.b16 %v1057
    %v1821 = vunpack.c.h.b16 %v1057
    %v1822 = vunpack.c.l.b16 %v1058
    %v1823 = vunpack.c.h.b16 %v1058
    %v1824 = vunpack.c.l.b16 %v1059
    %v1825 = vunpack.c.h.b16 %v1059
    %v1826 = vunpack.c.l.b16 %v1060
    %v1827 = vunpack.c.h.b16 %v1060
    %v1828 = vunpack.c.l.b16 %v1061
    %v1829 = vunpack.c.h.b16 %v1061
    %v1830 = vunpack.c.l.b16 %v1062
    %v1831 = vunpack.c.h.b16 %v1062
    %v1832 = vunpack.c.l.b16 %v1063
    %v1833 = vunpack.c.h.b16 %v1063
    %v1834 = vunpack.c.l.b16 %v1064
    %v1835 = vunpack.c.h.b16 %v1064
    %v1836 = vunpack.c.l.b16 %v1065
    %v1837 = vunpack.c.h.b16 %v1065
    %v1838 = vunpack.c.l.b16 %v1066
    %v1839 = vunpack.c.h.b16 %v1066
    %v1840 = vunpack.c.l.b16 %v1067
    %v1841 = vunpack.c.h.b16 %v1067
    %v1842 = vunpack.c.l.b16 %v1068
    %v1843 = vunpack.c.h.b16 %v1068
    %v1844 = vunpack.c.l.b16 %v1069
    %v1845 = vunpack.c.h.b16 %v1069
    %v1846 = vunpack.c.l.b16 %v1070
    %v1847 = vunpack.c.h.b16 %v1070
    %v1848 = vunpack.c.l.b16 %v1071
    %v1849 = vunpack.c.h.b16 %v1071
    %v1850 = vunpack.c.l.b16 %v1072
    %v1851 = vunpack.c.h.b16 %v1072
    %v1852 = vunpack.c.l.b16 %v1073
    %v1853 = vunpack.c.h.b16 %v1073
    %v1854 = vunpack.c.l.b16 %v1074
    %v1855 = vunpack.c.h.b16 %v1074
    %v1856 = vunpack.c.l.b16 %v1075
    %v1857 = vunpack.c.h.b16 %v1075
    %v1858 = vunpack.c.l.b16 %v1076
    %v1859 = vunpack.c.h.b16 %v1076
    %v1860 = vunpack.c.l.b16 %v1077
    %v1861 = vunpack.c.h.b16 %v1077
    %v1862 = vunpack.c.l.b16 %v1078
    %v1863 = vunpack.c.h.b16 %v1078
    %v1864 = vunpack.c.l.b16 %v1079
    %v1865 = vunpack.c.h.b16 %v1079
    %v1866 = vunpack.c.l.b16 %v1080
    %v1867 = vunpack.c.h.b16 %v1080
    %v1868 = vunpack.c.l.b16 %v1081
    %v1869 = vunpack.c.h.b16 %v1081
    %v1870 = vunpack.c.l.b16 %v1082
    %v1871 = vunpack.c.h.b16 %v1082
    %v1872 = vunpack.c.l.b16 %v1083
    %v1873 = vunpack.c.h.b16 %v1083
    %v1874 = vunpack.c.l.b16 %v1084
    %v1875 = vunpack.c.h.b16 %v1084
    %v1876 = vunpack.c.l.b16 %v1085
    %v1877 = vunpack.c.h.b16 %v1085
    %v1878 = vunpack.c.l.b16 %v1086
    %v1879 = vunpack.c.h.b16 %v1086
    %v1880 = vunpack.c.l.b16 %v1087
    %v1881 = vunpack.c.h.b16 %v1087
    %v1882 = vunpack.c.l.b16 %v1088
    %v1883 = vunpack.c.h.b16 %v1088
    %v1884 = vunpack.c.l.b16 %v1089
    %v1885 = vunpack.c.h.b16 %v1089
    %v1886 = vunpack.c.l.b16 %v1090
    %v1887 = vunpack.c.h.b16 %v1090
    %v1888 = vunpack.c.l.b16 %v1091
    %v1889 = vunpack.c.h.b16 %v1091
    %v1890 = vunpack.c.l.b16 %v1092
    %v1891 = vunpack.c.h.b16 %v1092
    %v1892 = vunpack.c.l.b16 %v1093
    %v1893 = vunpack.c.h.b16 %v1093
    %v1894 = vunpack.c.l.b16 %v1094
    %v1895 = vunpack.c.h.b16 %v1094
    %v1896 = vunpack.c.l.b16 %v1095
    %v1897 = vunpack.c.h.b16 %v1095
    %v1898 = vunpack.c.l.b16 %v1096
    %v1899 = vunpack.c.h.b16 %v1096
    %v1900 = vunpack.c.l.b16 %v1097
    %v1901 = vunpack.c.h.b16 %v1097
    %v1902 = vunpack.c.l.b16 %v1098
    %v1903 = vunpack.c.h.b16 %v1098
    %v1904 = vunpack.c.l.b16 %v1099
    %v1905 = vunpack.c.h.b16 %v1099
    %v1906 = vunpack.c.l.b16 %v1100
    %v1907 = vunpack.c.h.b16 %v1100
    %v1908 = vunpack.c.l.b16 %v1101
    %v1909 = vunpack.c.h.b16 %v1101
    %v1910 = vunpack.c.l.b16 %v1102
    %v1911 = vunpack.c.h.b16 %v1102
    %v1912 = vunpack.c.l.b16 %v1103
    %v1913 = vunpack.c.h.b16 %v1103
    %v1914 = vpack.c.b16 %v1410, %v1402
    %v1915 = vpack.c.b16 %v1411, %v1403
    %v1916 = vpack.c.b16 %v1412, %v1404
    %v1917 = vpack.c.b16 %v1413, %v1405
    %v1918 = vpack.c.b16 %v1414, %v1406
    %v1919 = vpack.c.b16 %v1415, %v1407
    %v1920 = vpack.c.b16 %v1416, %v1408
    %v1921 = vpack.c.b16 %v1417, %v1409
    %v1922 = vpack.c.b16 %v1426, %v1418
    %v1923 = vpack.c.b16 %v1427, %v1419
    %v1924 = vpack.c.b16 %v1428, %v1420
    %v1925 = vpack.c.b16 %v1429, %v1421
    %v1926 = vpack.c.b16 %v1430, %v1422
    %v1927 = vpack.c.b16 %v1431, %v1423
    %v1928 = vpack.c.b16 %v1432, %v1424
    %v1929 = vpack.c.b16 %v1433, %v1425
    %v1930 = vpack.c.b16 %v1442, %v1434
    %v1931 = vpack.c.b16 %v1443, %v1435
    %v1932 = vpack.c.b16 %v1444, %v1436
    %v1933 = vpack.c.b16 %v1445, %v1437
    %v1934 = vpack.c.b16 %v1446, %v1438
    %v1935 = vpack.c.b16 %v1447, %v1439
    %v1936 = vpack.c.b16 %v1448, %v1440
    %v1937 = vpack.c.b16 %v1449, %v1441
    %v1938 = vpack.c.b16 %v1458, %v1450
    %v1939 = vpack.c.b16 %v1459, %v1451
    %v1940 = vpack.c.b16 %v1460, %v1452
    %v1941 = vpack.c.b16 %v1461, %v1453
    %v1942 = vpack.c.b16 %v1462, %v1454
    %v1943 = vpack.c.b16 %v1463, %v1455
    %v1944 = vpack.c.b16 %v1464, %v1456
    %v1945 = vpack.c.b16 %v1465, %v1457
    %v1946 = vpack.c.b16 %v1474, %v1466
    %v1947 = vpack.c.b16 %v1475, %v1467
    %v1948 = vpack.c.b16 %v1476, %v1468
    %v1949 = vpack.c.b16 %v1477, %v1469
    %v1950 = vpack.c.b16 %v1478, %v1470
    %v1951 = vpack.c.b16 %v1479, %v1471
    %v1952 = vpack.c.b16 %v1480, %v1472
    %v1953 = vpack.c.b16 %v1481, %v1473
    %v1954 = vpack.c.b16 %v1490, %v1482
    %v1955 = vpack.c.b16 %v1491, %v1483
    %v1956 = vpack.c.b16 %v1492, %v1484
    %v1957 = vpack.c.b16 %v1493, %v1485
    %v1958 = vpack.c.b16 %v1494, %v1486
    %v1959 = vpack.c.b16 %v1495, %v1487
    %v1960 = vpack.c.b16 %v1496, %v1488
    %v1961 = vpack.c.b16 %v1497, %v1489
    %v1962 = vpack.c.b16 %v1506, %v1498
    %v1963 = vpack.c.b16 %v1507, %v1499
    %v1964 = vpack.c.b16 %v1508, %v1500
    %v1965 = vpack.c.b16 %v1509, %v1501
    %v1966 = vpack.c.b16 %v1510, %v1502
    %v1967 = vpack.c.b16 %v1511, %v1503
    %v1968 = vpack.c.b16 %v1512, %v1504
    %v1969 = vpack.c.b16 %v1513, %v1505
    %v1970 = vpack.c.b16 %v1522, %v1514
    %v1971 = vpack.c.b16 %v1523, %v1515
    %v1972 = vpack.c.b16 %v1524, %v1516
    %v1973 = vpack.c.b16 %v1525, %v1517
    %v1974 = vpack.c.b16 %v1526, %v1518
    %v1975 = vpack.c.b16 %v1527, %v1519
    %v1976 = vpack.c.b16 %v1528, %v1520
    %v1977 = vpack.c.b16 %v1529, %v1521
    %v1978 = vpack.c.b16 %v1538, %v1530
    %v1979 = vpack.c.b16 %v1539, %v1531
    %v1980 = vpack.c.b16 %v1540, %v1532
    %v1981 = vpack.c.b16 %v1541, %v1533
    %v1982 = vpack.c.b16 %v1542, %v1534
    %v1983 = vpack.c.b16 %v1543, %v1535
    %v1984 = vpack.c.b16 %v1544, %v1536
    %v1985 = vpack.c.b16 %v1545, %v1537
    %v1986 = vpack.c.b16 %v1554, %v1546
    %v1987 = vpack.c.b16 %v1555, %v1547
    %v1988 = vpack.c.b16 %v1556, %v1548
    %v1989 = vpack.c.b16 %v1557, %v1549
    %v1990 = vpack.c.b16 %v1558, %v1550
    %v1991 = vpack.c.b16 %v1559, %v1551
    %v1992 = vpack.c.b16 %v1560, %v1552
    %v1993 = vpack.c.b16 %v1561, %v1553
    %v1994 = vpack.c.b16 %v1570, %v1562
    %v1995 = vpack.c.b16 %v1571, %v1563
    %v1996 = vpack.c.b16 %v1572, %v1564
    %v1997 = vpack.c.b16 %v1573, %v1565
    %v1998 = vpack.c.b16 %v1574, %v1566
    %v1999 = vpack.c.b16 %v1575, %v1567
    %v2000 = vpack.c.b16 %v1576, %v1568
    %v2001 = vpack.c.b16 %v1577, %v1569
    %v2002 = vpack.c.b16 %v1586, %v1578
    %v2003 = vpack.c.b16 %v1587, %v1579
    %v2004 = vpack.c.b16 %v1588, %v1580
    %v2005 = vpack.c.b16 %v1589, %v1581
    %v2006 = vpack.c.b16 %v1590, %v1582
    %v2007 = vpack.c.b16 %v1591, %v1583
    %v2008 = vpack.c.b16 %v1592, %v1584
    %v2009 = vpack.c.b16 %v1593, %v1585
    %v2010 = vpack.c.b16 %v1602, %v1594
    %v2011 = vpack.c.b16 %v1603, %v1595
    %v2012 = vpack.c.b16 %v1604, %v1596
    %v2013 = vpack.c.b16 %v1605, %v1597
    %v2014 = vpack.c.b16 %v1606, %v1598
    %v2015 = vpack.c.b16 %v1607, %v1599
    %v2016 = vpack.c.b16 %v1608, %v1600
    %v2017 = vpack.c.b16 %v1609, %v1601
    %v2018 = vpack.c.b16 %v1618, %v1610
    %v2019 = vpack.c.b16 %v1619, %v1611
    %v2020 = vpack.c.b16 %v1620, %v1612
    %v2021 = vpack.c.b16 %v1621, %v1613
    %v2022 = vpack.c.b16 %v1622, %v1614
    %v2023 = vpack.c.b16 %v1623, %v1615
    %v2024 = vpack.c.b16 %v1624, %v1616
    %v2025 = vpack.c.b16 %v1625, %v1617
    %v2026 = vpack.c.b16 %v1634, %v1626
    %v2027 = vpack.c.b16 %v1635, %v1627
    %v2028 = vpack.c.b16 %v1636, %v1628
    %v2029 = vpack.c.b16 %v1637, %v1629
    %v2030 = vpack.c.b16 %v1638, %v1630
    %v2031 = vpack.c.b16 %v1639, %v1631
    %v2032 = vpack.c.b16 %v1640, %v1632
    %v2033 = vpack.c.b16 %v1641, %v1633
    %v2034 = vpack.c.b16 %v1650, %v1642
    %v2035 = vpack.c.b16 %v1651, %v1643
    %v2036 = vpack.c.b16 %v1652, %v1644
    %v2037 = vpack.c.b16 %v1653, %v1645
    %v2038 = vpack.c.b16 %v1654, %v1646
    %v2039 = vpack.c.b16 %v1655, %v1647
    %v2040 = vpack.c.b16 %v1656, %v1648
    %v2041 = vpack.c.b16 %v1657, %v1649
    %v2042 = vpack.c.b16 %v1666, %v1658
    %v2043 = vpack.c.b16 %v1667, %v1659
    %v2044 = vpack.c.b16 %v1668, %v1660
    %v2045 = vpack.c.b16 %v1669, %v1661
    %v2046 = vpack.c.b16 %v1670, %v1662
    %v2047 = vpack.c.b16 %v1671, %v1663
    %v2048 = vpack.c.b16 %v1672, %v1664
    %v2049 = vpack.c.b16 %v1673, %v1665
    %v2050 = vpack.c.b16 %v1682, %v1674
    %v2051 = vpack.c.b16 %v1683, %v1675
    %v2052 = vpack.c.b16 %v1684, %v1676
    %v2053 = vpack.c.b16 %v1685, %v1677
    %v2054 = vpack.c.b16 %v1686, %v1678
    %v2055 = vpack.c.b16 %v1687, %v1679
    %v2056 = vpack.c.b16 %v1688, %v1680
    %v2057 = vpack.c.b16 %v1689, %v1681
    %v2058 = vpack.c.b16 %v1698, %v1690
    %v2059 = vpack.c.b16 %v1699, %v1691
    %v2060 = vpack.c.b16 %v1700, %v1692
    %v2061 = vpack.c.b16 %v1701, %v1693
    %v2062 = vpack.c.b16 %v1702, %v1694
    %v2063 = vpack.c.b16 %v1703, %v1695
    %v2064 = vpack.c.b16 %v1704, %v1696
    %v2065 = vpack.c.b16 %v1705, %v1697
    %v2066 = vpack.c.b16 %v1714, %v1706
    %v2067 = vpack.c.b16 %v1715, %v1707
    %v2068 = vpack.c.b16 %v1716, %v1708
    %v2069 = vpack.c.b16 %v1717, %v1709
    %v2070 = vpack.c.b16 %v1718, %v1710
    %v2071 = vpack.c.b16 %v1719, %v1711
    %v2072 = vpack.c.b16 %v1720, %v1712
    %v2073 = vpack.c.b16 %v1721, %v1713
    %v2074 = vpack.c.b16 %v1730, %v1722
    %v2075 = vpack.c.b16 %v1731, %v1723
    %v2076 = vpack.c.b16 %v1732, %v1724
    %v2077 = vpack.c.b16 %v1733, %v1725
    %v2078 = vpack.c.b16 %v1734, %v1726
    %v2079 = vpack.c.b16 %v1735, %v1727
    %v2080 = vpack.c.b16 %v1736, %v1728
    %v2081 = vpack.c.b16 %v1737, %v1729
    %v2082 = vpack.c.b16 %v1746, %v1738
    %v2083 = vpack.c.b16 %v1747, %v1739
    %v2084 = vpack.c.b16 %v1748, %v1740
    %v2085 = vpack.c.b16 %v1749, %v1741
    %v2086 = vpack.c.b16 %v1750, %v1742
    %v2087 = vpack.c.b16 %v1751, %v1743
    %v2088 = vpack.c.b16 %v1752, %v1744
    %v2089 = vpack.c.b16 %v1753, %v1745
    %v2090 = vpack.c.b16 %v1762, %v1754
    %v2091 = vpack.c.b16 %v1763, %v1755
    %v2092 = vpack.c.b16 %v1764, %v1756
    %v2093 = vpack.c.b16 %v1765, %v1757
    %v2094 = vpack.c.b16 %v1766, %v1758
    %v2095 = vpack.c.b16 %v1767, %v1759
    %v2096 = vpack.c.b16 %v1768, %v1760
    %v2097 = vpack.c.b16 %v1769, %v1761
    %v2098 = vpack.c.b16 %v1778, %v1770
    %v2099 = vpack.c.b16 %v1779, %v1771
    %v2100 = vpack.c.b16 %v1780, %v1772
    %v2101 = vpack.c.b16 %v1781, %v1773
    %v2102 = vpack.c.b16 %v1782, %v1774
    %v2103 = vpack.c.b16 %v1783, %v1775
    %v2104 = vpack.c.b16 %v1784, %v1776
    %v2105 = vpack.c.b16 %v1785, %v1777
    %v2106 = vpack.c.b16 %v1794, %v1786
    %v2107 = vpack.c.b16 %v1795, %v1787
    %v2108 = vpack.c.b16 %v1796, %v1788
    %v2109 = vpack.c.b16 %v1797, %v1789
    %v2110 = vpack.c.b16 %v1798, %v1790
    %v2111 = vpack.c.b16 %v1799, %v1791
    %v2112 = vpack.c.b16 %v1800, %v1792
    %v2113 = vpack.c.b16 %v1801, %v1793
    %v2114 = vpack.c.b16 %v1810, %v1802
    %v2115 = vpack.c.b16 %v1811, %v1803
    %v2116 = vpack.c.b16 %v1812, %v1804
    %v2117 = vpack.c.b16 %v1813, %v1805
    %v2118 = vpack.c.b16 %v1814, %v1806
    %v2119 = vpack.c.b16 %v1815, %v1807
    %v2120 = vpack.c.b16 %v1816, %v1808
    %v2121 = vpack.c.b16 %v1817, %v1809
    %v2122 = vpack.c.b16 %v1826, %v1818
    %v2123 = vpack.c.b16 %v1827, %v1819
    %v2124 = vpack.c.b16 %v1828, %v1820
    %v2125 = vpack.c.b16 %v1829, %v1821
    %v2126 = vpack.c.b16 %v1830, %v1822
    %v2127 = vpack.c.b16 %v1831, %v1823
    %v2128 = vpack.c.b16 %v1832, %v1824
    %v2129 = vpack.c.b16 %v1833, %v1825
    %v2130 = vpack.c.b16 %v1842, %v1834
    %v2131 = vpack.c.b16 %v1843, %v1835
    %v2132 = vpack.c.b16 %v1844, %v1836
    %v2133 = vpack.c.b16 %v1845, %v1837
    %v2134 = vpack.c.b16 %v1846, %v1838
    %v2135 = vpack.c.b16 %v1847, %v1839
    %v2136 = vpack.c.b16 %v1848, %v1840
    %v2137 = vpack.c.b16 %v1849, %v1841
    %v2138 = vpack.c.b16 %v1858, %v1850
    %v2139 = vpack.c.b16 %v1859, %v1851
    %v2140 = vpack.c.b16 %v1860, %v1852
    %v2141 = vpack.c.b16 %v1861, %v1853
    %v2142 = vpack.c.b16 %v1862, %v1854
    %v2143 = vpack.c.b16 %v1863, %v1855
    %v2144 = vpack.c.b16 %v1864, %v1856
    %v2145 = vpack.c.b16 %v1865, %v1857
    %v2146 = vpack.c.b16 %v1874, %v1866
    %v2147 = vpack.c.b16 %v1875, %v1867
    %v2148 = vpack.c.b16 %v1876, %v1868
    %v2149 = vpack.c.b16 %v1877, %v1869
    %v2150 = vpack.c.b16 %v1878, %v1870
    %v2151 = vpack.c.b16 %v1879, %v1871
    %v2152 = vpack.c.b16 %v1880, %v1872
    %v2153 = vpack.c.b16 %v1881, %v1873
    %v2154 = vpack.c.b16 %v1890, %v1882
    %v2155 = vpack.c.b16 %v1891, %v1883
    %v2156 = vpack.c.b16 %v1892, %v1884
    %v2157 = vpack.c.b16 %v1893, %v1885
    %v2158 = vpack.c.b16 %v1894, %v1886
    %v2159 = vpack.c.b16 %v1895, %v1887
    %v2160 = vpack.c.b16 %v1896, %v1888
    %v2161 = vpack.c.b16 %v1897, %v1889
    %v2162 = vpack.c.b16 %v1906, %v1898
    %v2163 = vpack.c.b16 %v1907, %v1899
    %v2164 = vpack.c.b16 %v1908, %v1900
    %v2165 = vpack.c.b16 %v1909, %v1901
    %v2166 = vpack.c.b16 %v1910, %v1902
    %v2167 = vpack.c.b16 %v1911, %v1903
    %v2168 = vpack.c.b16 %v1912, %v1904
    %v2169 = vpack.c.b16 %v1913, %v1905
    %2426 = vmatprep.subr.bf16.mxu0 %v1915
    %2427 = vmatpush1.bf16.msra.mxu0 %v1914
    %2428 = vmatprep.subr.bf16.mxu0 %v1923
    %2429 = vmatpush1.bf16.msra.mxu0 %v1922
    %2430 = vmatprep.subr.bf16.mxu0 %v1931
    %2431 = vmatpush1.bf16.msra.mxu0 %v1930
    %2432 = vmatprep.subr.bf16.mxu0 %v1939
    %2433 = vmatpush1.bf16.msra.mxu0 %v1938
    %2434 = vmatprep.subr.bf16.mxu0 %v1947
    %2435 = vmatpush1.bf16.msra.mxu0 %v1946
    %2436 = vmatprep.subr.bf16.mxu0 %v1955
    %2437 = vmatpush1.bf16.msra.mxu0 %v1954
    %2438 = vmatprep.subr.bf16.mxu0 %v1963
    %2439 = vmatpush1.bf16.msra.mxu0 %v1962
    %2440 = vmatprep.subr.bf16.mxu0 %v1971
    %2441 = vmatpush1.bf16.msra.mxu0 %v1970
    %2442 = vmatprep.subr.bf16.mxu0 %v1979
    %2443 = vmatpush1.bf16.msra.mxu0 %v1978
    %2444 = vmatprep.subr.bf16.mxu0 %v1987
    %2445 = vmatpush1.bf16.msra.mxu0 %v1986
    %2446 = vmatprep.subr.bf16.mxu0 %v1995
    %2447 = vmatpush1.bf16.msra.mxu0 %v1994
    %2448 = vmatprep.subr.bf16.mxu0 %v2003
    %2449 = vmatpush1.bf16.msra.mxu0 %v2002
    %2450 = vmatprep.subr.bf16.mxu0 %v2011
    %2451 = vmatpush1.bf16.msra.mxu0 %v2010
    %2452 = vmatprep.subr.bf16.mxu0 %v2019
    %2453 = vmatpush1.bf16.msra.mxu0 %v2018
    %2454 = vmatprep.subr.bf16.mxu0 %v2027
    %2455 = vmatpush1.bf16.msra.mxu0 %v2026
    %2456 = vmatprep.subr.bf16.mxu0 %v2035
    %2457 = vmatpush1.bf16.msra.mxu0 %v2034
    %2458 = vmatprep.mubr.bf16.mxu0 %v845
    %2459 = vmatmul.mubr.bf16.gmra.mrb[0].mxu0 %v844
    %v2460 = vpop.f32.mrb[0].mxu0
    %v2461 = vadd.f32 %v1109, %v2460
    %v2462 = vpop.f32.mrb[0].mxu0
    %v2463 = vadd.f32 %v1113, %v2462
    %v2464 = vpop.f32.mrb[0].mxu0
    %v2465 = vpop.f32.mrb[0].mxu0
    %2466 = vdwg.mxu0
    %2467 = vmatprep.subr.bf16.mxu0 %v2043
    %2468 = vmatpush1.bf16.msra.mxu0 %v2042
    %2469 = vmatprep.subr.bf16.mxu0 %v2051
    %2470 = vmatpush1.bf16.msra.mxu0 %v2050
    %2471 = vmatprep.subr.bf16.mxu0 %v2059
    %2472 = vmatpush1.bf16.msra.mxu0 %v2058
    %2473 = vmatprep.subr.bf16.mxu0 %v2067
    %2474 = vmatpush1.bf16.msra.mxu0 %v2066
    %2475 = vmatprep.subr.bf16.mxu0 %v2075
    %2476 = vmatpush1.bf16.msra.mxu0 %v2074
    %2477 = vmatprep.subr.bf16.mxu0 %v2083
    %2478 = vmatpush1.bf16.msra.mxu0 %v2082
    %2479 = vmatprep.subr.bf16.mxu0 %v2091
    %2480 = vmatpush1.bf16.msra.mxu0 %v2090
    %2481 = vmatprep.subr.bf16.mxu0 %v2099
    %2482 = vmatpush1.bf16.msra.mxu0 %v2098
    %2483 = vmatprep.subr.bf16.mxu0 %v2107
    %2484 = vmatpush1.bf16.msra.mxu0 %v2106
    %2485 = vmatprep.subr.bf16.mxu0 %v2115
    %2486 = vmatpush1.bf16.msra.mxu0 %v2114
    %2487 = vmatprep.subr.bf16.mxu0 %v2123
    %2488 = vmatpush1.bf16.msra.mxu0 %v2122
    %2489 = vmatprep.subr.bf16.mxu0 %v2131
    %2490 = vmatpush1.bf16.msra.mxu0 %v2130
    %2491 = vmatprep.subr.bf16.mxu0 %v2139
    %2492 = vmatpush1.bf16.msra.mxu0 %v2138
    %2493 = vmatprep.subr.bf16.mxu0 %v2147
    %2494 = vmatpush1.bf16.msra.mxu0 %v2146
    %2495 = vmatprep.subr.bf16.mxu0 %v2155
    %2496 = vmatpush1.bf16.msra.mxu0 %v2154
    %2497 = vmatprep.subr.bf16.mxu0 %v2163
    %2498 = vmatpush1.bf16.msra.mxu0 %v2162
    %2499 = vmatprep.mubr.bf16.mxu0 %v847
    %2500 = vmatmul.mubr.bf16.gmra.mrb[0].mxu0 %v846
    %v2501 = vpop.f32.mrb[0].mxu0
    %v2502 = vadd.f32 %v2461, %v2501
    %v2503 = vpop.f32.mrb[0].mxu0
    %v2504 = vadd.f32 %v2463, %v2503
    %v2505 = vpop.f32.mrb[0].mxu0
    %v2506 = vpop.f32.mrb[0].mxu0
    %2507 = vdwg.mxu0
    %2508 = vmatprep.subr.bf16.mxu0 %v1917
    %2509 = vmatpush1.bf16.msra.mxu0 %v1916
    %2510 = vmatprep.subr.bf16.mxu0 %v1925
    %2511 = vmatpush1.bf16.msra.mxu0 %v1924
    %2512 = vmatprep.subr.bf16.mxu0 %v1933
    %2513 = vmatpush1.bf16.msra.mxu0 %v1932
    %2514 = vmatprep.subr.bf16.mxu0 %v1941
    %2515 = vmatpush1.bf16.msra.mxu0 %v1940
    %2516 = vmatprep.subr.bf16.mxu0 %v1949
    %2517 = vmatpush1.bf16.msra.mxu0 %v1948
    %2518 = vmatprep.subr.bf16.mxu0 %v1957
    %2519 = vmatpush1.bf16.msra.mxu0 %v1956
    %2520 = vmatprep.subr.bf16.mxu0 %v1965
    %2521 = vmatpush1.bf16.msra.mxu0 %v1964
    %2522 = vmatprep.subr.bf16.mxu0 %v1973
    %2523 = vmatpush1.bf16.msra.mxu0 %v1972
    %2524 = vmatprep.subr.bf16.mxu0 %v1981
    %2525 = vmatpush1.bf16.msra.mxu0 %v1980
    %2526 = vmatprep.subr.bf16.mxu0 %v1989
    %2527 = vmatpush1.bf16.msra.mxu0 %v1988
    %2528 = vmatprep.subr.bf16.mxu0 %v1997
    %2529 = vmatpush1.bf16.msra.mxu0 %v1996
    %2530 = vmatprep.subr.bf16.mxu0 %v2005
    %2531 = vmatpush1.bf16.msra.mxu0 %v2004
    %2532 = vmatprep.subr.bf16.mxu0 %v2013
    %2533 = vmatpush1.bf16.msra.mxu0 %v2012
    %2534 = vmatprep.subr.bf16.mxu0 %v2021
    %2535 = vmatpush1.bf16.msra.mxu0 %v2020
    %2536 = vmatprep.subr.bf16.mxu0 %v2029
    %2537 = vmatpush1.bf16.msra.mxu0 %v2028
    %2538 = vmatprep.subr.bf16.mxu0 %v2037
    %2539 = vmatpush1.bf16.msra.mxu0 %v2036
    %2540 = vmatprep.mubr.bf16.mxu0 %v845
    %2541 = vmatmul.mubr.bf16.gmra.mrb[0].mxu0 %v844
    %v2542 = vpop.f32.mrb[0].mxu0
    %v2543 = vadd.f32 %v1117, %v2542
    %v2544 = vpop.f32.mrb[0].mxu0
    %v2545 = vadd.f32 %v1121, %v2544
    %v2546 = vpop.f32.mrb[0].mxu0
    %v2547 = vpop.f32.mrb[0].mxu0
    %2548 = vdwg.mxu0
    %2549 = vmatprep.subr.bf16.mxu0 %v2045
    %2550 = vmatpush1.bf16.msra.mxu0 %v2044
    %2551 = vmatprep.subr.bf16.mxu0 %v2053
    %2552 = vmatpush1.bf16.msra.mxu0 %v2052
    %2553 = vmatprep.subr.bf16.mxu0 %v2061
    %2554 = vmatpush1.bf16.msra.mxu0 %v2060
    %2555 = vmatprep.subr.bf16.mxu0 %v2069
    %2556 = vmatpush1.bf16.msra.mxu0 %v2068
    %2557 = vmatprep.subr.bf16.mxu0 %v2077
    %2558 = vmatpush1.bf16.msra.mxu0 %v2076
    %2559 = vmatprep.subr.bf16.mxu0 %v2085
    %2560 = vmatpush1.bf16.msra.mxu0 %v2084
    %2561 = vmatprep.subr.bf16.mxu0 %v2093
    %2562 = vmatpush1.bf16.msra.mxu0 %v2092
    %2563 = vmatprep.subr.bf16.mxu0 %v2101
    %2564 = vmatpush1.bf16.msra.mxu0 %v2100
    %2565 = vmatprep.subr.bf16.mxu0 %v2109
    %2566 = vmatpush1.bf16.msra.mxu0 %v2108
    %2567 = vmatprep.subr.bf16.mxu0 %v2117
    %2568 = vmatpush1.bf16.msra.mxu0 %v2116
    %2569 = vmatprep.subr.bf16.mxu0 %v2125
    %2570 = vmatpush1.bf16.msra.mxu0 %v2124
    %2571 = vmatprep.subr.bf16.mxu0 %v2133
    %2572 = vmatpush1.bf16.msra.mxu0 %v2132
    %2573 = vmatprep.subr.bf16.mxu0 %v2141
    %2574 = vmatpush1.bf16.msra.mxu0 %v2140
    %2575 = vmatprep.subr.bf16.mxu0 %v2149
    %2576 = vmatpush1.bf16.msra.mxu0 %v2148
    %2577 = vmatprep.subr.bf16.mxu0 %v2157
    %2578 = vmatpush1.bf16.msra.mxu0 %v2156
    %2579 = vmatprep.subr.bf16.mxu0 %v2165
    %2580 = vmatpush1.bf16.msra.mxu0 %v2164
    %2581 = vmatprep.mubr.bf16.mxu0 %v847
    %2582 = vmatmul.mubr.bf16.gmra.mrb[0].mxu0 %v846
    %v2583 = vpop.f32.mrb[0].mxu0
    %v2584 = vadd.f32 %v2543, %v2583
    %v2585 = vpop.f32.mrb[0].mxu0
    %v2586 = vadd.f32 %v2545, %v2585
    %v2587 = vpop.f32.mrb[0].mxu0
    %v2588 = vpop.f32.mrb[0].mxu0
    %2589 = vdwg.mxu0
    %2590 = vmatprep.subr.bf16.mxu0 %v1919
    %2591 = vmatpush1.bf16.msra.mxu0 %v1918
    %2592 = vmatprep.subr.bf16.mxu0 %v1927
    %2593 = vmatpush1.bf16.msra.mxu0 %v1926
    %2594 = vmatprep.subr.bf16.mxu0 %v1935
    %2595 = vmatpush1.bf16.msra.mxu0 %v1934
    %2596 = vmatprep.subr.bf16.mxu0 %v1943
    %2597 = vmatpush1.bf16.msra.mxu0 %v1942
    %2598 = vmatprep.subr.bf16.mxu0 %v1951
    %2599 = vmatpush1.bf16.msra.mxu0 %v1950
    %2600 = vmatprep.subr.bf16.mxu0 %v1959
    %2601 = vmatpush1.bf16.msra.mxu0 %v1958
    %2602 = vmatprep.subr.bf16.mxu0 %v1967
    %2603 = vmatpush1.bf16.msra.mxu0 %v1966
    %2604 = vmatprep.subr.bf16.mxu0 %v1975
    %2605 = vmatpush1.bf16.msra.mxu0 %v1974
    %2606 = vmatprep.subr.bf16.mxu0 %v1983
    %2607 = vmatpush1.bf16.msra.mxu0 %v1982
    %2608 = vmatprep.subr.bf16.mxu0 %v1991
    %2609 = vmatpush1.bf16.msra.mxu0 %v1990
    %2610 = vmatprep.subr.bf16.mxu0 %v1999
    %2611 = vmatpush1.bf16.msra.mxu0 %v1998
    %2612 = vmatprep.subr.bf16.mxu0 %v2007
    %2613 = vmatpush1.bf16.msra.mxu0 %v2006
    %2614 = vmatprep.subr.bf16.mxu0 %v2015
    %2615 = vmatpush1.bf16.msra.mxu0 %v2014
    %2616 = vmatprep.subr.bf16.mxu0 %v2023
    %2617 = vmatpush1.bf16.msra.mxu0 %v2022
    %2618 = vmatprep.subr.bf16.mxu0 %v2031
    %2619 = vmatpush1.bf16.msra.mxu0 %v2030
    %2620 = vmatprep.subr.bf16.mxu0 %v2039
    %2621 = vmatpush1.bf16.msra.mxu0 %v2038
    %2622 = vmatprep.mubr.bf16.mxu0 %v845
    %2623 = vmatmul.mubr.bf16.gmra.mrb[0].mxu0 %v844
    %v2624 = vpop.f32.mrb[0].mxu0
    %v2625 = vadd.f32 %v1125, %v2624
    %v2626 = vpop.f32.mrb[0].mxu0
    %v2627 = vadd.f32 %v1129, %v2626
    %v2628 = vpop.f32.mrb[0].mxu0
    %v2629 = vpop.f32.mrb[0].mxu0
    %2630 = vdwg.mxu0
    %2631 = vmatprep.subr.bf16.mxu0 %v2047
    %2632 = vmatpush1.bf16.msra.mxu0 %v2046
    %2633 = vmatprep.subr.bf16.mxu0 %v2055
    %2634 = vmatpush1.bf16.msra.mxu0 %v2054
    %2635 = vmatprep.subr.bf16.mxu0 %v2063
    %2636 = vmatpush1.bf16.msra.mxu0 %v2062
    %2637 = vmatprep.subr.bf16.mxu0 %v2071
    %2638 = vmatpush1.bf16.msra.mxu0 %v2070
    %2639 = vmatprep.subr.bf16.mxu0 %v2079
    %2640 = vmatpush1.bf16.msra.mxu0 %v2078
    %2641 = vmatprep.subr.bf16.mxu0 %v2087
    %2642 = vmatpush1.bf16.msra.mxu0 %v2086
    %2643 = vmatprep.subr.bf16.mxu0 %v2095
    %2644 = vmatpush1.bf16.msra.mxu0 %v2094
    %2645 = vmatprep.subr.bf16.mxu0 %v2103
    %2646 = vmatpush1.bf16.msra.mxu0 %v2102
    %2647 = vmatprep.subr.bf16.mxu0 %v2111
    %2648 = vmatpush1.bf16.msra.mxu0 %v2110
    %2649 = vmatprep.subr.bf16.mxu0 %v2119
    %2650 = vmatpush1.bf16.msra.mxu0 %v2118
    %2651 = vmatprep.subr.bf16.mxu0 %v2127
    %2652 = vmatpush1.bf16.msra.mxu0 %v2126
    %2653 = vmatprep.subr.bf16.mxu0 %v2135
    %2654 = vmatpush1.bf16.msra.mxu0 %v2134
    %2655 = vmatprep.subr.bf16.mxu0 %v2143
    %2656 = vmatpush1.bf16.msra.mxu0 %v2142
    %2657 = vmatprep.subr.bf16.mxu0 %v2151
    %2658 = vmatpush1.bf16.msra.mxu0 %v2150
    %2659 = vmatprep.subr.bf16.mxu0 %v2159
    %2660 = vmatpush1.bf16.msra.mxu0 %v2158
    %2661 = vmatprep.subr.bf16.mxu0 %v2167
    %2662 = vmatpush1.bf16.msra.mxu0 %v2166
    %2663 = vmatprep.mubr.bf16.mxu0 %v847
    %2664 = vmatmul.mubr.bf16.gmra.mrb[0].mxu0 %v846
    %v2665 = vpop.f32.mrb[0].mxu0
    %v2666 = vadd.f32 %v2625, %v2665
    %v2667 = vpop.f32.mrb[0].mxu0
    %v2668 = vadd.f32 %v2627, %v2667
    %v2669 = vpop.f32.mrb[0].mxu0
    %v2670 = vpop.f32.mrb[0].mxu0
    %2671 = vdwg.mxu0
    %2672 = vmatprep.subr.bf16.mxu0 %v1921
    %2673 = vmatpush1.bf16.msra.mxu0 %v1920
    %2674 = vmatprep.subr.bf16.mxu0 %v1929
    %2675 = vmatpush1.bf16.msra.mxu0 %v1928
    %2676 = vmatprep.subr.bf16.mxu0 %v1937
    %2677 = vmatpush1.bf16.msra.mxu0 %v1936
    %2678 = vmatprep.subr.bf16.mxu0 %v1945
    %2679 = vmatpush1.bf16.msra.mxu0 %v1944
    %2680 = vmatprep.subr.bf16.mxu0 %v1953
    %2681 = vmatpush1.bf16.msra.mxu0 %v1952
    %2682 = vmatprep.subr.bf16.mxu0 %v1961
    %2683 = vmatpush1.bf16.msra.mxu0 %v1960
    %2684 = vmatprep.subr.bf16.mxu0 %v1969
    %2685 = vmatpush1.bf16.msra.mxu0 %v1968
    %2686 = vmatprep.subr.bf16.mxu0 %v1977
    %2687 = vmatpush1.bf16.msra.mxu0 %v1976
    %2688 = vmatprep.subr.bf16.mxu0 %v1985
    %2689 = vmatpush1.bf16.msra.mxu0 %v1984
    %2690 = vmatprep.subr.bf16.mxu0 %v1993
    %2691 = vmatpush1.bf16.msra.mxu0 %v1992
    %2692 = vmatprep.subr.bf16.mxu0 %v2001
    %2693 = vmatpush1.bf16.msra.mxu0 %v2000
    %2694 = vmatprep.subr.bf16.mxu0 %v2009
    %2695 = vmatpush1.bf16.msra.mxu0 %v2008
    %2696 = vmatprep.subr.bf16.mxu0 %v2017
    %2697 = vmatpush1.bf16.msra.mxu0 %v2016
    %2698 = vmatprep.subr.bf16.mxu0 %v2025
    %2699 = vmatpush1.bf16.msra.mxu0 %v2024
    %2700 = vmatprep.subr.bf16.mxu0 %v2033
    %2701 = vmatpush1.bf16.msra.mxu0 %v2032
    %2702 = vmatprep.subr.bf16.mxu0 %v2041
    %2703 = vmatpush1.bf16.msra.mxu0 %v2040
    %2704 = vmatprep.mubr.bf16.mxu0 %v845
    %2705 = vmatmul.mubr.bf16.gmra.mrb[0].mxu0 %v844
    %v2706 = vpop.f32.mrb[0].mxu0
    %v2707 = vadd.f32 %v1133, %v2706
    %v2708 = vpop.f32.mrb[0].mxu0
    %v2709 = vadd.f32 %v1137, %v2708
    %v2710 = vpop.f32.mrb[0].mxu0
    %v2711 = vpop.f32.mrb[0].mxu0
    %2712 = vdwg.mxu0
    %2713 = vmatprep.subr.bf16.mxu0 %v2049
    %2714 = vmatpush1.bf16.msra.mxu0 %v2048
    %2715 = vmatprep.subr.bf16.mxu0 %v2057
    %2716 = vmatpush1.bf16.msra.mxu0 %v2056
    %2717 = vmatprep.subr.bf16.mxu0 %v2065
    %2718 = vmatpush1.bf16.msra.mxu0 %v2064
    %2719 = vmatprep.subr.bf16.mxu0 %v2073
    %2720 = vmatpush1.bf16.msra.mxu0 %v2072
    %2721 = vmatprep.subr.bf16.mxu0 %v2081
    %2722 = vmatpush1.bf16.msra.mxu0 %v2080
    %2723 = vmatprep.subr.bf16.mxu0 %v2089
    %2724 = vmatpush1.bf16.msra.mxu0 %v2088
    %2725 = vmatprep.subr.bf16.mxu0 %v2097
    %2726 = vmatpush1.bf16.msra.mxu0 %v2096
    %2727 = vmatprep.subr.bf16.mxu0 %v2105
    %2728 = vmatpush1.bf16.msra.mxu0 %v2104
    %2729 = vmatprep.subr.bf16.mxu0 %v2113
    %2730 = vmatpush1.bf16.msra.mxu0 %v2112
    %2731 = vmatprep.subr.bf16.mxu0 %v2121
    %2732 = vmatpush1.bf16.msra.mxu0 %v2120
    %2733 = vmatprep.subr.bf16.mxu0 %v2129
    %2734 = vmatpush1.bf16.msra.mxu0 %v2128
    %2735 = vmatprep.subr.bf16.mxu0 %v2137
    %2736 = vmatpush1.bf16.msra.mxu0 %v2136
    %2737 = vmatprep.subr.bf16.mxu0 %v2145
    %2738 = vmatpush1.bf16.msra.mxu0 %v2144
    %2739 = vmatprep.subr.bf16.mxu0 %v2153
    %2740 = vmatpush1.bf16.msra.mxu0 %v2152
    %2741 = vmatprep.subr.bf16.mxu0 %v2161
    %2742 = vmatpush1.bf16.msra.mxu0 %v2160
    %2743 = vmatprep.subr.bf16.mxu0 %v2169
    %2744 = vmatpush1.bf16.msra.mxu0 %v2168
    %2745 = vmatprep.mubr.bf16.mxu0 %v847
    %2746 = vmatmul.mubr.bf16.gmra.mrb[0].mxu0 %v846
    %v2747 = vpop.f32.mrb[0].mxu0
    %v2748 = vadd.f32 %v2707, %v2747
    %v2749 = vpop.f32.mrb[0].mxu0
    %v2750 = vadd.f32 %v2709, %v2749
    %v2751 = vpop.f32.mrb[0].mxu0
    %v2752 = vpop.f32.mrb[0].mxu0
    %2753 = vdwg.mxu0
    %v2754 = vmax.f32 %v2502, 0.0
    %v2755 = vmax.f32 %v2504, 0.0
    %v2756 = vmax.f32 %v2584, 0.0
    %v2757 = vmax.f32 %v2586, 0.0
    %v2758 = vmax.f32 %v2666, 0.0
    %v2759 = vmax.f32 %v2668, 0.0
    %v2760 = vmax.f32 %v2748, 0.0
    %v2761 = vmax.f32 %v2750, 0.0
    %v2762 = vpack.c.bf16 %v2754, %v2754
    %v2763 = vpack.c.bf16 %v2755, %v2755
    %v2764 = vpack.c.bf16 %v2756, %v2756
    %v2765 = vpack.c.bf16 %v2757, %v2757
    %v2766 = vpack.c.bf16 %v2758, %v2758
    %v2767 = vpack.c.bf16 %v2759, %v2759
    %v2768 = vpack.c.bf16 %v2760, %v2760
    %v2769 = vpack.c.bf16 %v2761, %v2761
    %v2770 = vld [vmem:[#allocation10] sm:$0xff]
    %v2771 = vld [vmem:[#allocation10 + $0x8] sm:$0xf]
    %v2772 = vld [vmem:[#allocation10 + $0xc] sm:$0xff]
    %v2773 = vld [vmem:[#allocation10 + $0x14] sm:$0xf]
    %v2774 = vld [vmem:[#allocation10 + $0x18] sm:$0xff]
    %v2775 = vld [vmem:[#allocation10 + $0x20] sm:$0xf]
    %v2776 = vld [vmem:[#allocation10 + $0x24] sm:$0xff]
    %v2777 = vld [vmem:[#allocation10 + $0x2c] sm:$0xf]
    %v2778 = vld [vmem:[#allocation10 + $0x30] sm:$0xff]
    %v2779 = vld [vmem:[#allocation10 + $0x38] sm:$0xf]
    %v2780 = vld [vmem:[#allocation10 + $0x3c] sm:$0xff]
    %v2781 = vld [vmem:[#allocation10 + $0x44] sm:$0xf]
    %v2782 = vld [vmem:[#allocation10 + $0x48] sm:$0xff]
    %v2783 = vld [vmem:[#allocation10 + $0x50] sm:$0xf]
    %v2784 = vld [vmem:[#allocation10 + $0x54] sm:$0xff]
    %v2785 = vld [vmem:[#allocation10 + $0x5c] sm:$0xf]
    %v2786 = vld [vmem:[#allocation10 + $0x60] sm:$0xff]
    %v2787 = vld [vmem:[#allocation10 + $0x68] sm:$0xf]
    %v2788 = vld [vmem:[#allocation10 + $0x6c] sm:$0xff]
    %v2789 = vld [vmem:[#allocation10 + $0x74] sm:$0xf]
    %v2790 = vld [vmem:[#allocation10 + $0x78] sm:$0xff]
    %v2791 = vld [vmem:[#allocation10 + $0x80] sm:$0xf]
    %v2792 = vld [vmem:[#allocation10 + $0x84] sm:$0xff]
    %v2793 = vld [vmem:[#allocation10 + $0x8c] sm:$0xf]
    %v2794 = vld [vmem:[#allocation10 + $0x90] sm:$0xff]
    %v2795 = vld [vmem:[#allocation10 + $0x98] sm:$0xf]
    %v2796 = vld [vmem:[#allocation10 + $0x9c] sm:$0xff]
    %v2797 = vld [vmem:[#allocation10 + $0xa4] sm:$0xf]
    %v2798 = vld [vmem:[#allocation10 + $0xa8] sm:$0xff]
    %v2799 = vld [vmem:[#allocation10 + $0xb0] sm:$0xf]
    %v2800 = vld [vmem:[#allocation10 + $0xb4] sm:$0xff]
    %v2801 = vld [vmem:[#allocation10 + $0xbc] sm:$0xf]
    %v2802 = vld [vmem:[#allocation10 + $0xc0] sm:$0xff]
    %v2803 = vld [vmem:[#allocation10 + $0xc8] sm:$0xf]
    %v2804 = vld [vmem:[#allocation10 + $0xcc] sm:$0xff]
    %v2805 = vld [vmem:[#allocation10 + $0xd4] sm:$0xf]
    %v2806 = vld [vmem:[#allocation10 + $0xd8] sm:$0xff]
    %v2807 = vld [vmem:[#allocation10 + $0xe0] sm:$0xf]
    %v2808 = vld [vmem:[#allocation10 + $0xe4] sm:$0xff]
    %v2809 = vld [vmem:[#allocation10 + $0xec] sm:$0xf]
    %v2810 = vld [vmem:[#allocation10 + $0xf0] sm:$0xff]
    %v2811 = vld [vmem:[#allocation10 + $0xf8] sm:$0xf]
    %v2812 = vld [vmem:[#allocation10 + $0xfc] sm:$0xff]
    %v2813 = vld [vmem:[#allocation10 + $0x104] sm:$0xf]
    %v2814 = vld [vmem:[#allocation10 + $0x108] sm:$0xff]
    %v2815 = vld [vmem:[#allocation10 + $0x110] sm:$0xf]
    %v2816 = vld [vmem:[#allocation10 + $0x114] sm:$0xff]
    %v2817 = vld [vmem:[#allocation10 + $0x11c] sm:$0xf]
    %v2818 = vld [vmem:[#allocation10 + $0x120] sm:$0xff]
    %v2819 = vld [vmem:[#allocation10 + $0x128] sm:$0xf]
    %v2820 = vld [vmem:[#allocation10 + $0x12c] sm:$0xff]
    %v2821 = vld [vmem:[#allocation10 + $0x134] sm:$0xf]
    %v2822 = vld [vmem:[#allocation10 + $0x138] sm:$0xff]
    %v2823 = vld [vmem:[#allocation10 + $0x140] sm:$0xf]
    %v2824 = vld [vmem:[#allocation10 + $0x144] sm:$0xff]
    %v2825 = vld [vmem:[#allocation10 + $0x14c] sm:$0xf]
    %v2826 = vld [vmem:[#allocation10 + $0x150] sm:$0xff]
    %v2827 = vld [vmem:[#allocation10 + $0x158] sm:$0xf]
    %v2828 = vld [vmem:[#allocation10 + $0x15c] sm:$0xff]
    %v2829 = vld [vmem:[#allocation10 + $0x164] sm:$0xf]
    %v2830 = vld [vmem:[#allocation10 + $0x168] sm:$0xff]
    %v2831 = vld [vmem:[#allocation10 + $0x170] sm:$0xf]
    %v2832 = vld [vmem:[#allocation10 + $0x174] sm:$0xff]
    %v2833 = vld [vmem:[#allocation10 + $0x17c] sm:$0xf]
    %v2834 = vld [vmem:[#allocation10 + $0x180] sm:$0xff]
    %v2835 = vld [vmem:[#allocation10 + $0x188] sm:$0xf]
    %v2836 = vld [vmem:[#allocation10 + $0x18c] sm:$0xff]
    %v2837 = vld [vmem:[#allocation10 + $0x194] sm:$0xf]
    %v2838 = vld [vmem:[#allocation10 + $0x198] sm:$0xff]
    %v2839 = vld [vmem:[#allocation10 + $0x1a0] sm:$0xf]
    %v2840 = vld [vmem:[#allocation10 + $0x1a4] sm:$0xff]
    %v2841 = vld [vmem:[#allocation10 + $0x1ac] sm:$0xf]
    %v2842 = vld [vmem:[#allocation10 + $0x1b0] sm:$0xff]
    %v2843 = vld [vmem:[#allocation10 + $0x1b8] sm:$0xf]
    %v2844 = vld [vmem:[#allocation10 + $0x1bc] sm:$0xff]
    %v2845 = vld [vmem:[#allocation10 + $0x1c4] sm:$0xf]
    %v2846 = vld [vmem:[#allocation10 + $0x1c8] sm:$0xff]
    %v2847 = vld [vmem:[#allocation10 + $0x1d0] sm:$0xf]
    %v2848 = vld [vmem:[#allocation10 + $0x1d4] sm:$0xff]
    %v2849 = vld [vmem:[#allocation10 + $0x1dc] sm:$0xf]
    %v2850 = vld [vmem:[#allocation10 + $0x1e0] sm:$0xff]
    %v2851 = vld [vmem:[#allocation10 + $0x1e8] sm:$0xf]
    %v2852 = vld [vmem:[#allocation10 + $0x1ec] sm:$0xff]
    %v2853 = vld [vmem:[#allocation10 + $0x1f4] sm:$0xf]
    %v2854 = vld [vmem:[#allocation10 + $0x1f8] sm:$0xff]
    %v2855 = vld [vmem:[#allocation10 + $0x200] sm:$0xf]
    %v2856 = vld [vmem:[#allocation10 + $0x204] sm:$0xff]
    %v2857 = vld [vmem:[#allocation10 + $0x20c] sm:$0xf]
    %v2858 = vld [vmem:[#allocation10 + $0x210] sm:$0xff]
    %v2859 = vld [vmem:[#allocation10 + $0x218] sm:$0xf]
    %v2860 = vld [vmem:[#allocation10 + $0x21c] sm:$0xff]
    %v2861 = vld [vmem:[#allocation10 + $0x224] sm:$0xf]
    %v2862 = vld [vmem:[#allocation10 + $0x228] sm:$0xff]
    %v2863 = vld [vmem:[#allocation10 + $0x230] sm:$0xf]
    %v2864 = vld [vmem:[#allocation10 + $0x234] sm:$0xff]
    %v2865 = vld [vmem:[#allocation10 + $0x23c] sm:$0xf]
    %v2866 = vld [vmem:[#allocation10 + $0x240] sm:$0xff]
    %v2867 = vld [vmem:[#allocation10 + $0x248] sm:$0xf]
    %v2868 = vld [vmem:[#allocation10 + $0x24c] sm:$0xff]
    %v2869 = vld [vmem:[#allocation10 + $0x254] sm:$0xf]
    %v2870 = vld [vmem:[#allocation10 + $0x258] sm:$0xff]
    %v2871 = vld [vmem:[#allocation10 + $0x260] sm:$0xf]
    %v2872 = vld [vmem:[#allocation10 + $0x264] sm:$0xff]
    %v2873 = vld [vmem:[#allocation10 + $0x26c] sm:$0xf]
    %v2874 = vld [vmem:[#allocation10 + $0x270] sm:$0xff]
    %v2875 = vld [vmem:[#allocation10 + $0x278] sm:$0xf]
    %v2876 = vld [vmem:[#allocation10 + $0x27c] sm:$0xff]
    %v2877 = vld [vmem:[#allocation10 + $0x284] sm:$0xf]
    %v2878 = vld [vmem:[#allocation10 + $0x288] sm:$0xff]
    %v2879 = vld [vmem:[#allocation10 + $0x290] sm:$0xf]
    %v2880 = vld [vmem:[#allocation10 + $0x294] sm:$0xff]
    %v2881 = vld [vmem:[#allocation10 + $0x29c] sm:$0xf]
    %v2882 = vld [vmem:[#allocation10 + $0x2a0] sm:$0xff]
    %v2883 = vld [vmem:[#allocation10 + $0x2a8] sm:$0xf]
    %v2884 = vld [vmem:[#allocation10 + $0x2ac] sm:$0xff]
    %v2885 = vld [vmem:[#allocation10 + $0x2b4] sm:$0xf]
    %v2886 = vld [vmem:[#allocation10 + $0x2b8] sm:$0xff]
    %v2887 = vld [vmem:[#allocation10 + $0x2c0] sm:$0xf]
    %v2888 = vld [vmem:[#allocation10 + $0x2c4] sm:$0xff]
    %v2889 = vld [vmem:[#allocation10 + $0x2cc] sm:$0xf]
    %v2890 = vld [vmem:[#allocation10 + $0x2d0] sm:$0xff]
    %v2891 = vld [vmem:[#allocation10 + $0x2d8] sm:$0xf]
    %v2892 = vld [vmem:[#allocation10 + $0x2dc] sm:$0xff]
    %v2893 = vld [vmem:[#allocation10 + $0x2e4] sm:$0xf]
    %v2894 = vld [vmem:[#allocation10 + $0x2e8] sm:$0xff]
    %v2895 = vld [vmem:[#allocation10 + $0x2f0] sm:$0xf]
    %v2896 = vld [vmem:[#allocation10 + $0x2f4] sm:$0xff]
    %v2897 = vld [vmem:[#allocation10 + $0x2fc] sm:$0xf]
    %v2898 = vld [vmem:[#allocation10 + $0x300] sm:$0xff]
    %v2899 = vld [vmem:[#allocation10 + $0x308] sm:$0xf]
    %v2900 = vld [vmem:[#allocation10 + $0x30c] sm:$0xff]
    %v2901 = vld [vmem:[#allocation10 + $0x314] sm:$0xf]
    %v2902 = vld [vmem:[#allocation10 + $0x318] sm:$0xff]
    %v2903 = vld [vmem:[#allocation10 + $0x320] sm:$0xf]
    %v2904 = vld [vmem:[#allocation10 + $0x324] sm:$0xff]
    %v2905 = vld [vmem:[#allocation10 + $0x32c] sm:$0xf]
    %v2906 = vld [vmem:[#allocation10 + $0x330] sm:$0xff]
    %v2907 = vld [vmem:[#allocation10 + $0x338] sm:$0xf]
    %v2908 = vld [vmem:[#allocation10 + $0x33c] sm:$0xff]
    %v2909 = vld [vmem:[#allocation10 + $0x344] sm:$0xf]
    %v2910 = vld [vmem:[#allocation10 + $0x348] sm:$0xff]
    %v2911 = vld [vmem:[#allocation10 + $0x350] sm:$0xf]
    %v2912 = vld [vmem:[#allocation10 + $0x354] sm:$0xff]
    %v2913 = vld [vmem:[#allocation10 + $0x35c] sm:$0xf]
    %v2914 = vld [vmem:[#allocation10 + $0x360] sm:$0xff]
    %v2915 = vld [vmem:[#allocation10 + $0x368] sm:$0xf]
    %v2916 = vld [vmem:[#allocation10 + $0x36c] sm:$0xff]
    %v2917 = vld [vmem:[#allocation10 + $0x374] sm:$0xf]
    %v2918 = vld [vmem:[#allocation10 + $0x378] sm:$0xff]
    %v2919 = vld [vmem:[#allocation10 + $0x380] sm:$0xf]
    %v2920 = vld [vmem:[#allocation10 + $0x384] sm:$0xff]
    %v2921 = vld [vmem:[#allocation10 + $0x38c] sm:$0xf]
    %v2922 = vld [vmem:[#allocation10 + $0x390] sm:$0xff]
    %v2923 = vld [vmem:[#allocation10 + $0x398] sm:$0xf]
    %v2924 = vld [vmem:[#allocation10 + $0x39c] sm:$0xff]
    %v2925 = vld [vmem:[#allocation10 + $0x3a4] sm:$0xf]
    %v2926 = vld [vmem:[#allocation10 + $0x3a8] sm:$0xff]
    %v2927 = vld [vmem:[#allocation10 + $0x3b0] sm:$0xf]
    %v2928 = vld [vmem:[#allocation10 + $0x3b4] sm:$0xff]
    %v2929 = vld [vmem:[#allocation10 + $0x3bc] sm:$0xf]
    %v2930 = vld [vmem:[#allocation10 + $0x3c0] sm:$0xff]
    %v2931 = vld [vmem:[#allocation10 + $0x3c8] sm:$0xf]
    %v2932 = vld [vmem:[#allocation10 + $0x3cc] sm:$0xff]
    %v2933 = vld [vmem:[#allocation10 + $0x3d4] sm:$0xf]
    %v2934 = vld [vmem:[#allocation10 + $0x3d8] sm:$0xff]
    %v2935 = vld [vmem:[#allocation10 + $0x3e0] sm:$0xf]
    %v2936 = vld [vmem:[#allocation10 + $0x3e4] sm:$0xff]
    %v2937 = vld [vmem:[#allocation10 + $0x3ec] sm:$0xf]
    %v2938 = vld [vmem:[#allocation10 + $0x3f0] sm:$0xff]
    %v2939 = vld [vmem:[#allocation10 + $0x3f8] sm:$0xf]
    %v2940 = vld [vmem:[#allocation10 + $0x3fc] sm:$0xff]
    %v2941 = vld [vmem:[#allocation10 + $0x404] sm:$0xf]
    %v2942 = vld [vmem:[#allocation10 + $0x408] sm:$0xff]
    %v2943 = vld [vmem:[#allocation10 + $0x410] sm:$0xf]
    %v2944 = vld [vmem:[#allocation10 + $0x414] sm:$0xff]
    %v2945 = vld [vmem:[#allocation10 + $0x41c] sm:$0xf]
    %v2946 = vld [vmem:[#allocation10 + $0x420] sm:$0xff]
    %v2947 = vld [vmem:[#allocation10 + $0x428] sm:$0xf]
    %v2948 = vld [vmem:[#allocation10 + $0x42c] sm:$0xff]
    %v2949 = vld [vmem:[#allocation10 + $0x434] sm:$0xf]
    %v2950 = vld [vmem:[#allocation10 + $0x438] sm:$0xff]
    %v2951 = vld [vmem:[#allocation10 + $0x440] sm:$0xf]
    %v2952 = vld [vmem:[#allocation10 + $0x444] sm:$0xff]
    %v2953 = vld [vmem:[#allocation10 + $0x44c] sm:$0xf]
    %v2954 = vld [vmem:[#allocation10 + $0x450] sm:$0xff]
    %v2955 = vld [vmem:[#allocation10 + $0x458] sm:$0xf]
    %v2956 = vld [vmem:[#allocation10 + $0x45c] sm:$0xff]
    %v2957 = vld [vmem:[#allocation10 + $0x464] sm:$0xf]
    %v2958 = vld [vmem:[#allocation10 + $0x468] sm:$0xff]
    %v2959 = vld [vmem:[#allocation10 + $0x470] sm:$0xf]
    %v2960 = vld [vmem:[#allocation10 + $0x474] sm:$0xff]
    %v2961 = vld [vmem:[#allocation10 + $0x47c] sm:$0xf]
    %v2962 = vld [vmem:[#allocation10 + $0x480] sm:$0xff]
    %v2963 = vld [vmem:[#allocation10 + $0x488] sm:$0xf]
    %v2964 = vld [vmem:[#allocation10 + $0x48c] sm:$0xff]
    %v2965 = vld [vmem:[#allocation10 + $0x494] sm:$0xf]
    %v2966 = vld [vmem:[#allocation10 + $0x498] sm:$0xff]
    %v2967 = vld [vmem:[#allocation10 + $0x4a0] sm:$0xf]
    %v2968 = vld [vmem:[#allocation10 + $0x4a4] sm:$0xff]
    %v2969 = vld [vmem:[#allocation10 + $0x4ac] sm:$0xf]
    %v2970 = vld [vmem:[#allocation10 + $0x4b0] sm:$0xff]
    %v2971 = vld [vmem:[#allocation10 + $0x4b8] sm:$0xf]
    %v2972 = vld [vmem:[#allocation10 + $0x4bc] sm:$0xff]
    %v2973 = vld [vmem:[#allocation10 + $0x4c4] sm:$0xf]
    %v2974 = vld [vmem:[#allocation10 + $0x4c8] sm:$0xff]
    %v2975 = vld [vmem:[#allocation10 + $0x4d0] sm:$0xf]
    %v2976 = vld [vmem:[#allocation10 + $0x4d4] sm:$0xff]
    %v2977 = vld [vmem:[#allocation10 + $0x4dc] sm:$0xf]
    %v2978 = vld [vmem:[#allocation10 + $0x4e0] sm:$0xff]
    %v2979 = vld [vmem:[#allocation10 + $0x4e8] sm:$0xf]
    %v2980 = vld [vmem:[#allocation10 + $0x4ec] sm:$0xff]
    %v2981 = vld [vmem:[#allocation10 + $0x4f4] sm:$0xf]
    %v2982 = vld [vmem:[#allocation10 + $0x4f8] sm:$0xff]
    %v2983 = vld [vmem:[#allocation10 + $0x500] sm:$0xf]
    %v2984 = vld [vmem:[#allocation10 + $0x504] sm:$0xff]
    %v2985 = vld [vmem:[#allocation10 + $0x50c] sm:$0xf]
    %v2986 = vld [vmem:[#allocation10 + $0x510] sm:$0xff]
    %v2987 = vld [vmem:[#allocation10 + $0x518] sm:$0xf]
    %v2988 = vld [vmem:[#allocation10 + $0x51c] sm:$0xff]
    %v2989 = vld [vmem:[#allocation10 + $0x524] sm:$0xf]
    %v2990 = vld [vmem:[#allocation10 + $0x528] sm:$0xff]
    %v2991 = vld [vmem:[#allocation10 + $0x530] sm:$0xf]
    %v2992 = vld [vmem:[#allocation10 + $0x534] sm:$0xff]
    %v2993 = vld [vmem:[#allocation10 + $0x53c] sm:$0xf]
    %v2994 = vld [vmem:[#allocation10 + $0x540] sm:$0xff]
    %v2995 = vld [vmem:[#allocation10 + $0x548] sm:$0xf]
    %v2996 = vld [vmem:[#allocation10 + $0x54c] sm:$0xff]
    %v2997 = vld [vmem:[#allocation10 + $0x554] sm:$0xf]
    %v2998 = vld [vmem:[#allocation10 + $0x558] sm:$0xff]
    %v2999 = vld [vmem:[#allocation10 + $0x560] sm:$0xf]
    %v3000 = vld [vmem:[#allocation10 + $0x564] sm:$0xff]
    %v3001 = vld [vmem:[#allocation10 + $0x56c] sm:$0xf]
    %v3002 = vld [vmem:[#allocation10 + $0x570] sm:$0xff]
    %v3003 = vld [vmem:[#allocation10 + $0x578] sm:$0xf]
    %v3004 = vld [vmem:[#allocation10 + $0x57c] sm:$0xff]
    %v3005 = vld [vmem:[#allocation10 + $0x584] sm:$0xf]
    %v3006 = vld [vmem:[#allocation10 + $0x588] sm:$0xff]
    %v3007 = vld [vmem:[#allocation10 + $0x590] sm:$0xf]
    %v3008 = vld [vmem:[#allocation10 + $0x594] sm:$0xff]
    %v3009 = vld [vmem:[#allocation10 + $0x59c] sm:$0xf]
    %v3010 = vld [vmem:[#allocation10 + $0x5a0] sm:$0xff]
    %v3011 = vld [vmem:[#allocation10 + $0x5a8] sm:$0xf]
    %v3012 = vld [vmem:[#allocation10 + $0x5ac] sm:$0xff]
    %v3013 = vld [vmem:[#allocation10 + $0x5b4] sm:$0xf]
    %v3014 = vld [vmem:[#allocation10 + $0x5b8] sm:$0xff]
    %v3015 = vld [vmem:[#allocation10 + $0x5c0] sm:$0xf]
    %v3016 = vld [vmem:[#allocation10 + $0x5c4] sm:$0xff]
    %v3017 = vld [vmem:[#allocation10 + $0x5cc] sm:$0xf]
    %v3018 = vld [vmem:[#allocation10 + $0x5d0] sm:$0xff]
    %v3019 = vld [vmem:[#allocation10 + $0x5d8] sm:$0xf]
    %v3020 = vld [vmem:[#allocation10 + $0x5dc] sm:$0xff]
    %v3021 = vld [vmem:[#allocation10 + $0x5e4] sm:$0xf]
    %v3022 = vld [vmem:[#allocation10 + $0x5e8] sm:$0xff]
    %v3023 = vld [vmem:[#allocation10 + $0x5f0] sm:$0xf]
    %v3024 = vld [vmem:[#allocation10 + $0x5f4] sm:$0xff]
    %v3025 = vld [vmem:[#allocation10 + $0x5fc] sm:$0xf]
    %v3026 = vld [vmem:[#allocation12] sm:$0x7]
    %v3028 = vlaneseq
    %v3029 = vshrl.u32 %v3028, 7
    %v3030 = vsub.s32 0, %v3029
    %v3031 = vrot.slane %v3026, %v3030
    %v3032 = vlaneseq
    %v3033 = vshrl.u32 %v3032, 7
    %v3034 = vsub.s32 1, %v3033
    %v3035 = vrot.slane %v3026, %v3034
    %v3036 = vlaneseq
    %v3037 = vshrl.u32 %v3036, 7
    %v3038 = vsub.s32 2, %v3037
    %v3039 = vrot.slane %v3026, %v3038
    %v3299 = vunpack.c.l.b16 %v2770
    %v3300 = vunpack.c.h.b16 %v2770
    %v3301 = vunpack.c.l.b16 %v2771
    %v3302 = vunpack.c.l.b16 %v2772
    %v3303 = vunpack.c.h.b16 %v2772
    %v3304 = vunpack.c.l.b16 %v2773
    %v3305 = vunpack.c.l.b16 %v2774
    %v3306 = vunpack.c.h.b16 %v2774
    %v3307 = vunpack.c.l.b16 %v2775
    %v3308 = vunpack.c.l.b16 %v2776
    %v3309 = vunpack.c.h.b16 %v2776
    %v3310 = vunpack.c.l.b16 %v2777
    %v3311 = vunpack.c.l.b16 %v2778
    %v3312 = vunpack.c.h.b16 %v2778
    %v3313 = vunpack.c.l.b16 %v2779
    %v3314 = vunpack.c.l.b16 %v2780
    %v3315 = vunpack.c.h.b16 %v2780
    %v3316 = vunpack.c.l.b16 %v2781
    %v3317 = vunpack.c.l.b16 %v2782
    %v3318 = vunpack.c.h.b16 %v2782
    %v3319 = vunpack.c.l.b16 %v2783
    %v3320 = vunpack.c.l.b16 %v2784
    %v3321 = vunpack.c.h.b16 %v2784
    %v3322 = vunpack.c.l.b16 %v2785
    %v3323 = vunpack.c.l.b16 %v2786
    %v3324 = vunpack.c.h.b16 %v2786
    %v3325 = vunpack.c.l.b16 %v2787
    %v3326 = vunpack.c.l.b16 %v2788
    %v3327 = vunpack.c.h.b16 %v2788
    %v3328 = vunpack.c.l.b16 %v2789
    %v3329 = vunpack.c.l.b16 %v2790
    %v3330 = vunpack.c.h.b16 %v2790
    %v3331 = vunpack.c.l.b16 %v2791
    %v3332 = vunpack.c.l.b16 %v2792
    %v3333 = vunpack.c.h.b16 %v2792
    %v3334 = vunpack.c.l.b16 %v2793
    %v3335 = vunpack.c.l.b16 %v2794
    %v3336 = vunpack.c.h.b16 %v2794
    %v3337 = vunpack.c.l.b16 %v2795
    %v3338 = vunpack.c.l.b16 %v2796
    %v3339 = vunpack.c.h.b16 %v2796
    %v3340 = vunpack.c.l.b16 %v2797
    %v3341 = vunpack.c.l.b16 %v2798
    %v3342 = vunpack.c.h.b16 %v2798
    %v3343 = vunpack.c.l.b16 %v2799
    %v3344 = vunpack.c.l.b16 %v2800
    %v3345 = vunpack.c.h.b16 %v2800
    %v3346 = vunpack.c.l.b16 %v2801
    %v3347 = vunpack.c.l.b16 %v2802
    %v3348 = vunpack.c.h.b16 %v2802
    %v3349 = vunpack.c.l.b16 %v2803
    %v3350 = vunpack.c.l.b16 %v2804
    %v3351 = vunpack.c.h.b16 %v2804
    %v3352 = vunpack.c.l.b16 %v2805
    %v3353 = vunpack.c.l.b16 %v2806
    %v3354 = vunpack.c.h.b16 %v2806
    %v3355 = vunpack.c.l.b16 %v2807
    %v3356 = vunpack.c.l.b16 %v2808
    %v3357 = vunpack.c.h.b16 %v2808
    %v3358 = vunpack.c.l.b16 %v2809
    %v3359 = vunpack.c.l.b16 %v2810
    %v3360 = vunpack.c.h.b16 %v2810
    %v3361 = vunpack.c.l.b16 %v2811
    %v3362 = vunpack.c.l.b16 %v2812
    %v3363 = vunpack.c.h.b16 %v2812
    %v3364 = vunpack.c.l.b16 %v2813
    %v3365 = vunpack.c.l.b16 %v2814
    %v3366 = vunpack.c.h.b16 %v2814
    %v3367 = vunpack.c.l.b16 %v2815
    %v3368 = vunpack.c.l.b16 %v2816
    %v3369 = vunpack.c.h.b16 %v2816
    %v3370 = vunpack.c.l.b16 %v2817
    %v3371 = vunpack.c.l.b16 %v2818
    %v3372 = vunpack.c.h.b16 %v2818
    %v3373 = vunpack.c.l.b16 %v2819
    %v3374 = vunpack.c.l.b16 %v2820
    %v3375 = vunpack.c.h.b16 %v2820
    %v3376 = vunpack.c.l.b16 %v2821
    %v3377 = vunpack.c.l.b16 %v2822
    %v3378 = vunpack.c.h.b16 %v2822
    %v3379 = vunpack.c.l.b16 %v2823
    %v3380 = vunpack.c.l.b16 %v2824
    %v3381 = vunpack.c.h.b16 %v2824
    %v3382 = vunpack.c.l.b16 %v2825
    %v3383 = vunpack.c.l.b16 %v2826
    %v3384 = vunpack.c.h.b16 %v2826
    %v3385 = vunpack.c.l.b16 %v2827
    %v3386 = vunpack.c.l.b16 %v2828
    %v3387 = vunpack.c.h.b16 %v2828
    %v3388 = vunpack.c.l.b16 %v2829
    %v3389 = vunpack.c.l.b16 %v2830
    %v3390 = vunpack.c.h.b16 %v2830
    %v3391 = vunpack.c.l.b16 %v2831
    %v3392 = vunpack.c.l.b16 %v2832
    %v3393 = vunpack.c.h.b16 %v2832
    %v3394 = vunpack.c.l.b16 %v2833
    %v3395 = vunpack.c.l.b16 %v2834
    %v3396 = vunpack.c.h.b16 %v2834
    %v3397 = vunpack.c.l.b16 %v2835
    %v3398 = vunpack.c.l.b16 %v2836
    %v3399 = vunpack.c.h.b16 %v2836
    %v3400 = vunpack.c.l.b16 %v2837
    %v3401 = vunpack.c.l.b16 %v2838
    %v3402 = vunpack.c.h.b16 %v2838
    %v3403 = vunpack.c.l.b16 %v2839
    %v3404 = vunpack.c.l.b16 %v2840
    %v3405 = vunpack.c.h.b16 %v2840
    %v3406 = vunpack.c.l.b16 %v2841
    %v3407 = vunpack.c.l.b16 %v2842
    %v3408 = vunpack.c.h.b16 %v2842
    %v3409 = vunpack.c.l.b16 %v2843
    %v3410 = vunpack.c.l.b16 %v2844
    %v3411 = vunpack.c.h.b16 %v2844
    %v3412 = vunpack.c.l.b16 %v2845
    %v3413 = vunpack.c.l.b16 %v2846
    %v3414 = vunpack.c.h.b16 %v2846
    %v3415 = vunpack.c.l.b16 %v2847
    %v3416 = vunpack.c.l.b16 %v2848
    %v3417 = vunpack.c.h.b16 %v2848
    %v3418 = vunpack.c.l.b16 %v2849
    %v3419 = vunpack.c.l.b16 %v2850
    %v3420 = vunpack.c.h.b16 %v2850
    %v3421 = vunpack.c.l.b16 %v2851
    %v3422 = vunpack.c.l.b16 %v2852
    %v3423 = vunpack.c.h.b16 %v2852
    %v3424 = vunpack.c.l.b16 %v2853
    %v3425 = vunpack.c.l.b16 %v2854
    %v3426 = vunpack.c.h.b16 %v2854
    %v3427 = vunpack.c.l.b16 %v2855
    %v3428 = vunpack.c.l.b16 %v2856
    %v3429 = vunpack.c.h.b16 %v2856
    %v3430 = vunpack.c.l.b16 %v2857
    %v3431 = vunpack.c.l.b16 %v2858
    %v3432 = vunpack.c.h.b16 %v2858
    %v3433 = vunpack.c.l.b16 %v2859
    %v3434 = vunpack.c.l.b16 %v2860
    %v3435 = vunpack.c.h.b16 %v2860
    %v3436 = vunpack.c.l.b16 %v2861
    %v3437 = vunpack.c.l.b16 %v2862
    %v3438 = vunpack.c.h.b16 %v2862
    %v3439 = vunpack.c.l.b16 %v2863
    %v3440 = vunpack.c.l.b16 %v2864
    %v3441 = vunpack.c.h.b16 %v2864
    %v3442 = vunpack.c.l.b16 %v2865
    %v3443 = vunpack.c.l.b16 %v2866
    %v3444 = vunpack.c.h.b16 %v2866
    %v3445 = vunpack.c.l.b16 %v2867
    %v3446 = vunpack.c.l.b16 %v2868
    %v3447 = vunpack.c.h.b16 %v2868
    %v3448 = vunpack.c.l.b16 %v2869
    %v3449 = vunpack.c.l.b16 %v2870
    %v3450 = vunpack.c.h.b16 %v2870
    %v3451 = vunpack.c.l.b16 %v2871
    %v3452 = vunpack.c.l.b16 %v2872
    %v3453 = vunpack.c.h.b16 %v2872
    %v3454 = vunpack.c.l.b16 %v2873
    %v3455 = vunpack.c.l.b16 %v2874
    %v3456 = vunpack.c.h.b16 %v2874
    %v3457 = vunpack.c.l.b16 %v2875
    %v3458 = vunpack.c.l.b16 %v2876
    %v3459 = vunpack.c.h.b16 %v2876
    %v3460 = vunpack.c.l.b16 %v2877
    %v3461 = vunpack.c.l.b16 %v2878
    %v3462 = vunpack.c.h.b16 %v2878
    %v3463 = vunpack.c.l.b16 %v2879
    %v3464 = vunpack.c.l.b16 %v2880
    %v3465 = vunpack.c.h.b16 %v2880
    %v3466 = vunpack.c.l.b16 %v2881
    %v3467 = vunpack.c.l.b16 %v2882
    %v3468 = vunpack.c.h.b16 %v2882
    %v3469 = vunpack.c.l.b16 %v2883
    %v3470 = vunpack.c.l.b16 %v2884
    %v3471 = vunpack.c.h.b16 %v2884
    %v3472 = vunpack.c.l.b16 %v2885
    %v3473 = vunpack.c.l.b16 %v2886
    %v3474 = vunpack.c.h.b16 %v2886
    %v3475 = vunpack.c.l.b16 %v2887
    %v3476 = vunpack.c.l.b16 %v2888
    %v3477 = vunpack.c.h.b16 %v2888
    %v3478 = vunpack.c.l.b16 %v2889
    %v3479 = vunpack.c.l.b16 %v2890
    %v3480 = vunpack.c.h.b16 %v2890
    %v3481 = vunpack.c.l.b16 %v2891
    %v3482 = vunpack.c.l.b16 %v2892
    %v3483 = vunpack.c.h.b16 %v2892
    %v3484 = vunpack.c.l.b16 %v2893
    %v3485 = vunpack.c.l.b16 %v2894
    %v3486 = vunpack.c.h.b16 %v2894
    %v3487 = vunpack.c.l.b16 %v2895
    %v3488 = vunpack.c.l.b16 %v2896
    %v3489 = vunpack.c.h.b16 %v2896
    %v3490 = vunpack.c.l.b16 %v2897
    %v3491 = vunpack.c.l.b16 %v2898
    %v3492 = vunpack.c.h.b16 %v2898
    %v3493 = vunpack.c.l.b16 %v2899
    %v3494 = vunpack.c.l.b16 %v2900
    %v3495 = vunpack.c.h.b16 %v2900
    %v3496 = vunpack.c.l.b16 %v2901
    %v3497 = vunpack.c.l.b16 %v2902
    %v3498 = vunpack.c.h.b16 %v2902
    %v3499 = vunpack.c.l.b16 %v2903
    %v3500 = vunpack.c.l.b16 %v2904
    %v3501 = vunpack.c.h.b16 %v2904
    %v3502 = vunpack.c.l.b16 %v2905
    %v3503 = vunpack.c.l.b16 %v2906
    %v3504 = vunpack.c.h.b16 %v2906
    %v3505 = vunpack.c.l.b16 %v2907
    %v3506 = vunpack.c.l.b16 %v2908
    %v3507 = vunpack.c.h.b16 %v2908
    %v3508 = vunpack.c.l.b16 %v2909
    %v3509 = vunpack.c.l.b16 %v2910
    %v3510 = vunpack.c.h.b16 %v2910
    %v3511 = vunpack.c.l.b16 %v2911
    %v3512 = vunpack.c.l.b16 %v2912
    %v3513 = vunpack.c.h.b16 %v2912
    %v3514 = vunpack.c.l.b16 %v2913
    %v3515 = vunpack.c.l.b16 %v2914
    %v3516 = vunpack.c.h.b16 %v2914
    %v3517 = vunpack.c.l.b16 %v2915
    %v3518 = vunpack.c.l.b16 %v2916
    %v3519 = vunpack.c.h.b16 %v2916
    %v3520 = vunpack.c.l.b16 %v2917
    %v3521 = vunpack.c.l.b16 %v2918
    %v3522 = vunpack.c.h.b16 %v2918
    %v3523 = vunpack.c.l.b16 %v2919
    %v3524 = vunpack.c.l.b16 %v2920
    %v3525 = vunpack.c.h.b16 %v2920
    %v3526 = vunpack.c.l.b16 %v2921
    %v3527 = vunpack.c.l.b16 %v2922
    %v3528 = vunpack.c.h.b16 %v2922
    %v3529 = vunpack.c.l.b16 %v2923
    %v3530 = vunpack.c.l.b16 %v2924
    %v3531 = vunpack.c.h.b16 %v2924
    %v3532 = vunpack.c.l.b16 %v2925
    %v3533 = vunpack.c.l.b16 %v2926
    %v3534 = vunpack.c.h.b16 %v2926
    %v3535 = vunpack.c.l.b16 %v2927
    %v3536 = vunpack.c.l.b16 %v2928
    %v3537 = vunpack.c.h.b16 %v2928
    %v3538 = vunpack.c.l.b16 %v2929
    %v3539 = vunpack.c.l.b16 %v2930
    %v3540 = vunpack.c.h.b16 %v2930
    %v3541 = vunpack.c.l.b16 %v2931
    %v3542 = vunpack.c.l.b16 %v2932
    %v3543 = vunpack.c.h.b16 %v2932
    %v3544 = vunpack.c.l.b16 %v2933
    %v3545 = vunpack.c.l.b16 %v2934
    %v3546 = vunpack.c.h.b16 %v2934
    %v3547 = vunpack.c.l.b16 %v2935
    %v3548 = vunpack.c.l.b16 %v2936
    %v3549 = vunpack.c.h.b16 %v2936
    %v3550 = vunpack.c.l.b16 %v2937
    %v3551 = vunpack.c.l.b16 %v2938
    %v3552 = vunpack.c.h.b16 %v2938
    %v3553 = vunpack.c.l.b16 %v2939
    %v3554 = vunpack.c.l.b16 %v2940
    %v3555 = vunpack.c.h.b16 %v2940
    %v3556 = vunpack.c.l.b16 %v2941
    %v3557 = vunpack.c.l.b16 %v2942
    %v3558 = vunpack.c.h.b16 %v2942
    %v3559 = vunpack.c.l.b16 %v2943
    %v3560 = vunpack.c.l.b16 %v2944
    %v3561 = vunpack.c.h.b16 %v2944
    %v3562 = vunpack.c.l.b16 %v2945
    %v3563 = vunpack.c.l.b16 %v2946
    %v3564 = vunpack.c.h.b16 %v2946
    %v3565 = vunpack.c.l.b16 %v2947
    %v3566 = vunpack.c.l.b16 %v2948
    %v3567 = vunpack.c.h.b16 %v2948
    %v3568 = vunpack.c.l.b16 %v2949
    %v3569 = vunpack.c.l.b16 %v2950
    %v3570 = vunpack.c.h.b16 %v2950
    %v3571 = vunpack.c.l.b16 %v2951
    %v3572 = vunpack.c.l.b16 %v2952
    %v3573 = vunpack.c.h.b16 %v2952
    %v3574 = vunpack.c.l.b16 %v2953
    %v3575 = vunpack.c.l.b16 %v2954
    %v3576 = vunpack.c.h.b16 %v2954
    %v3577 = vunpack.c.l.b16 %v2955
    %v3578 = vunpack.c.l.b16 %v2956
    %v3579 = vunpack.c.h.b16 %v2956
    %v3580 = vunpack.c.l.b16 %v2957
    %v3581 = vunpack.c.l.b16 %v2958
    %v3582 = vunpack.c.h.b16 %v2958
    %v3583 = vunpack.c.l.b16 %v2959
    %v3584 = vunpack.c.l.b16 %v2960
    %v3585 = vunpack.c.h.b16 %v2960
    %v3586 = vunpack.c.l.b16 %v2961
    %v3587 = vunpack.c.l.b16 %v2962
    %v3588 = vunpack.c.h.b16 %v2962
    %v3589 = vunpack.c.l.b16 %v2963
    %v3590 = vunpack.c.l.b16 %v2964
    %v3591 = vunpack.c.h.b16 %v2964
    %v3592 = vunpack.c.l.b16 %v2965
    %v3593 = vunpack.c.l.b16 %v2966
    %v3594 = vunpack.c.h.b16 %v2966
    %v3595 = vunpack.c.l.b16 %v2967
    %v3596 = vunpack.c.l.b16 %v2968
    %v3597 = vunpack.c.h.b16 %v2968
    %v3598 = vunpack.c.l.b16 %v2969
    %v3599 = vunpack.c.l.b16 %v2970
    %v3600 = vunpack.c.h.b16 %v2970
    %v3601 = vunpack.c.l.b16 %v2971
    %v3602 = vunpack.c.l.b16 %v2972
    %v3603 = vunpack.c.h.b16 %v2972
    %v3604 = vunpack.c.l.b16 %v2973
    %v3605 = vunpack.c.l.b16 %v2974
    %v3606 = vunpack.c.h.b16 %v2974
    %v3607 = vunpack.c.l.b16 %v2975
    %v3608 = vunpack.c.l.b16 %v2976
    %v3609 = vunpack.c.h.b16 %v2976
    %v3610 = vunpack.c.l.b16 %v2977
    %v3611 = vunpack.c.l.b16 %v2978
    %v3612 = vunpack.c.h.b16 %v2978
    %v3613 = vunpack.c.l.b16 %v2979
    %v3614 = vunpack.c.l.b16 %v2980
    %v3615 = vunpack.c.h.b16 %v2980
    %v3616 = vunpack.c.l.b16 %v2981
    %v3617 = vunpack.c.l.b16 %v2982
    %v3618 = vunpack.c.h.b16 %v2982
    %v3619 = vunpack.c.l.b16 %v2983
    %v3620 = vunpack.c.l.b16 %v2984
    %v3621 = vunpack.c.h.b16 %v2984
    %v3622 = vunpack.c.l.b16 %v2985
    %v3623 = vunpack.c.l.b16 %v2986
    %v3624 = vunpack.c.h.b16 %v2986
    %v3625 = vunpack.c.l.b16 %v2987
    %v3626 = vunpack.c.l.b16 %v2988
    %v3627 = vunpack.c.h.b16 %v2988
    %v3628 = vunpack.c.l.b16 %v2989
    %v3629 = vunpack.c.l.b16 %v2990
    %v3630 = vunpack.c.h.b16 %v2990
    %v3631 = vunpack.c.l.b16 %v2991
    %v3632 = vunpack.c.l.b16 %v2992
    %v3633 = vunpack.c.h.b16 %v2992
    %v3634 = vunpack.c.l.b16 %v2993
    %v3635 = vunpack.c.l.b16 %v2994
    %v3636 = vunpack.c.h.b16 %v2994
    %v3637 = vunpack.c.l.b16 %v2995
    %v3638 = vunpack.c.l.b16 %v2996
    %v3639 = vunpack.c.h.b16 %v2996
    %v3640 = vunpack.c.l.b16 %v2997
    %v3641 = vunpack.c.l.b16 %v2998
    %v3642 = vunpack.c.h.b16 %v2998
    %v3643 = vunpack.c.l.b16 %v2999
    %v3644 = vunpack.c.l.b16 %v3000
    %v3645 = vunpack.c.h.b16 %v3000
    %v3646 = vunpack.c.l.b16 %v3001
    %v3647 = vunpack.c.l.b16 %v3002
    %v3648 = vunpack.c.h.b16 %v3002
    %v3649 = vunpack.c.l.b16 %v3003
    %v3650 = vunpack.c.l.b16 %v3004
    %v3651 = vunpack.c.h.b16 %v3004
    %v3652 = vunpack.c.l.b16 %v3005
    %v3653 = vunpack.c.l.b16 %v3006
    %v3654 = vunpack.c.h.b16 %v3006
    %v3655 = vunpack.c.l.b16 %v3007
    %v3656 = vunpack.c.l.b16 %v3008
    %v3657 = vunpack.c.h.b16 %v3008
    %v3658 = vunpack.c.l.b16 %v3009
    %v3659 = vunpack.c.l.b16 %v3010
    %v3660 = vunpack.c.h.b16 %v3010
    %v3661 = vunpack.c.l.b16 %v3011
    %v3662 = vunpack.c.l.b16 %v3012
    %v3663 = vunpack.c.h.b16 %v3012
    %v3664 = vunpack.c.l.b16 %v3013
    %v3665 = vunpack.c.l.b16 %v3014
    %v3666 = vunpack.c.h.b16 %v3014
    %v3667 = vunpack.c.l.b16 %v3015
    %v3668 = vunpack.c.l.b16 %v3016
    %v3669 = vunpack.c.h.b16 %v3016
    %v3670 = vunpack.c.l.b16 %v3017
    %v3671 = vunpack.c.l.b16 %v3018
    %v3672 = vunpack.c.h.b16 %v3018
    %v3673 = vunpack.c.l.b16 %v3019
    %v3674 = vunpack.c.l.b16 %v3020
    %v3675 = vunpack.c.h.b16 %v3020
    %v3676 = vunpack.c.l.b16 %v3021
    %v3677 = vunpack.c.l.b16 %v3022
    %v3678 = vunpack.c.h.b16 %v3022
    %v3679 = vunpack.c.l.b16 %v3023
    %v3680 = vunpack.c.l.b16 %v3024
    %v3681 = vunpack.c.h.b16 %v3024
    %v3682 = vunpack.c.l.b16 %v3025
    %v3683 = vpack.c.b16 %v3302, %v3299
    %v3684 = vpack.c.b16 %v3303, %v3300
    %v3685 = vpack.c.b16 %v3304, %v3301
    %v3686 = vpack.c.b16 %v3308, %v3305
    %v3687 = vpack.c.b16 %v3309, %v3306
    %v3688 = vpack.c.b16 %v3310, %v3307
    %v3689 = vpack.c.b16 %v3314, %v3311
    %v3690 = vpack.c.b16 %v3315, %v3312
    %v3691 = vpack.c.b16 %v3316, %v3313
    %v3692 = vpack.c.b16 %v3320, %v3317
    %v3693 = vpack.c.b16 %v3321, %v3318
    %v3694 = vpack.c.b16 %v3322, %v3319
    %v3695 = vpack.c.b16 %v3326, %v3323
    %v3696 = vpack.c.b16 %v3327, %v3324
    %v3697 = vpack.c.b16 %v3328, %v3325
    %v3698 = vpack.c.b16 %v3332, %v3329
    %v3699 = vpack.c.b16 %v3333, %v3330
    %v3700 = vpack.c.b16 %v3334, %v3331
    %v3701 = vpack.c.b16 %v3338, %v3335
    %v3702 = vpack.c.b16 %v3339, %v3336
    %v3703 = vpack.c.b16 %v3340, %v3337
    %v3704 = vpack.c.b16 %v3344, %v3341
    %v3705 = vpack.c.b16 %v3345, %v3342
    %v3706 = vpack.c.b16 %v3346, %v3343
    %v3707 = vpack.c.b16 %v3350, %v3347
    %v3708 = vpack.c.b16 %v3351, %v3348
    %v3709 = vpack.c.b16 %v3352, %v3349
    %v3710 = vpack.c.b16 %v3356, %v3353
    %v3711 = vpack.c.b16 %v3357, %v3354
    %v3712 = vpack.c.b16 %v3358, %v3355
    %v3713 = vpack.c.b16 %v3362, %v3359
    %v3714 = vpack.c.b16 %v3363, %v3360
    %v3715 = vpack.c.b16 %v3364, %v3361
    %v3716 = vpack.c.b16 %v3368, %v3365
    %v3717 = vpack.c.b16 %v3369, %v3366
    %v3718 = vpack.c.b16 %v3370, %v3367
    %v3719 = vpack.c.b16 %v3374, %v3371
    %v3720 = vpack.c.b16 %v3375, %v3372
    %v3721 = vpack.c.b16 %v3376, %v3373
    %v3722 = vpack.c.b16 %v3380, %v3377
    %v3723 = vpack.c.b16 %v3381, %v3378
    %v3724 = vpack.c.b16 %v3382, %v3379
    %v3725 = vpack.c.b16 %v3386, %v3383
    %v3726 = vpack.c.b16 %v3387, %v3384
    %v3727 = vpack.c.b16 %v3388, %v3385
    %v3728 = vpack.c.b16 %v3392, %v3389
    %v3729 = vpack.c.b16 %v3393, %v3390
    %v3730 = vpack.c.b16 %v3394, %v3391
    %v3731 = vpack.c.b16 %v3398, %v3395
    %v3732 = vpack.c.b16 %v3399, %v3396
    %v3733 = vpack.c.b16 %v3400, %v3397
    %v3734 = vpack.c.b16 %v3404, %v3401
    %v3735 = vpack.c.b16 %v3405, %v3402
    %v3736 = vpack.c.b16 %v3406, %v3403
    %v3737 = vpack.c.b16 %v3410, %v3407
    %v3738 = vpack.c.b16 %v3411, %v3408
    %v3739 = vpack.c.b16 %v3412, %v3409
    %v3740 = vpack.c.b16 %v3416, %v3413
    %v3741 = vpack.c.b16 %v3417, %v3414
    %v3742 = vpack.c.b16 %v3418, %v3415
    %v3743 = vpack.c.b16 %v3422, %v3419
    %v3744 = vpack.c.b16 %v3423, %v3420
    %v3745 = vpack.c.b16 %v3424, %v3421
    %v3746 = vpack.c.b16 %v3428, %v3425
    %v3747 = vpack.c.b16 %v3429, %v3426
    %v3748 = vpack.c.b16 %v3430, %v3427
    %v3749 = vpack.c.b16 %v3434, %v3431
    %v3750 = vpack.c.b16 %v3435, %v3432
    %v3751 = vpack.c.b16 %v3436, %v3433
    %v3752 = vpack.c.b16 %v3440, %v3437
    %v3753 = vpack.c.b16 %v3441, %v3438
    %v3754 = vpack.c.b16 %v3442, %v3439
    %v3755 = vpack.c.b16 %v3446, %v3443
    %v3756 = vpack.c.b16 %v3447, %v3444
    %v3757 = vpack.c.b16 %v3448, %v3445
    %v3758 = vpack.c.b16 %v3452, %v3449
    %v3759 = vpack.c.b16 %v3453, %v3450
    %v3760 = vpack.c.b16 %v3454, %v3451
    %v3761 = vpack.c.b16 %v3458, %v3455
    %v3762 = vpack.c.b16 %v3459, %v3456
    %v3763 = vpack.c.b16 %v3460, %v3457
    %v3764 = vpack.c.b16 %v3464, %v3461
    %v3765 = vpack.c.b16 %v3465, %v3462
    %v3766 = vpack.c.b16 %v3466, %v3463
    %v3767 = vpack.c.b16 %v3470, %v3467
    %v3768 = vpack.c.b16 %v3471, %v3468
    %v3769 = vpack.c.b16 %v3472, %v3469
    %v3770 = vpack.c.b16 %v3476, %v3473
    %v3771 = vpack.c.b16 %v3477, %v3474
    %v3772 = vpack.c.b16 %v3478, %v3475
    %v3773 = vpack.c.b16 %v3482, %v3479
    %v3774 = vpack.c.b16 %v3483, %v3480
    %v3775 = vpack.c.b16 %v3484, %v3481
    %v3776 = vpack.c.b16 %v3488, %v3485
    %v3777 = vpack.c.b16 %v3489, %v3486
    %v3778 = vpack.c.b16 %v3490, %v3487
    %v3779 = vpack.c.b16 %v3494, %v3491
    %v3780 = vpack.c.b16 %v3495, %v3492
    %v3781 = vpack.c.b16 %v3496, %v3493
    %v3782 = vpack.c.b16 %v3500, %v3497
    %v3783 = vpack.c.b16 %v3501, %v3498
    %v3784 = vpack.c.b16 %v3502, %v3499
    %v3785 = vpack.c.b16 %v3506, %v3503
    %v3786 = vpack.c.b16 %v3507, %v3504
    %v3787 = vpack.c.b16 %v3508, %v3505
    %v3788 = vpack.c.b16 %v3512, %v3509
    %v3789 = vpack.c.b16 %v3513, %v3510
    %v3790 = vpack.c.b16 %v3514, %v3511
    %v3791 = vpack.c.b16 %v3518, %v3515
    %v3792 = vpack.c.b16 %v3519, %v3516
    %v3793 = vpack.c.b16 %v3520, %v3517
    %v3794 = vpack.c.b16 %v3524, %v3521
    %v3795 = vpack.c.b16 %v3525, %v3522
    %v3796 = vpack.c.b16 %v3526, %v3523
    %v3797 = vpack.c.b16 %v3530, %v3527
    %v3798 = vpack.c.b16 %v3531, %v3528
    %v3799 = vpack.c.b16 %v3532, %v3529
    %v3800 = vpack.c.b16 %v3536, %v3533
    %v3801 = vpack.c.b16 %v3537, %v3534
    %v3802 = vpack.c.b16 %v3538, %v3535
    %v3803 = vpack.c.b16 %v3542, %v3539
    %v3804 = vpack.c.b16 %v3543, %v3540
    %v3805 = vpack.c.b16 %v3544, %v3541
    %v3806 = vpack.c.b16 %v3548, %v3545
    %v3807 = vpack.c.b16 %v3549, %v3546
    %v3808 = vpack.c.b16 %v3550, %v3547
    %v3809 = vpack.c.b16 %v3554, %v3551
    %v3810 = vpack.c.b16 %v3555, %v3552
    %v3811 = vpack.c.b16 %v3556, %v3553
    %v3812 = vpack.c.b16 %v3560, %v3557
    %v3813 = vpack.c.b16 %v3561, %v3558
    %v3814 = vpack.c.b16 %v3562, %v3559
    %v3815 = vpack.c.b16 %v3566, %v3563
    %v3816 = vpack.c.b16 %v3567, %v3564
    %v3817 = vpack.c.b16 %v3568, %v3565
    %v3818 = vpack.c.b16 %v3572, %v3569
    %v3819 = vpack.c.b16 %v3573, %v3570
    %v3820 = vpack.c.b16 %v3574, %v3571
    %v3821 = vpack.c.b16 %v3578, %v3575
    %v3822 = vpack.c.b16 %v3579, %v3576
    %v3823 = vpack.c.b16 %v3580, %v3577
    %v3824 = vpack.c.b16 %v3584, %v3581
    %v3825 = vpack.c.b16 %v3585, %v3582
    %v3826 = vpack.c.b16 %v3586, %v3583
    %v3827 = vpack.c.b16 %v3590, %v3587
    %v3828 = vpack.c.b16 %v3591, %v3588
    %v3829 = vpack.c.b16 %v3592, %v3589
    %v3830 = vpack.c.b16 %v3596, %v3593
    %v3831 = vpack.c.b16 %v3597, %v3594
    %v3832 = vpack.c.b16 %v3598, %v3595
    %v3833 = vpack.c.b16 %v3602, %v3599
    %v3834 = vpack.c.b16 %v3603, %v3600
    %v3835 = vpack.c.b16 %v3604, %v3601
    %v3836 = vpack.c.b16 %v3608, %v3605
    %v3837 = vpack.c.b16 %v3609, %v3606
    %v3838 = vpack.c.b16 %v3610, %v3607
    %v3839 = vpack.c.b16 %v3614, %v3611
    %v3840 = vpack.c.b16 %v3615, %v3612
    %v3841 = vpack.c.b16 %v3616, %v3613
    %v3842 = vpack.c.b16 %v3620, %v3617
    %v3843 = vpack.c.b16 %v3621, %v3618
    %v3844 = vpack.c.b16 %v3622, %v3619
    %v3845 = vpack.c.b16 %v3626, %v3623
    %v3846 = vpack.c.b16 %v3627, %v3624
    %v3847 = vpack.c.b16 %v3628, %v3625
    %v3848 = vpack.c.b16 %v3632, %v3629
    %v3849 = vpack.c.b16 %v3633, %v3630
    %v3850 = vpack.c.b16 %v3634, %v3631
    %v3851 = vpack.c.b16 %v3638, %v3635
    %v3852 = vpack.c.b16 %v3639, %v3636
    %v3853 = vpack.c.b16 %v3640, %v3637
    %v3854 = vpack.c.b16 %v3644, %v3641
    %v3855 = vpack.c.b16 %v3645, %v3642
    %v3856 = vpack.c.b16 %v3646, %v3643
    %v3857 = vpack.c.b16 %v3650, %v3647
    %v3858 = vpack.c.b16 %v3651, %v3648
    %v3859 = vpack.c.b16 %v3652, %v3649
    %v3860 = vpack.c.b16 %v3656, %v3653
    %v3861 = vpack.c.b16 %v3657, %v3654
    %v3862 = vpack.c.b16 %v3658, %v3655
    %v3863 = vpack.c.b16 %v3662, %v3659
    %v3864 = vpack.c.b16 %v3663, %v3660
    %v3865 = vpack.c.b16 %v3664, %v3661
    %v3866 = vpack.c.b16 %v3668, %v3665
    %v3867 = vpack.c.b16 %v3669, %v3666
    %v3868 = vpack.c.b16 %v3670, %v3667
    %v3869 = vpack.c.b16 %v3674, %v3671
    %v3870 = vpack.c.b16 %v3675, %v3672
    %v3871 = vpack.c.b16 %v3676, %v3673
    %v3872 = vpack.c.b16 %v3680, %v3677
    %v3873 = vpack.c.b16 %v3681, %v3678
    %v3874 = vpack.c.b16 %v3682, %v3679
    %4067 = vmatprep.subr.bf16.mxu0 %v3684
    %4068 = vmatpush1.bf16.msra.mxu0 %v3683
    %4069 = vmatprep.subr.bf16.mxu0 %v3687
    %4070 = vmatpush1.bf16.msra.mxu0 %v3686
    %4071 = vmatprep.subr.bf16.mxu0 %v3690
    %4072 = vmatpush1.bf16.msra.mxu0 %v3689
    %4073 = vmatprep.subr.bf16.mxu0 %v3693
    %4074 = vmatpush1.bf16.msra.mxu0 %v3692
    %4075 = vmatprep.subr.bf16.mxu0 %v3696
    %4076 = vmatpush1.bf16.msra.mxu0 %v3695
    %4077 = vmatprep.subr.bf16.mxu0 %v3699
    %4078 = vmatpush1.bf16.msra.mxu0 %v3698
    %4079 = vmatprep.subr.bf16.mxu0 %v3702
    %4080 = vmatpush1.bf16.msra.mxu0 %v3701
    %4081 = vmatprep.subr.bf16.mxu0 %v3705
    %4082 = vmatpush1.bf16.msra.mxu0 %v3704
    %4083 = vmatprep.subr.bf16.mxu0 %v3708
    %4084 = vmatpush1.bf16.msra.mxu0 %v3707
    %4085 = vmatprep.subr.bf16.mxu0 %v3711
    %4086 = vmatpush1.bf16.msra.mxu0 %v3710
    %4087 = vmatprep.subr.bf16.mxu0 %v3714
    %4088 = vmatpush1.bf16.msra.mxu0 %v3713
    %4089 = vmatprep.subr.bf16.mxu0 %v3717
    %4090 = vmatpush1.bf16.msra.mxu0 %v3716
    %4091 = vmatprep.subr.bf16.mxu0 %v3720
    %4092 = vmatpush1.bf16.msra.mxu0 %v3719
    %4093 = vmatprep.subr.bf16.mxu0 %v3723
    %4094 = vmatpush1.bf16.msra.mxu0 %v3722
    %4095 = vmatprep.subr.bf16.mxu0 %v3726
    %4096 = vmatpush1.bf16.msra.mxu0 %v3725
    %4097 = vmatprep.subr.bf16.mxu0 %v3729
    %4098 = vmatpush1.bf16.msra.mxu0 %v3728
    %4099 = vmatprep.mubr.bf16.mxu0 %v2763
    %4100 = vmatmul.mubr.bf16.gmra.mrb[0].mxu0 %v2762
    %v4101 = vpop.f32.mrb[0].mxu0
    %v4102 = vadd.f32 %v3031, %v4101
    %v4103 = vpop.f32.mrb[0].mxu0
    %v4104 = vadd.f32 %v3035, %v4103
    %v4105 = vpop.f32.mrb[0].mxu0
    %v4106 = vpop.f32.mrb[0].mxu0
    %4107 = vdwg.mxu0
    %4108 = vmatprep.subr.bf16.mxu0 %v3732
    %4109 = vmatpush1.bf16.msra.mxu0 %v3731
    %4110 = vmatprep.subr.bf16.mxu0 %v3735
    %4111 = vmatpush1.bf16.msra.mxu0 %v3734
    %4112 = vmatprep.subr.bf16.mxu0 %v3738
    %4113 = vmatpush1.bf16.msra.mxu0 %v3737
    %4114 = vmatprep.subr.bf16.mxu0 %v3741
    %4115 = vmatpush1.bf16.msra.mxu0 %v3740
    %4116 = vmatprep.subr.bf16.mxu0 %v3744
    %4117 = vmatpush1.bf16.msra.mxu0 %v3743
    %4118 = vmatprep.subr.bf16.mxu0 %v3747
    %4119 = vmatpush1.bf16.msra.mxu0 %v3746
    %4120 = vmatprep.subr.bf16.mxu0 %v3750
    %4121 = vmatpush1.bf16.msra.mxu0 %v3749
    %4122 = vmatprep.subr.bf16.mxu0 %v3753
    %4123 = vmatpush1.bf16.msra.mxu0 %v3752
    %4124 = vmatprep.subr.bf16.mxu0 %v3756
    %4125 = vmatpush1.bf16.msra.mxu0 %v3755
    %4126 = vmatprep.subr.bf16.mxu0 %v3759
    %4127 = vmatpush1.bf16.msra.mxu0 %v3758
    %4128 = vmatprep.subr.bf16.mxu0 %v3762
    %4129 = vmatpush1.bf16.msra.mxu0 %v3761
    %4130 = vmatprep.subr.bf16.mxu0 %v3765
    %4131 = vmatpush1.bf16.msra.mxu0 %v3764
    %4132 = vmatprep.subr.bf16.mxu0 %v3768
    %4133 = vmatpush1.bf16.msra.mxu0 %v3767
    %4134 = vmatprep.subr.bf16.mxu0 %v3771
    %4135 = vmatpush1.bf16.msra.mxu0 %v3770
    %4136 = vmatprep.subr.bf16.mxu0 %v3774
    %4137 = vmatpush1.bf16.msra.mxu0 %v3773
    %4138 = vmatprep.subr.bf16.mxu0 %v3777
    %4139 = vmatpush1.bf16.msra.mxu0 %v3776
    %4140 = vmatprep.mubr.bf16.mxu0 %v2765
    %4141 = vmatmul.mubr.bf16.gmra.mrb[0].mxu0 %v2764
    %v4142 = vpop.f32.mrb[0].mxu0
    %v4143 = vadd.f32 %v4102, %v4142
    %v4144 = vpop.f32.mrb[0].mxu0
    %v4145 = vadd.f32 %v4104, %v4144
    %v4146 = vpop.f32.mrb[0].mxu0
    %v4147 = vpop.f32.mrb[0].mxu0
    %4148 = vdwg.mxu0
    %4149 = vmatprep.subr.bf16.mxu0 %v3780
    %4150 = vmatpush1.bf16.msra.mxu0 %v3779
    %4151 = vmatprep.subr.bf16.mxu0 %v3783
    %4152 = vmatpush1.bf16.msra.mxu0 %v3782
    %4153 = vmatprep.subr.bf16.mxu0 %v3786
    %4154 = vmatpush1.bf16.msra.mxu0 %v3785
    %4155 = vmatprep.subr.bf16.mxu0 %v3789
    %4156 = vmatpush1.bf16.msra.mxu0 %v3788
    %4157 = vmatprep.subr.bf16.mxu0 %v3792
    %4158 = vmatpush1.bf16.msra.mxu0 %v3791
    %4159 = vmatprep.subr.bf16.mxu0 %v3795
    %4160 = vmatpush1.bf16.msra.mxu0 %v3794
    %4161 = vmatprep.subr.bf16.mxu0 %v3798
    %4162 = vmatpush1.bf16.msra.mxu0 %v3797
    %4163 = vmatprep.subr.bf16.mxu0 %v3801
    %4164 = vmatpush1.bf16.msra.mxu0 %v3800
    %4165 = vmatprep.subr.bf16.mxu0 %v3804
    %4166 = vmatpush1.bf16.msra.mxu0 %v3803
    %4167 = vmatprep.subr.bf16.mxu0 %v3807
    %4168 = vmatpush1.bf16.msra.mxu0 %v3806
    %4169 = vmatprep.subr.bf16.mxu0 %v3810
    %4170 = vmatpush1.bf16.msra.mxu0 %v3809
    %4171 = vmatprep.subr.bf16.mxu0 %v3813
    %4172 = vmatpush1.bf16.msra.mxu0 %v3812
    %4173 = vmatprep.subr.bf16.mxu0 %v3816
    %4174 = vmatpush1.bf16.msra.mxu0 %v3815
    %4175 = vmatprep.subr.bf16.mxu0 %v3819
    %4176 = vmatpush1.bf16.msra.mxu0 %v3818
    %4177 = vmatprep.subr.bf16.mxu0 %v3822
    %4178 = vmatpush1.bf16.msra.mxu0 %v3821
    %4179 = vmatprep.subr.bf16.mxu0 %v3825
    %4180 = vmatpush1.bf16.msra.mxu0 %v3824
    %4181 = vmatprep.mubr.bf16.mxu0 %v2767
    %4182 = vmatmul.mubr.bf16.gmra.mrb[0].mxu0 %v2766
    %v4183 = vpop.f32.mrb[0].mxu0
    %v4184 = vadd.f32 %v4143, %v4183
    %v4185 = vpop.f32.mrb[0].mxu0
    %v4186 = vadd.f32 %v4145, %v4185
    %v4187 = vpop.f32.mrb[0].mxu0
    %v4188 = vpop.f32.mrb[0].mxu0
    %4189 = vdwg.mxu0
    %4190 = vmatprep.subr.bf16.mxu0 %v3828
    %4191 = vmatpush1.bf16.msra.mxu0 %v3827
    %4192 = vmatprep.subr.bf16.mxu0 %v3831
    %4193 = vmatpush1.bf16.msra.mxu0 %v3830
    %4194 = vmatprep.subr.bf16.mxu0 %v3834
    %4195 = vmatpush1.bf16.msra.mxu0 %v3833
    %4196 = vmatprep.subr.bf16.mxu0 %v3837
    %4197 = vmatpush1.bf16.msra.mxu0 %v3836
    %4198 = vmatprep.subr.bf16.mxu0 %v3840
    %4199 = vmatpush1.bf16.msra.mxu0 %v3839
    %4200 = vmatprep.subr.bf16.mxu0 %v3843
    %4201 = vmatpush1.bf16.msra.mxu0 %v3842
    %4202 = vmatprep.subr.bf16.mxu0 %v3846
    %4203 = vmatpush1.bf16.msra.mxu0 %v3845
    %4204 = vmatprep.subr.bf16.mxu0 %v3849
    %4205 = vmatpush1.bf16.msra.mxu0 %v3848
    %4206 = vmatprep.subr.bf16.mxu0 %v3852
    %4207 = vmatpush1.bf16.msra.mxu0 %v3851
    %4208 = vmatprep.subr.bf16.mxu0 %v3855
    %4209 = vmatpush1.bf16.msra.mxu0 %v3854
    %4210 = vmatprep.subr.bf16.mxu0 %v3858
    %4211 = vmatpush1.bf16.msra.mxu0 %v3857
    %4212 = vmatprep.subr.bf16.mxu0 %v3861
    %4213 = vmatpush1.bf16.msra.mxu0 %v3860
    %4214 = vmatprep.subr.bf16.mxu0 %v3864
    %4215 = vmatpush1.bf16.msra.mxu0 %v3863
    %4216 = vmatprep.subr.bf16.mxu0 %v3867
    %4217 = vmatpush1.bf16.msra.mxu0 %v3866
    %4218 = vmatprep.subr.bf16.mxu0 %v3870
    %4219 = vmatpush1.bf16.msra.mxu0 %v3869
    %4220 = vmatprep.subr.bf16.mxu0 %v3873
    %4221 = vmatpush1.bf16.msra.mxu0 %v3872
    %4222 = vmatprep.mubr.bf16.mxu0 %v2769
    %4223 = vmatmul.mubr.bf16.gmra.mrb[0].mxu0 %v2768
    %v4224 = vpop.f32.mrb[0].mxu0
    %v4225 = vadd.f32 %v4184, %v4224
    %v4226 = vpop.f32.mrb[0].mxu0
    %v4227 = vadd.f32 %v4186, %v4226
    %v4228 = vpop.f32.mrb[0].mxu0
    %v4229 = vpop.f32.mrb[0].mxu0
    %4230 = vdwg.mxu0
    %4231 = vmatprep.subr.bf16.mxu0 0
    %4232 = vmatpush1.bf16.msra.mxu0 %v3685
    %4233 = vmatprep.subr.bf16.mxu0 0
    %4234 = vmatpush1.bf16.msra.mxu0 %v3688
    %4235 = vmatprep.subr.bf16.mxu0 0
    %4236 = vmatpush1.bf16.msra.mxu0 %v3691
    %4237 = vmatprep.subr.bf16.mxu0 0
    %4238 = vmatpush1.bf16.msra.mxu0 %v3694
    %4239 = vmatprep.subr.bf16.mxu0 0
    %4240 = vmatpush1.bf16.msra.mxu0 %v3697
    %4241 = vmatprep.subr.bf16.mxu0 0
    %4242 = vmatpush1.bf16.msra.mxu0 %v3700
    %4243 = vmatprep.subr.bf16.mxu0 0
    %4244 = vmatpush1.bf16.msra.mxu0 %v3703
    %4245 = vmatprep.subr.bf16.mxu0 0
    %4246 = vmatpush1.bf16.msra.mxu0 %v3706
    %4247 = vmatprep.subr.bf16.mxu0 0
    %4248 = vmatpush1.bf16.msra.mxu0 %v3709
    %4249 = vmatprep.subr.bf16.mxu0 0
    %4250 = vmatpush1.bf16.msra.mxu0 %v3712
    %4251 = vmatprep.subr.bf16.mxu0 0
    %4252 = vmatpush1.bf16.msra.mxu0 %v3715
    %4253 = vmatprep.subr.bf16.mxu0 0
    %4254 = vmatpush1.bf16.msra.mxu0 %v3718
    %4255 = vmatprep.subr.bf16.mxu0 0
    %4256 = vmatpush1.bf16.msra.mxu0 %v3721
    %4257 = vmatprep.subr.bf16.mxu0 0
    %4258 = vmatpush1.bf16.msra.mxu0 %v3724
    %4259 = vmatprep.subr.bf16.mxu0 0
    %4260 = vmatpush1.bf16.msra.mxu0 %v3727
    %4261 = vmatprep.subr.bf16.mxu0 0
    %4262 = vmatpush1.bf16.msra.mxu0 %v3730
    %4263 = vmatprep.mubr.bf16.mxu0 %v2763
    %4264 = vmatmul.mubr.bf16.gmra.mrb[0].mxu0 %v2762
    %v4265 = vpop.f32.mrb[0].mxu0
    %v4266 = vadd.f32 %v3039, %v4265
    %v4267 = vpop.f32.mrb[0].mxu0
    %v4268 = vpop.f32.mrb[0].mxu0
    %v4269 = vpop.f32.mrb[0].mxu0
    %4270 = vdwg.mxu0
    %4271 = vmatprep.subr.bf16.mxu0 0
    %4272 = vmatpush1.bf16.msra.mxu0 %v3733
    %4273 = vmatprep.subr.bf16.mxu0 0
    %4274 = vmatpush1.bf16.msra.mxu0 %v3736
    %4275 = vmatprep.subr.bf16.mxu0 0
    %4276 = vmatpush1.bf16.msra.mxu0 %v3739
    %4277 = vmatprep.subr.bf16.mxu0 0
    %4278 = vmatpush1.bf16.msra.mxu0 %v3742
    %4279 = vmatprep.subr.bf16.mxu0 0
    %4280 = vmatpush1.bf16.msra.mxu0 %v3745
    %4281 = vmatprep.subr.bf16.mxu0 0
    %4282 = vmatpush1.bf16.msra.mxu0 %v3748
    %4283 = vmatprep.subr.bf16.mxu0 0
    %4284 = vmatpush1.bf16.msra.mxu0 %v3751
    %4285 = vmatprep.subr.bf16.mxu0 0
    %4286 = vmatpush1.bf16.msra.mxu0 %v3754
    %4287 = vmatprep.subr.bf16.mxu0 0
    %4288 = vmatpush1.bf16.msra.mxu0 %v3757
    %4289 = vmatprep.subr.bf16.mxu0 0
    %4290 = vmatpush1.bf16.msra.mxu0 %v3760
    %4291 = vmatprep.subr.bf16.mxu0 0
    %4292 = vmatpush1.bf16.msra.mxu0 %v3763
    %4293 = vmatprep.subr.bf16.mxu0 0
    %4294 = vmatpush1.bf16.msra.mxu0 %v3766
    %4295 = vmatprep.subr.bf16.mxu0 0
    %4296 = vmatpush1.bf16.msra.mxu0 %v3769
    %4297 = vmatprep.subr.bf16.mxu0 0
    %4298 = vmatpush1.bf16.msra.mxu0 %v3772
    %4299 = vmatprep.subr.bf16.mxu0 0
    %4300 = vmatpush1.bf16.msra.mxu0 %v3775
    %4301 = vmatprep.subr.bf16.mxu0 0
    %4302 = vmatpush1.bf16.msra.mxu0 %v3778
    %4303 = vmatprep.mubr.bf16.mxu0 %v2765
    %4304 = vmatmul.mubr.bf16.gmra.mrb[0].mxu0 %v2764
    %v4305 = vpop.f32.mrb[0].mxu0
    %v4306 = vadd.f32 %v4266, %v4305
    %v4307 = vpop.f32.mrb[0].mxu0
    %v4308 = vpop.f32.mrb[0].mxu0
    %v4309 = vpop.f32.mrb[0].mxu0
    %4310 = vdwg.mxu0
    %4311 = vmatprep.subr.bf16.mxu0 0
    %4312 = vmatpush1.bf16.msra.mxu0 %v3781
    %4313 = vmatprep.subr.bf16.mxu0 0
    %4314 = vmatpush1.bf16.msra.mxu0 %v3784
    %4315 = vmatprep.subr.bf16.mxu0 0
    %4316 = vmatpush1.bf16.msra.mxu0 %v3787
    %4317 = vmatprep.subr.bf16.mxu0 0
    %4318 = vmatpush1.bf16.msra.mxu0 %v3790
    %4319 = vmatprep.subr.bf16.mxu0 0
    %4320 = vmatpush1.bf16.msra.mxu0 %v3793
    %4321 = vmatprep.subr.bf16.mxu0 0
    %4322 = vmatpush1.bf16.msra.mxu0 %v3796
    %4323 = vmatprep.subr.bf16.mxu0 0
    %4324 = vmatpush1.bf16.msra.mxu0 %v3799
    %4325 = vmatprep.subr.bf16.mxu0 0
    %4326 = vmatpush1.bf16.msra.mxu0 %v3802
    %4327 = vmatprep.subr.bf16.mxu0 0
    %4328 = vmatpush1.bf16.msra.mxu0 %v3805
    %4329 = vmatprep.subr.bf16.mxu0 0
    %4330 = vmatpush1.bf16.msra.mxu0 %v3808
    %4331 = vmatprep.subr.bf16.mxu0 0
    %4332 = vmatpush1.bf16.msra.mxu0 %v3811
    %4333 = vmatprep.subr.bf16.mxu0 0
    %4334 = vmatpush1.bf16.msra.mxu0 %v3814
    %4335 = vmatprep.subr.bf16.mxu0 0
    %4336 = vmatpush1.bf16.msra.mxu0 %v3817
    %4337 = vmatprep.subr.bf16.mxu0 0
    %4338 = vmatpush1.bf16.msra.mxu0 %v3820
    %4339 = vmatprep.subr.bf16.mxu0 0
    %4340 = vmatpush1.bf16.msra.mxu0 %v3823
    %4341 = vmatprep.subr.bf16.mxu0 0
    %4342 = vmatpush1.bf16.msra.mxu0 %v3826
    %4343 = vmatprep.mubr.bf16.mxu0 %v2767
    %4344 = vmatmul.mubr.bf16.gmra.mrb[0].mxu0 %v2766
    %v4345 = vpop.f32.mrb[0].mxu0
    %v4346 = vadd.f32 %v4306, %v4345
    %v4347 = vpop.f32.mrb[0].mxu0
    %v4348 = vpop.f32.mrb[0].mxu0
    %v4349 = vpop.f32.mrb[0].mxu0
    %4350 = vdwg.mxu0
    %4351 = vmatprep.subr.bf16.mxu0 0
    %4352 = vmatpush1.bf16.msra.mxu0 %v3829
    %4353 = vmatprep.subr.bf16.mxu0 0
    %4354 = vmatpush1.bf16.msra.mxu0 %v3832
    %4355 = vmatprep.subr.bf16.mxu0 0
    %4356 = vmatpush1.bf16.msra.mxu0 %v3835
    %4357 = vmatprep.subr.bf16.mxu0 0
    %4358 = vmatpush1.bf16.msra.mxu0 %v3838
    %4359 = vmatprep.subr.bf16.mxu0 0
    %4360 = vmatpush1.bf16.msra.mxu0 %v3841
    %4361 = vmatprep.subr.bf16.mxu0 0
    %4362 = vmatpush1.bf16.msra.mxu0 %v3844
    %4363 = vmatprep.subr.bf16.mxu0 0
    %4364 = vmatpush1.bf16.msra.mxu0 %v3847
    %4365 = vmatprep.subr.bf16.mxu0 0
    %4366 = vmatpush1.bf16.msra.mxu0 %v3850
    %4367 = vmatprep.subr.bf16.mxu0 0
    %4368 = vmatpush1.bf16.msra.mxu0 %v3853
    %4369 = vmatprep.subr.bf16.mxu0 0
    %4370 = vmatpush1.bf16.msra.mxu0 %v3856
    %4371 = vmatprep.subr.bf16.mxu0 0
    %4372 = vmatpush1.bf16.msra.mxu0 %v3859
    %4373 = vmatprep.subr.bf16.mxu0 0
    %4374 = vmatpush1.bf16.msra.mxu0 %v3862
    %4375 = vmatprep.subr.bf16.mxu0 0
    %4376 = vmatpush1.bf16.msra.mxu0 %v3865
    %4377 = vmatprep.subr.bf16.mxu0 0
    %4378 = vmatpush1.bf16.msra.mxu0 %v3868
    %4379 = vmatprep.subr.bf16.mxu0 0
    %4380 = vmatpush1.bf16.msra.mxu0 %v3871
    %4381 = vmatprep.subr.bf16.mxu0 0
    %4382 = vmatpush1.bf16.msra.mxu0 %v3874
    %4383 = vmatprep.mubr.bf16.mxu0 %v2769
    %4384 = vmatmul.mubr.bf16.gmra.mrb[0].mxu0 %v2768
    %v4385 = vpop.f32.mrb[0].mxu0
    %v4386 = vadd.f32 %v4346, %v4385
    %v4387 = vpop.f32.mrb[0].mxu0
    %v4388 = vpop.f32.mrb[0].mxu0
    %v4389 = vpop.f32.mrb[0].mxu0
    %4390 = vdwg.mxu0
    %v4391 = vxor.u32 %v4225, 2147483648
    %v4392 = vxor.u32 %v4227, 2147483648
    %v4393 = vxor.u32 %v4386, 2147483648
    %v4394 = vmul.f32 %v4391, 1.442695
    %v4395 = vpow.pop %v4394
    %v4396 = vmul.f32 %v4392, 1.442695
    %v4397 = vpow.pop %v4396
    %v4398 = vmul.f32 %v4393, 1.442695
    %v4399 = vpow.pop %v4398
    %v4400 = vadd.f32 %v4395, 1.0
    %v4401 = vadd.f32 %v4397, 1.0
    %v4402 = vadd.f32 %v4399, 1.0
    %v4403 = vrcp.pop %v4400
    %v4404 = vmul.f32 1.0, %v4403
    %v4405 = vrcp.pop %v4401
    %v4406 = vmul.f32 1.0, %v4405
    %v4407 = vrcp.pop %v4402
    %v4408 = vmul.f32 1.0, %v4407
    %v4412 = vcombine.low %v4404, %v4406
    %v4414 = vunpack.c.l.s4 1983009808
    %v4415 = vunpack.c.0.s8 %v4414
    %v4416 = vlaneseq
    %v4417 = vshrl.u32 %v4416, 7
    %v4418 = vsub.s32 %v4415, %v4417
    %v4419 = vrot.slane %v4412, %v4418
    %v4421 = vunpack.c.l.s4 1983009808
    %v4422 = vunpack.c.0.s8 %v4421
    %v4423 = vlaneseq
    %v4424 = vshrl.u32 %v4423, 7
    %v4425 = vsub.s32 %v4422, %v4424
    %v4426 = vrot.slane %v4408, %v4425
    %v4427 = vcombine.low %v4419, %v4426
    %4429 = vst [vmem:[%s11] sm:$0x3f] %v4427
    // Predicated region
    $region74: #{decoder_forward.1} parent=1 // pred_check
      _
    $region75: #{decoder_forward.1} parent=1 // pred_check_branch
      %4431 = sbr.rel (0) target = $region77
    $region76: #{decoder_forward.1} parent=1 // pred_region
      _
    $region77: #{decoder_forward.1} parent=1 // pred_fallthru
      _
    // Predicated region
    $region78: #{decoder_forward.1} parent=1 // pred_check
      _
    $region79: #{decoder_forward.1} parent=1 // pred_check_branch
      %4433 = sbr.rel (0) target = $region81
    $region80: #{decoder_forward.1} parent=1 // pred_region
      _
    $region81: #{decoder_forward.1} parent=1 // pred_fallthru
      _
    %4434 = vsyncpa [#allocation3], 1
    %4435 = vsyncpa [#allocation5], 1
    %4436 = vsyncpa [#allocation8], 1
    %4437 = vsyncpa [#allocation11], 1

</llo_original>
